<compile_context>
chip_gen: v6e
topology: v6e:2x2x1
jax: 0.10.0
libtpu: 0.0.40
codegen_flags: <defaults>
</compile_context>

<pallas_src>
import functools

import jax
import jax.numpy as jnp
from jax import lax
from jax.experimental import pallas as pl
from jax.experimental.pallas import tpu as pltpu

NUM_ELEMENTS = 64        # train_env.num_elements
N_VIEWS = 3              # len(dims_to_use)
POINT_DIM = 2            # SLayerRationalHat default point_dimension
RADIUS_INIT = 0.25
N_CLASSES = 20
BN_EPS = 1e-5

_SENTINEL = 1.0e6                   # finite dummy-point coordinate (inf would give inf-inf = NaN)
_VMEM_BUDGET = 24 * 1024 * 1024     # per-step working-set target; fits default scoped VMEM on
                                    # v5e (16 MiB default is raised below), v6e/v7x (32 MiB)


def _cdiv(a, b):
    return -(-a // b)


def _round_up(a, b):
    return _cdiv(a, b) * b


# ----------------------------------------------------------------------------
# Fused kernel: 3 x SLayerRationalHat  +  concat  +  (Linear+BN+ReLU) x2 + Linear
# ----------------------------------------------------------------------------
def _simple_model_kernel(p_chunk, approx_recip,
                         rad_ref, pts_ref, ctr_ref,
                         w1_ref, b1_ref, w2_ref, b2_ref, w3_ref, b3_ref,
                         out_ref, feat_ref):
    # rad_ref : (V,)              SMEM   |radius| taken in-kernel
    # pts_ref : (V, D, Bt, Pp)    VMEM   coord-major points, point axis on lanes
    # ctr_ref : (V, D, M, 1)      VMEM   centers, pre-expanded so every load is 2-D
    # w*/b*                       VMEM   MLP weights with eval-mode BN already folded in
    # out_ref : (Bt, 20)          VMEM
    # feat_ref: (Bt, V*M) f32     VMEM scratch  == torch.cat(dim=1) of the three slayer outputs
    n_views, point_dim, bt, p_pad = pts_ref.shape
    m = ctr_ref.shape[2]
    n_chunks = p_pad // p_chunk

    for v in range(n_views):                                     # static unroll, V = 3
        r = jnp.abs(rad_ref[v]).astype(pts_ref.dtype)
        ctrs = [ctr_ref[v, j] for j in range(point_dim)]         # each (M, 1), hoisted loads

        def p_chunk_body(c, acc, _r=r, _ctrs=ctrs, _v=v):
            start = c * p_chunk
            if n_chunks > 1:
                start = pl.multiple_of(start, p_chunk)
            # L1 distance of every point chunk to every center, lane-dense: (Bt, M, Pc)
            d = None
            for j in range(point_dim):                           # static unroll, D = 2
                pj = pts_ref[_v, j, :, pl.ds(start, p_chunk)]    # (Bt, Pc), points on lanes
                dj = jnp.abs(pj[:, None, :] - _ctrs[j][None, :, :])
                d = dj if d is None else d + dj
            a = jnp.abs(_r - d)
            # rational hat: 1/(1+d) - 1/(1+a) == (a - d) / ((1+d)*(1+a))
            denom = (1.0 + d) * (1.0 + a)
            if approx_recip:
                hat = (a - d) * pl.reciprocal(denom, approx=True)   # single EUP op per element
            else:
                hat = (a - d) / denom
            # sentinel-padded dummy/pad points contribute ~r/d^2 ~ 1e-12 -> no mask needed
            return acc + jnp.sum(hat, axis=-1).astype(jnp.float32)  # XLU lane reduce -> (Bt, M)

        acc0 = jnp.zeros((bt, m), jnp.float32)
        if n_chunks == 1:
            feat_v = p_chunk_body(0, acc0)
        else:
            feat_v = lax.fori_loop(0, n_chunks, p_chunk_body, acc0)
        feat_ref[:, v * m:(v + 1) * m] = feat_v                  # static column-block store

    # classifier: one K=192 matmul (concat consumed in place), BN folded, ReLU, ... , logits
    h = jnp.dot(feat_ref[...], w1_ref[...], preferred_element_type=jnp.float32) + b1_ref[...]
    h = jnp.maximum(h, 0.0)
    h = jnp.dot(h, w2_ref[...], preferred_element_type=jnp.float32) + b2_ref[...]
    h = jnp.maximum(h, 0.0)
    out_ref[...] = jnp.dot(h, w3_ref[...], preferred_element_type=jnp.float32) + b3_ref[...]


def simple_model_forward(points, masks, params, *, b_tile=None, p_chunk=None,
                         approx_reciprocal=True, compute_dtype=jnp.float32):
    """points: (V, B, P, D) dense per-view point sets; masks: (V, B, P), 1=real point, 0=dummy.

    compute_dtype=jnp.bfloat16 halves VALU/VMEM cost of the hat stage on v6e/v7x
    (keep float32 on v5e: no bf16 VPU/EUP there).
    """
    # TODO(synk): torchph's prepare_batch yields ragged persistence-diagram lists; ragged inputs
    #             are represented here as dense points + a not_dummy mask.
    V, B, P, D = points.shape
    M = params["centers"].shape[1]
    n_out = params["w3"].shape[1]

    # ---- fold eval-mode BatchNorm1d into the Linear layers ------------------------------------
    w1 = params["w1"] * params["s1"]
    b1 = params["b1"] * params["s1"] + params["t1"]
    w2 = params["w2"] * params["s2"]
    b2 = params["b2"] * params["s2"] + params["t2"]
    w3, b3 = params["w3"], params["b3"]

    # ---- tile selection (VMEM-budgeted, >=2 grid steps for v7x megacore when batch allows) ----
    if p_chunk is None:
        p_chunk = P if P <= 256 else 256
    if p_chunk >= P:
        p_chunk, p_pad = P, P                                    # single chunk, no P padding
    else:
        p_chunk = _round_up(p_chunk, 128)                        # lane-aligned dynamic slices
        p_pad = _round_up(P, p_chunk)

    in_bytes = jnp.dtype(compute_dtype).itemsize
    per_row = 2 * V * D * p_pad * in_bytes + 3 * M * p_chunk * 4   # dbl-buffered pts + hat temps
    max_bt_vmem = max(8, (_VMEM_BUDGET // per_row) // 8 * 8)

    if b_tile is None:
        if B <= 8:
            b_tile = B                                           # block == full dim is allowed
        else:
            b_tile = max(8, min(128, max_bt_vmem, _round_up(_cdiv(B, 2), 8)))
    elif b_tile < B:
        b_tile = max(8, _round_up(b_tile, 8))                    # sublane-tile requirement
    b_pad = _round_up(B, b_tile)

    # ---- mask -> finite sentinel, pad batch / points, coord-major layout (P on lanes) ---------
    pts = jnp.where(masks[..., None] > 0, points.astype(jnp.float32), _SENTINEL)
    pts = jnp.pad(pts, ((0, 0), (0, b_pad - B), (0, p_pad - P), (0, 0)),
                  constant_values=_SENTINEL)
    # TODO(synk): have the data loader emit coord-major (V, D, B, P) points so this transpose
    #             (a full HBM round-trip of the point cloud) disappears.
    pts_t = jnp.transpose(pts, (0, 3, 1, 2)).astype(compute_dtype)          # (V, D, Bpad, Ppad)
    ctr_e = jnp.transpose(params["centers"], (0, 2, 1))[..., None].astype(compute_dtype)
    radii = params["radii"].astype(jnp.float32)

    def _full_spec(shape):
        n = len(shape)
        return pl.BlockSpec(shape, lambda b, n=n: (0,) * n)

    kernel = functools.partial(_simple_model_kernel, p_chunk, approx_reciprocal)

    out = pl.pallas_call(
        kernel,
        grid=(b_pad // b_tile,),
        in_specs=[
            pl.BlockSpec(memory_space=pltpu.MemorySpace.SMEM),              # radii (V,)
            pl.BlockSpec((V, D, b_tile, p_pad), lambda b: (0, 0, b, 0)),    # points
            _full_spec(ctr_e.shape),                                        # centers (V,D,M,1)
            _full_spec(w1.shape), _full_spec(b1.shape),
            _full_spec(w2.shape), _full_spec(b2.shape),
            _full_spec(w3.shape), _full_spec(b3.shape),
        ],
        out_specs=pl.BlockSpec((b_tile, n_out), lambda b: (b, 0)),
        out_shape=jax.ShapeDtypeStruct((b_pad, n_out), jnp.float32),
        scratch_shapes=[pltpu.VMEM((b_tile, V * M), jnp.float32)],          # concat buffer
        compiler_params=pltpu.CompilerParams(
            dimension_semantics=("parallel",),          # batch tiles shard across v7x's 2 TCs
            vmem_limit_bytes=32 * 1024 * 1024),         # lifts v5e's 16 MiB default; safe on v7x
    )(radii, pts_t, ctr_e, w1, b1, w2, b2, w3, b3)

    return out[:B]


# ----------------------------------------------------------------------------
# Pure-JAX reference (mirrors the PyTorch forward; exact reciprocals, mask multiply)
# ----------------------------------------------------------------------------
def simple_model_reference(points, masks, params):
    feats = []
    for v in range(points.shape[0]):
        x = points[v]                                           # (B, P, D)
        c = params["centers"][v]                                # (M, D)
        d = jnp.sum(jnp.abs(x[:, :, None, :] - c[None, None, :, :]), axis=-1)   # (B, P, M)
        r = jnp.abs(params["radii"][v])
        hat = 1.0 / (1.0 + d) - 1.0 / (1.0 + jnp.abs(r - d))
        hat = hat * masks[v][:, :, None]
        feats.append(jnp.sum(hat, axis=1))
    x = jnp.concatenate(feats, axis=1)                          # == torch.cat(dim=1)
    h = jnp.maximum((x @ params["w1"] + params["b1"]) * params["s1"] + params["t1"], 0.0)
    h = jnp.maximum((h @ params["w2"] + params["b2"]) * params["s2"] + params["t2"], 0.0)
    return h @ params["w3"] + params["b3"]


# ----------------------------------------------------------------------------
# Parameter init (deterministic, mimics the module's __init__)
# ----------------------------------------------------------------------------
def init_params(key):
    ks = jax.random.split(key, 4)
    # SLayerRationalHat: centers ~ U[0,1) (torch.rand default), radius = 0.25 per view
    centers = jax.random.uniform(ks[0], (N_VIEWS, NUM_ELEMENTS, POINT_DIM), jnp.float32)
    radii = jnp.full((N_VIEWS,), RADIUS_INIT, jnp.float32)

    def linear(k, n_in, n_out):
        k1, k2 = jax.random.split(k)
        bound = 1.0 / (n_in ** 0.5)
        w = jax.random.uniform(k1, (n_in, n_out), jnp.float32, -bound, bound)
        b = jax.random.uniform(k2, (1, n_out), jnp.float32, -bound, bound)
        return w, b

    d0 = N_VIEWS * NUM_ELEMENTS        # 192
    d1 = d0 // 4                       # 48
    d2 = d0 // 16                      # 12
    w1, b1 = linear(ks[1], d0, d1)
    w2, b2 = linear(ks[2], d1, d2)
    w3, b3 = linear(ks[3], d2, N_CLASSES)

    def bn(n):
        # eval-mode BatchNorm1d with fresh running stats: gamma=1, beta=0, mean=0, var=1
        gamma = jnp.ones((1, n), jnp.float32)
        beta = jnp.zeros((1, n), jnp.float32)
        mean = jnp.zeros((1, n), jnp.float32)
        var = jnp.ones((1, n), jnp.float32)
        scale = gamma / jnp.sqrt(var + BN_EPS)
        shift = beta - mean * scale
        return scale, shift

    s1, t1 = bn(d1)
    s2, t2 = bn(d2)
    return dict(centers=centers, radii=radii,
                w1=w1, b1=b1, s1=s1, t1=t1,
                w2=w2, b2=b2, s2=s2, t2=t2,
                w3=w3, b3=b3)


if __name__ == "__main__":
    key = jax.random.PRNGKey(0)
    k_pts, k_par, k_pts2 = jax.random.split(key, 3)
    params = init_params(k_par)

    fwd = jax.jit(simple_model_forward,
                  static_argnames=("b_tile", "p_chunk", "approx_reciprocal", "compute_dtype"))

    # --- small shape, matches the module's per-view (B, P, 2) persistence diagrams -------------
    B, P = 2, 16
    points = jax.random.uniform(k_pts, (N_VIEWS, B, P, POINT_DIM), jnp.float32)
    masks = jnp.ones((N_VIEWS, B, P), jnp.float32).at[:, :, P - 3:].set(0.0)  # trailing dummies
    points = points * masks[..., None]                                         # dummy coords = 0

    ref = simple_model_reference(points, masks, params)

    # exact-reciprocal path first: tight tolerance so the layout/indexing is actually validated
    out_exact = jax.block_until_ready(fwd(points, masks, params, approx_reciprocal=False))
    assert out_exact.shape == (B, N_CLASSES) and out_exact.dtype == jnp.float32
    assert bool(jnp.all(jnp.isfinite(out_exact)))
    assert jnp.allclose(out_exact, ref, rtol=1e-3, atol=1e-3), (out_exact, ref)

    # default (approx EUP reciprocal) path: small ~1e-3 relative error, loose tolerance
    out_approx = jax.block_until_ready(fwd(points, masks, params))
    assert jnp.allclose(out_approx, ref, rtol=5e-2, atol=5e-2), (out_approx, ref)

    # --- larger point count: exercises P-chunked accumulation and point padding ----------------
    B2, P2 = 4, 384
    points2 = jax.random.uniform(k_pts2, (N_VIEWS, B2, P2, POINT_DIM), jnp.float32)
    masks2 = jnp.ones((N_VIEWS, B2, P2), jnp.float32).at[:, :, P2 - 10:].set(0.0)
    points2 = points2 * masks2[..., None]
    ref2 = simple_model_reference(points2, masks2, params)
    out2 = jax.block_until_ready(
        fwd(points2, masks2, params, approx_reciprocal=False, p_chunk=128))
    assert jnp.allclose(out2, ref2, rtol=1e-3, atol=1e-3), (out2, ref2)

    print("KERNEL_OK")
</pallas_src>

<mosaic_0001>
module attributes {stable_mosaic.version = 11 : i64} {
  func.func @_simple_model_kernel(%arg0: i32, %arg1: memref<3xf32, #tpu.memory_space<smem>>, %arg2: memref<3x2x2x16xf32, #tpu.memory_space<vmem>>, %arg3: memref<3x2x64x1xf32, #tpu.memory_space<vmem>>, %arg4: memref<192x48xf32, #tpu.memory_space<vmem>>, %arg5: memref<1x48xf32, #tpu.memory_space<vmem>>, %arg6: memref<48x12xf32, #tpu.memory_space<vmem>>, %arg7: memref<1x12xf32, #tpu.memory_space<vmem>>, %arg8: memref<12x20xf32, #tpu.memory_space<vmem>>, %arg9: memref<1x20xf32, #tpu.memory_space<vmem>>, %arg10: memref<2x20xf32, #tpu.memory_space<vmem>>, %arg11: memref<2x192xf32, #tpu.memory_space<vmem>>) attributes {dimension_semantics = [#tpu.dimension_semantics<parallel>], iteration_bounds = array<i64: 1>, scalar_prefetch = 0 : i64, scratch_operands = 1 : i64, tpu.core_type = #tpu.core_type<tc>, window_params = [{transform_indices = @transform_0, window_bounds = array<i64: 3>}, {transform_indices = @transform_1, window_bounds = array<i64: 3, 2, 2, 16>}, {pipeline_mode = #tpu.pipeline_mode<synchronous>, transform_indices = @transform_2, window_bounds = array<i64: 3, 2, 64, 1>}, {pipeline_mode = #tpu.pipeline_mode<synchronous>, transform_indices = @transform_3, window_bounds = array<i64: 192, 48>}, {pipeline_mode = #tpu.pipeline_mode<synchronous>, transform_indices = @transform_4, window_bounds = array<i64: 1, 48>}, {pipeline_mode = #tpu.pipeline_mode<synchronous>, transform_indices = @transform_5, window_bounds = array<i64: 48, 12>}, {pipeline_mode = #tpu.pipeline_mode<synchronous>, transform_indices = @transform_6, window_bounds = array<i64: 1, 12>}, {pipeline_mode = #tpu.pipeline_mode<synchronous>, transform_indices = @transform_7, window_bounds = array<i64: 12, 20>}, {pipeline_mode = #tpu.pipeline_mode<synchronous>, transform_indices = @transform_8, window_bounds = array<i64: 1, 20>}, {transform_indices = @transform_9, window_bounds = array<i64: 2, 20>}]} {
    %c0 = arith.constant 0 : index
    %0 = memref.load %arg1[%c0] : memref<3xf32, #tpu.memory_space<smem>>
    %1 = math.absf %0 : f32
    %c0_0 = arith.constant 0 : index
    %c0_1 = arith.constant 0 : index
    %c0_2 = arith.constant 0 : index
    %c0_3 = arith.constant 0 : index
    %2 = vector.load %arg3[%c0_0, %c0_1, %c0_2, %c0_3] : memref<3x2x64x1xf32, #tpu.memory_space<vmem>>, vector<1x1x64x1xf32>
    %3 = vector.shape_cast %2 : vector<1x1x64x1xf32> to vector<64x1xf32>
    %c0_4 = arith.constant 0 : index
    %c1 = arith.constant 1 : index
    %c0_5 = arith.constant 0 : index
    %c0_6 = arith.constant 0 : index
    %4 = vector.load %arg3[%c0_4, %c1, %c0_5, %c0_6] : memref<3x2x64x1xf32, #tpu.memory_space<vmem>>, vector<1x1x64x1xf32>
    %5 = vector.shape_cast %4 : vector<1x1x64x1xf32> to vector<64x1xf32>
    %cst = arith.constant 0.000000e+00 : f32
    %6 = vector.broadcast %cst : f32 to vector<2x64xf32>
    %c0_7 = arith.constant 0 : index
    %c0_8 = arith.constant 0 : index
    %c0_9 = arith.constant 0 : index
    %c0_10 = arith.constant 0 : index
    %7 = vector.load %arg2[%c0_7, %c0_8, %c0_9, %c0_10] : memref<3x2x2x16xf32, #tpu.memory_space<vmem>>, vector<1x1x2x16xf32>
    %8 = vector.shape_cast %7 : vector<1x1x2x16xf32> to vector<2x16xf32>
    %9 = vector.shape_cast %8 : vector<2x16xf32> to vector<2x1x16xf32>
    %10 = vector.shape_cast %3 : vector<64x1xf32> to vector<1x64x1xf32>
    %11 = vector.broadcast %9 : vector<2x1x16xf32> to vector<2x64x16xf32>
    %12 = vector.broadcast %10 : vector<1x64x1xf32> to vector<2x64x16xf32>
    %13 = arith.subf %11, %12 : vector<2x64x16xf32>
    %14 = math.absf %13 : vector<2x64x16xf32>
    %c0_11 = arith.constant 0 : index
    %c1_12 = arith.constant 1 : index
    %c0_13 = arith.constant 0 : index
    %c0_14 = arith.constant 0 : index
    %15 = vector.load %arg2[%c0_11, %c1_12, %c0_13, %c0_14] : memref<3x2x2x16xf32, #tpu.memory_space<vmem>>, vector<1x1x2x16xf32>
    %16 = vector.shape_cast %15 : vector<1x1x2x16xf32> to vector<2x16xf32>
    %17 = vector.shape_cast %16 : vector<2x16xf32> to vector<2x1x16xf32>
    %18 = vector.shape_cast %5 : vector<64x1xf32> to vector<1x64x1xf32>
    %19 = vector.broadcast %17 : vector<2x1x16xf32> to vector<2x64x16xf32>
    %20 = vector.broadcast %18 : vector<1x64x1xf32> to vector<2x64x16xf32>
    %21 = arith.subf %19, %20 : vector<2x64x16xf32>
    %22 = math.absf %21 : vector<2x64x16xf32>
    %23 = arith.addf %14, %22 : vector<2x64x16xf32>
    %24 = vector.broadcast %1 : f32 to vector<2x64x16xf32>
    %25 = arith.subf %24, %23 : vector<2x64x16xf32>
    %26 = math.absf %25 : vector<2x64x16xf32>
    %cst_15 = arith.constant 1.000000e+00 : f32
    %27 = vector.broadcast %cst_15 : f32 to vector<2x64x16xf32>
    %28 = arith.addf %27, %23 : vector<2x64x16xf32>
    %cst_16 = arith.constant 1.000000e+00 : f32
    %29 = vector.broadcast %cst_16 : f32 to vector<2x64x16xf32>
    %30 = arith.addf %29, %26 : vector<2x64x16xf32>
    %31 = arith.mulf %28, %30 : vector<2x64x16xf32>
    %32 = arith.subf %26, %23 : vector<2x64x16xf32>
    %33 = arith.divf %32, %31 : vector<2x64x16xf32>
    %cst_17 = arith.constant dense<0.000000e+00> : vector<2x64xf32>
    %34 = vector.multi_reduction <add>, %33, %cst_17 [2] : vector<2x64x16xf32> to vector<2x64xf32>
    %35 = arith.addf %6, %34 : vector<2x64xf32>
    %c0_18 = arith.constant 0 : index
    %c0_19 = arith.constant 0 : index
    %36 = vector.load %arg11[%c0_18, %c0_19] : memref<2x192xf32, #tpu.memory_space<vmem>>, vector<2x64xf32>
    tpu.vector_store %arg11[%c0_18, %c0_19], %35 {strides = array<i32>} : memref<2x192xf32, #tpu.memory_space<vmem>>, vector<2x64xf32>,
    %c1_20 = arith.constant 1 : index
    %37 = memref.load %arg1[%c1_20] : memref<3xf32, #tpu.memory_space<smem>>
    %38 = math.absf %37 : f32
    %c1_21 = arith.constant 1 : index
    %c0_22 = arith.constant 0 : index
    %c0_23 = arith.constant 0 : index
    %c0_24 = arith.constant 0 : index
    %39 = vector.load %arg3[%c1_21, %c0_22, %c0_23, %c0_24] : memref<3x2x64x1xf32, #tpu.memory_space<vmem>>, vector<1x1x64x1xf32>
    %40 = vector.shape_cast %39 : vector<1x1x64x1xf32> to vector<64x1xf32>
    %c1_25 = arith.constant 1 : index
    %c1_26 = arith.constant 1 : index
    %c0_27 = arith.constant 0 : index
    %c0_28 = arith.constant 0 : index
    %41 = vector.load %arg3[%c1_25, %c1_26, %c0_27, %c0_28] : memref<3x2x64x1xf32, #tpu.memory_space<vmem>>, vector<1x1x64x1xf32>
    %42 = vector.shape_cast %41 : vector<1x1x64x1xf32> to vector<64x1xf32>
    %cst_29 = arith.constant 0.000000e+00 : f32
    %43 = vector.broadcast %cst_29 : f32 to vector<2x64xf32>
    %c1_30 = arith.constant 1 : index
    %c0_31 = arith.constant 0 : index
    %c0_32 = arith.constant 0 : index
    %c0_33 = arith.constant 0 : index
    %44 = vector.load %arg2[%c1_30, %c0_31, %c0_32, %c0_33] : memref<3x2x2x16xf32, #tpu.memory_space<vmem>>, vector<1x1x2x16xf32>
    %45 = vector.shape_cast %44 : vector<1x1x2x16xf32> to vector<2x16xf32>
    %46 = vector.shape_cast %45 : vector<2x16xf32> to vector<2x1x16xf32>
    %47 = vector.shape_cast %40 : vector<64x1xf32> to vector<1x64x1xf32>
    %48 = vector.broadcast %46 : vector<2x1x16xf32> to vector<2x64x16xf32>
    %49 = vector.broadcast %47 : vector<1x64x1xf32> to vector<2x64x16xf32>
    %50 = arith.subf %48, %49 : vector<2x64x16xf32>
    %51 = math.absf %50 : vector<2x64x16xf32>
    %c1_34 = arith.constant 1 : index
    %c1_35 = arith.constant 1 : index
    %c0_36 = arith.constant 0 : index
    %c0_37 = arith.constant 0 : index
    %52 = vector.load %arg2[%c1_34, %c1_35, %c0_36, %c0_37] : memref<3x2x2x16xf32, #tpu.memory_space<vmem>>, vector<1x1x2x16xf32>
    %53 = vector.shape_cast %52 : vector<1x1x2x16xf32> to vector<2x16xf32>
    %54 = vector.shape_cast %53 : vector<2x16xf32> to vector<2x1x16xf32>
    %55 = vector.shape_cast %42 : vector<64x1xf32> to vector<1x64x1xf32>
    %56 = vector.broadcast %54 : vector<2x1x16xf32> to vector<2x64x16xf32>
    %57 = vector.broadcast %55 : vector<1x64x1xf32> to vector<2x64x16xf32>
    %58 = arith.subf %56, %57 : vector<2x64x16xf32>
    %59 = math.absf %58 : vector<2x64x16xf32>
    %60 = arith.addf %51, %59 : vector<2x64x16xf32>
    %61 = vector.broadcast %38 : f32 to vector<2x64x16xf32>
    %62 = arith.subf %61, %60 : vector<2x64x16xf32>
    %63 = math.absf %62 : vector<2x64x16xf32>
    %cst_38 = arith.constant 1.000000e+00 : f32
    %64 = vector.broadcast %cst_38 : f32 to vector<2x64x16xf32>
    %65 = arith.addf %64, %60 : vector<2x64x16xf32>
    %cst_39 = arith.constant 1.000000e+00 : f32
    %66 = vector.broadcast %cst_39 : f32 to vector<2x64x16xf32>
    %67 = arith.addf %66, %63 : vector<2x64x16xf32>
    %68 = arith.mulf %65, %67 : vector<2x64x16xf32>
    %69 = arith.subf %63, %60 : vector<2x64x16xf32>
    %70 = arith.divf %69, %68 : vector<2x64x16xf32>
    %cst_40 = arith.constant dense<0.000000e+00> : vector<2x64xf32>
    %71 = vector.multi_reduction <add>, %70, %cst_40 [2] : vector<2x64x16xf32> to vector<2x64xf32>
    %72 = arith.addf %43, %71 : vector<2x64xf32>
    %c0_41 = arith.constant 0 : index
    %c64 = arith.constant 64 : index
    %73 = vector.load %arg11[%c0_41, %c64] : memref<2x192xf32, #tpu.memory_space<vmem>>, vector<2x64xf32>
    tpu.vector_store %arg11[%c0_41, %c64], %72 {strides = array<i32>} : memref<2x192xf32, #tpu.memory_space<vmem>>, vector<2x64xf32>,
    %c2 = arith.constant 2 : index
    %74 = memref.load %arg1[%c2] : memref<3xf32, #tpu.memory_space<smem>>
    %75 = math.absf %74 : f32
    %c2_42 = arith.constant 2 : index
    %c0_43 = arith.constant 0 : index
    %c0_44 = arith.constant 0 : index
    %c0_45 = arith.constant 0 : index
    %76 = vector.load %arg3[%c2_42, %c0_43, %c0_44, %c0_45] : memref<3x2x64x1xf32, #tpu.memory_space<vmem>>, vector<1x1x64x1xf32>
    %77 = vector.shape_cast %76 : vector<1x1x64x1xf32> to vector<64x1xf32>
    %c2_46 = arith.constant 2 : index
    %c1_47 = arith.constant 1 : index
    %c0_48 = arith.constant 0 : index
    %c0_49 = arith.constant 0 : index
    %78 = vector.load %arg3[%c2_46, %c1_47, %c0_48, %c0_49] : memref<3x2x64x1xf32, #tpu.memory_space<vmem>>, vector<1x1x64x1xf32>
    %79 = vector.shape_cast %78 : vector<1x1x64x1xf32> to vector<64x1xf32>
    %cst_50 = arith.constant 0.000000e+00 : f32
    %80 = vector.broadcast %cst_50 : f32 to vector<2x64xf32>
    %c2_51 = arith.constant 2 : index
    %c0_52 = arith.constant 0 : index
    %c0_53 = arith.constant 0 : index
    %c0_54 = arith.constant 0 : index
    %81 = vector.load %arg2[%c2_51, %c0_52, %c0_53, %c0_54] : memref<3x2x2x16xf32, #tpu.memory_space<vmem>>, vector<1x1x2x16xf32>
    %82 = vector.shape_cast %81 : vector<1x1x2x16xf32> to vector<2x16xf32>
    %83 = vector.shape_cast %82 : vector<2x16xf32> to vector<2x1x16xf32>
    %84 = vector.shape_cast %77 : vector<64x1xf32> to vector<1x64x1xf32>
    %85 = vector.broadcast %83 : vector<2x1x16xf32> to vector<2x64x16xf32>
    %86 = vector.broadcast %84 : vector<1x64x1xf32> to vector<2x64x16xf32>
    %87 = arith.subf %85, %86 : vector<2x64x16xf32>
    %88 = math.absf %87 : vector<2x64x16xf32>
    %c2_55 = arith.constant 2 : index
    %c1_56 = arith.constant 1 : index
    %c0_57 = arith.constant 0 : index
    %c0_58 = arith.constant 0 : index
    %89 = vector.load %arg2[%c2_55, %c1_56, %c0_57, %c0_58] : memref<3x2x2x16xf32, #tpu.memory_space<vmem>>, vector<1x1x2x16xf32>
    %90 = vector.shape_cast %89 : vector<1x1x2x16xf32> to vector<2x16xf32>
    %91 = vector.shape_cast %90 : vector<2x16xf32> to vector<2x1x16xf32>
    %92 = vector.shape_cast %79 : vector<64x1xf32> to vector<1x64x1xf32>
    %93 = vector.broadcast %91 : vector<2x1x16xf32> to vector<2x64x16xf32>
    %94 = vector.broadcast %92 : vector<1x64x1xf32> to vector<2x64x16xf32>
    %95 = arith.subf %93, %94 : vector<2x64x16xf32>
    %96 = math.absf %95 : vector<2x64x16xf32>
    %97 = arith.addf %88, %96 : vector<2x64x16xf32>
    %98 = vector.broadcast %75 : f32 to vector<2x64x16xf32>
    %99 = arith.subf %98, %97 : vector<2x64x16xf32>
    %100 = math.absf %99 : vector<2x64x16xf32>
    %cst_59 = arith.constant 1.000000e+00 : f32
    %101 = vector.broadcast %cst_59 : f32 to vector<2x64x16xf32>
    %102 = arith.addf %101, %97 : vector<2x64x16xf32>
    %cst_60 = arith.constant 1.000000e+00 : f32
    %103 = vector.broadcast %cst_60 : f32 to vector<2x64x16xf32>
    %104 = arith.addf %103, %100 : vector<2x64x16xf32>
    %105 = arith.mulf %102, %104 : vector<2x64x16xf32>
    %106 = arith.subf %100, %97 : vector<2x64x16xf32>
    %107 = arith.divf %106, %105 : vector<2x64x16xf32>
    %cst_61 = arith.constant dense<0.000000e+00> : vector<2x64xf32>
    %108 = vector.multi_reduction <add>, %107, %cst_61 [2] : vector<2x64x16xf32> to vector<2x64xf32>
    %109 = arith.addf %80, %108 : vector<2x64xf32>
    %c0_62 = arith.constant 0 : index
    %c128 = arith.constant 128 : index
    %110 = vector.load %arg11[%c0_62, %c128] : memref<2x192xf32, #tpu.memory_space<vmem>>, vector<2x64xf32>
    tpu.vector_store %arg11[%c0_62, %c128], %109 {strides = array<i32>} : memref<2x192xf32, #tpu.memory_space<vmem>>, vector<2x64xf32>,
    %c0_63 = arith.constant 0 : index
    %c0_64 = arith.constant 0 : index
    %111 = vector.load %arg11[%c0_63, %c0_64] : memref<2x192xf32, #tpu.memory_space<vmem>>, vector<2x192xf32>
    %c0_65 = arith.constant 0 : index
    %c0_66 = arith.constant 0 : index
    %112 = vector.load %arg4[%c0_65, %c0_66] : memref<192x48xf32, #tpu.memory_space<vmem>>, vector<192x48xf32>
    %cst_67 = arith.constant dense<0.000000e+00> : vector<2x48xf32>
    %113 = tpu.matmul %111, %112, %cst_67 {dimension_numbers = #tpu.dot_dimension_numbers<[1], [0], [0], [1], [0, 0, 1, 1], [], []>} : vector<2x192xf32>, vector<192x48xf32>, vector<2x48xf32> -> vector<2x48xf32>
    %c0_68 = arith.constant 0 : index
    %c0_69 = arith.constant 0 : index
    %114 = vector.load %arg5[%c0_68, %c0_69] : memref<1x48xf32, #tpu.memory_space<vmem>>, vector<1x48xf32>
    %115 = vector.broadcast %114 : vector<1x48xf32> to vector<2x48xf32>
    %116 = arith.addf %113, %115 : vector<2x48xf32>
    %cst_70 = arith.constant 0.000000e+00 : f32
    %117 = vector.broadcast %cst_70 : f32 to vector<2x48xf32>
    %118 = arith.maximumf %116, %117 : vector<2x48xf32>
    %c0_71 = arith.constant 0 : index
    %c0_72 = arith.constant 0 : index
    %119 = vector.load %arg6[%c0_71, %c0_72] : memref<48x12xf32, #tpu.memory_space<vmem>>, vector<48x12xf32>
    %cst_73 = arith.constant dense<0.000000e+00> : vector<2x12xf32>
    %120 = tpu.matmul %118, %119, %cst_73 {dimension_numbers = #tpu.dot_dimension_numbers<[1], [0], [0], [1], [0, 0, 1, 1], [], []>} : vector<2x48xf32>, vector<48x12xf32>, vector<2x12xf32> -> vector<2x12xf32>
    %c0_74 = arith.constant 0 : index
    %c0_75 = arith.constant 0 : index
    %121 = vector.load %arg7[%c0_74, %c0_75] : memref<1x12xf32, #tpu.memory_space<vmem>>, vector<1x12xf32>
    %122 = vector.broadcast %121 : vector<1x12xf32> to vector<2x12xf32>
    %123 = arith.addf %120, %122 : vector<2x12xf32>
    %cst_76 = arith.constant 0.000000e+00 : f32
    %124 = vector.broadcast %cst_76 : f32 to vector<2x12xf32>
    %125 = arith.maximumf %123, %124 : vector<2x12xf32>
    %c0_77 = arith.constant 0 : index
    %c0_78 = arith.constant 0 : index
    %126 = vector.load %arg8[%c0_77, %c0_78] : memref<12x20xf32, #tpu.memory_space<vmem>>, vector<12x20xf32>
    %cst_79 = arith.constant dense<0.000000e+00> : vector<2x20xf32>
    %127 = tpu.matmul %125, %126, %cst_79 {dimension_numbers = #tpu.dot_dimension_numbers<[1], [0], [0], [1], [0, 0, 1, 1], [], []>} : vector<2x12xf32>, vector<12x20xf32>, vector<2x20xf32> -> vector<2x20xf32>
    %c0_80 = arith.constant 0 : index
    %c0_81 = arith.constant 0 : index
    %128 = vector.load %arg9[%c0_80, %c0_81] : memref<1x20xf32, #tpu.memory_space<vmem>>, vector<1x20xf32>
    %129 = vector.broadcast %128 : vector<1x20xf32> to vector<2x20xf32>
    %130 = arith.addf %127, %129 : vector<2x20xf32>
    %c0_82 = arith.constant 0 : index
    %c0_83 = arith.constant 0 : index
    %131 = vector.load %arg10[%c0_82, %c0_83] : memref<2x20xf32, #tpu.memory_space<vmem>>, vector<2x20xf32>
    tpu.vector_store %arg10[%c0_82, %c0_83], %130 {strides = array<i32>} : memref<2x20xf32, #tpu.memory_space<vmem>>, vector<2x20xf32>,
    return
  }
  func.func @transform_0(%arg0: i32) -> i32 {
    %c0_i32 = arith.constant 0 : i32
    %c0_i32_0 = arith.constant 0 : i32
    return %c0_i32 : i32
  }
  func.func @transform_1(%arg0: i32) -> (i32, i32, i32, i32) {
    %c0_i32 = arith.constant 0 : i32
    %c0_i32_0 = arith.constant 0 : i32
    %c0_i32_1 = arith.constant 0 : i32
    %c0_i32_2 = arith.constant 0 : i32
    return %c0_i32, %c0_i32_0, %arg0, %c0_i32_1 : i32, i32, i32, i32
  }
  func.func @transform_2(%arg0: i32) -> (i32, i32, i32, i32) {
    %c0_i32 = arith.constant 0 : i32
    %c0_i32_0 = arith.constant 0 : i32
    %c0_i32_1 = arith.constant 0 : i32
    %c0_i32_2 = arith.constant 0 : i32
    %c0_i32_3 = arith.constant 0 : i32
    return %c0_i32, %c0_i32_0, %c0_i32_1, %c0_i32_2 : i32, i32, i32, i32
  }
  func.func @transform_3(%arg0: i32) -> (i32, i32) {
    %c0_i32 = arith.constant 0 : i32
    %c0_i32_0 = arith.constant 0 : i32
    %c0_i32_1 = arith.constant 0 : i32
    return %c0_i32, %c0_i32_0 : i32, i32
  }
  func.func @transform_4(%arg0: i32) -> (i32, i32) {
    %c0_i32 = arith.constant 0 : i32
    %c0_i32_0 = arith.constant 0 : i32
    %c0_i32_1 = arith.constant 0 : i32
    return %c0_i32, %c0_i32_0 : i32, i32
  }
  func.func @transform_5(%arg0: i32) -> (i32, i32) {
    %c0_i32 = arith.constant 0 : i32
    %c0_i32_0 = arith.constant 0 : i32
    %c0_i32_1 = arith.constant 0 : i32
    return %c0_i32, %c0_i32_0 : i32, i32
  }
  func.func @transform_6(%arg0: i32) -> (i32, i32) {
    %c0_i32 = arith.constant 0 : i32
    %c0_i32_0 = arith.constant 0 : i32
    %c0_i32_1 = arith.constant 0 : i32
    return %c0_i32, %c0_i32_0 : i32, i32
  }
  func.func @transform_7(%arg0: i32) -> (i32, i32) {
    %c0_i32 = arith.constant 0 : i32
    %c0_i32_0 = arith.constant 0 : i32
    %c0_i32_1 = arith.constant 0 : i32
    return %c0_i32, %c0_i32_0 : i32, i32
  }
  func.func @transform_8(%arg0: i32) -> (i32, i32) {
    %c0_i32 = arith.constant 0 : i32
    %c0_i32_0 = arith.constant 0 : i32
    %c0_i32_1 = arith.constant 0 : i32
    return %c0_i32, %c0_i32_0 : i32, i32
  }
  func.func @transform_9(%arg0: i32) -> (i32, i32) {
    %c0_i32 = arith.constant 0 : i32
    %c0_i32_0 = arith.constant 0 : i32
    return %arg0, %c0_i32 : i32, i32
  }
}

</mosaic_0001>

<llo_original>
// kernel: simple_model_forward.1
$region0: #{simple_model_forward.1}
  #allocation0 [shape = 'u32[]', space=smem, size = 0x4, offset = 0x4, fixed_abs, tag = 'smem constant byte address 0x4 - core index']
  #allocation1 [shape = 'u32[144,128]{1,0:T(1,128)}', space=vmem, size = 0x12000, scoped, tag = 'internal scratch']
  #allocation2 [shape = 'f32[2,192]{1,0:T(2,128)}', space=vmem, size = 0x800, scoped, tag = 'scratch operand']
  %s0 = inlined_call_operand.vmem [shape: f32[3], index: 0, kind: input, shape index: {}]
  %s1 = inlined_call_operand.vmem [shape: f32[3,2,2,16], index: 1, kind: input, shape index: {}]
  %s2 = inlined_call_operand.vmem [shape: f32[3,2,64,1], index: 2, kind: input, shape index: {}]
  %s3 = inlined_call_operand.vmem [shape: f32[192,48], index: 3, kind: input, shape index: {}]
  %s4 = inlined_call_operand.vmem [shape: f32[1,48], index: 4, kind: input, shape index: {}]
  %s5 = inlined_call_operand.vmem [shape: f32[48,12], index: 5, kind: input, shape index: {}]
  %s6 = inlined_call_operand.vmem [shape: f32[1,12], index: 6, kind: input, shape index: {}]
  %s7 = inlined_call_operand.vmem [shape: f32[12,20], index: 7, kind: input, shape index: {}]
  %s8 = inlined_call_operand.vmem [shape: f32[1,20], index: 8, kind: input, shape index: {}]
  %s9 = inlined_call_operand.hbm [shape: f32[2,20], index: 9, kind: output, shape index: {}]
  %s10 = sld [smem:[#allocation0]]
  $region50: #{simple_model_forward.1} parent=0
    _
  %s12 = ssub.s32 1, %s10
  %s13 = scalar_select 0, %s12, %s10
  $region1: #{simple_model_forward.1} parent=0
    #allocation3 [shape = 'u8[512]{0}', space=smem, size = 0x200, scoped, tag = 'input window, operand 0, single buffered']
    #allocation4 [shape = 's32[1]{0}', space=sflag, size = 0x4, scoped, tag = 'scoped memory for simple_model_forward.1']
    #allocation5 [shape = 's32[1]{0}', space=sflag, size = 0x4, scoped, tag = 'scoped memory for simple_model_forward.1']
    #allocation6 [shape = 'u8[1024]{0}', space=vmem, size = 0x400, scoped, tag = 'output window, operand 0, single buffered']
    %14 = vsyncpa [#allocation5], 0
    %15 = vsyncpa [#allocation4], 0
    // Predicated region
    $region2: #{simple_model_forward.1} parent=1 // pred_check
      _
    $region3: #{simple_model_forward.1} parent=1 // pred_check_branch
      %17 = sbr.rel (0) target = $region5
    $region4: #{simple_model_forward.1} parent=1 // pred_region
      %s19 = ssub.s32 16, 16
      %20 = vsyncadd [#allocation5], %s19
      %s22 = sshll.u32 %s0, 4
      %s23 = int_to_ptr.vmem [resolvable:$true] %s22
      %25 = dma.vmem_to_smem %s23, 16, [#allocation3], [#allocation5]
    $region5: #{simple_model_forward.1} parent=1 // pred_fallthru
      _
    // Predicated region
    $region6: #{simple_model_forward.1} parent=1 // pred_check
      _
    $region7: #{simple_model_forward.1} parent=1 // pred_check_branch
      %27 = sbr.rel (0) target = $region9
    $region8: #{simple_model_forward.1} parent=1 // pred_region
      _
    $region9: #{simple_model_forward.1} parent=1 // pred_fallthru
      _
    // Predicated region
    $region10: #{simple_model_forward.1} parent=1 // pred_check
      _
    $region11: #{simple_model_forward.1} parent=1 // pred_check_branch
      %29 = sbr.rel (0) target = $region13
    $region12: #{simple_model_forward.1} parent=1 // pred_region
      _
    $region13: #{simple_model_forward.1} parent=1 // pred_fallthru
      _
    // Predicated region
    $region14: #{simple_model_forward.1} parent=1 // pred_check
      _
    $region15: #{simple_model_forward.1} parent=1 // pred_check_branch
      %31 = sbr.rel (0) target = $region17
    $region16: #{simple_model_forward.1} parent=1 // pred_region
      _
    $region17: #{simple_model_forward.1} parent=1 // pred_fallthru
      _
    // Predicated region
    $region18: #{simple_model_forward.1} parent=1 // pred_check
      _
    $region19: #{simple_model_forward.1} parent=1 // pred_check_branch
      %33 = sbr.rel (0) target = $region21
    $region20: #{simple_model_forward.1} parent=1 // pred_region
      _
    $region21: #{simple_model_forward.1} parent=1 // pred_fallthru
      _
    // Predicated region
    $region22: #{simple_model_forward.1} parent=1 // pred_check
      _
    $region23: #{simple_model_forward.1} parent=1 // pred_check_branch
      %35 = sbr.rel (0) target = $region25
    $region24: #{simple_model_forward.1} parent=1 // pred_region
      _
    $region25: #{simple_model_forward.1} parent=1 // pred_fallthru
      _
    // Predicated region
    $region26: #{simple_model_forward.1} parent=1 // pred_check
      _
    $region27: #{simple_model_forward.1} parent=1 // pred_check_branch
      %37 = sbr.rel (0) target = $region29
    $region28: #{simple_model_forward.1} parent=1 // pred_region
      _
    $region29: #{simple_model_forward.1} parent=1 // pred_fallthru
      _
    // Predicated region
    $region30: #{simple_model_forward.1} parent=1 // pred_check
      _
    $region31: #{simple_model_forward.1} parent=1 // pred_check_branch
      %39 = sbr.rel (0) target = $region33
    $region32: #{simple_model_forward.1} parent=1 // pred_region
      _
    $region33: #{simple_model_forward.1} parent=1 // pred_fallthru
      _
    // Predicated region
    $region34: #{simple_model_forward.1} parent=1 // pred_check
      _
    $region35: #{simple_model_forward.1} parent=1 // pred_check_branch
      %41 = sbr.rel (0) target = $region37
    $region36: #{simple_model_forward.1} parent=1 // pred_region
      _
    $region37: #{simple_model_forward.1} parent=1 // pred_fallthru
      _
    // Predicated region
    $region38: #{simple_model_forward.1} parent=1 // pred_check
      _
    $region39: #{simple_model_forward.1} parent=1 // pred_check_branch
      %43 = sbr.rel (0) target = $region41
    $region40: #{simple_model_forward.1} parent=1 // pred_region
      %44 = dma.done [#allocation5], 16
    $region41: #{simple_model_forward.1} parent=1 // pred_fallthru
      _
    %45 = sfence
    %s46 = sld [smem:[#allocation3]]
    %s47 = sand.u32 2147483647, %s46
    %v48 = vld [vmem:[%s2] sm:$0xff]
    %v49 = vld [vmem:[%s2 + $0x8] sm:$0xff]
    %v50 = vld [vmem:[%s2 + $0x10] sm:$0xff]
    %v51 = vld [vmem:[%s2 + $0x18] sm:$0xff]
    %v52 = vld [vmem:[%s2 + $0x20] sm:$0xff]
    %v53 = vld [vmem:[%s2 + $0x28] sm:$0xff]
    %v54 = vld [vmem:[%s2 + $0x30] sm:$0xff]
    %v55 = vld [vmem:[%s2 + $0x38] sm:$0xff]
    %s56 = scalar_lea.vmem %s2, 64
    %v57 = vld [vmem:[%s56] sm:$0xff]
    %v58 = vld [vmem:[%s56 + $0x8] sm:$0xff]
    %v59 = vld [vmem:[%s56 + $0x10] sm:$0xff]
    %v60 = vld [vmem:[%s56 + $0x18] sm:$0xff]
    %v61 = vld [vmem:[%s56 + $0x20] sm:$0xff]
    %v62 = vld [vmem:[%s56 + $0x28] sm:$0xff]
    %v63 = vld [vmem:[%s56 + $0x30] sm:$0xff]
    %v64 = vld [vmem:[%s56 + $0x38] sm:$0xff]
    %v65 = vld [vmem:[%s1] sm:$0x3]
    %v68 = vunpack.c.l.s4 1966171168
    %v69 = vunpack.c.0.s8 %v68
    %v70 = vlaneseq
    %v71 = vshrl.u32 %v70, 7
    %v72 = vsub.s32 %v69, %v71
    %v73 = vrot.slane %v65, %v72
    %v74 = vcombine.high %v73, %v73
    %v76 = vunpack.c.l.s4 1966171168
    %v77 = vunpack.c.0.s8 %v76
    %v78 = vlaneseq
    %v79 = vshrl.u32 %v78, 7
    %v80 = vsub.s32 %v77, %v79
    %v81 = vrot.slane %v73, %v80
    %v83 = vunpack.c.l.s4 1966171168
    %v84 = vunpack.c.0.s8 %v83
    %v85 = vlaneseq
    %v86 = vshrl.u32 %v85, 7
    %v87 = vsub.s32 %v84, %v86
    %v88 = vrot.slane %v74, %v87
    %v89 = vlaneseq
    %v90 = vshrl.u32 %v89, 7
    %v91 = vsub.s32 0, %v90
    %v92 = vrot.slane %v81, %v91
    %v93 = vlaneseq
    %v94 = vshrl.u32 %v93, 7
    %v95 = vsub.s32 0, %v94
    %v96 = vrot.slane %v88, %v95
    %100 = vset.pattern.permute.xlu0 0
    %101 = vperm.xlu0 %100, %v48
    %v102 = vpop.permute.xlu0 %101
    %105 = vset.pattern.permute.xlu0 0
    %106 = vperm.xlu0 %105, %v49
    %v107 = vpop.permute.xlu0 %106
    %110 = vset.pattern.permute.xlu0 0
    %111 = vperm.xlu0 %110, %v50
    %v112 = vpop.permute.xlu0 %111
    %115 = vset.pattern.permute.xlu0 0
    %116 = vperm.xlu0 %115, %v51
    %v117 = vpop.permute.xlu0 %116
    %120 = vset.pattern.permute.xlu0 0
    %121 = vperm.xlu0 %120, %v52
    %v122 = vpop.permute.xlu0 %121
    %125 = vset.pattern.permute.xlu0 0
    %126 = vperm.xlu0 %125, %v53
    %v127 = vpop.permute.xlu0 %126
    %130 = vset.pattern.permute.xlu0 0
    %131 = vperm.xlu0 %130, %v54
    %v132 = vpop.permute.xlu0 %131
    %135 = vset.pattern.permute.xlu0 0
    %136 = vperm.xlu0 %135, %v55
    %v137 = vpop.permute.xlu0 %136
    %v139 = vsub.f32 %v92, %v102
    %v140 = vsub.f32 %v92, %v107
    %v141 = vsub.f32 %v92, %v112
    %v142 = vsub.f32 %v92, %v117
    %v143 = vsub.f32 %v92, %v122
    %v144 = vsub.f32 %v92, %v127
    %v145 = vsub.f32 %v92, %v132
    %v146 = vsub.f32 %v92, %v137
    %v147 = vsub.f32 %v96, %v102
    %v148 = vsub.f32 %v96, %v107
    %v149 = vsub.f32 %v96, %v112
    %v150 = vsub.f32 %v96, %v117
    %v151 = vsub.f32 %v96, %v122
    %v152 = vsub.f32 %v96, %v127
    %v153 = vsub.f32 %v96, %v132
    %v154 = vsub.f32 %v96, %v137
    %v155 = vand.u32 2147483647, %v139
    %v156 = vand.u32 2147483647, %v140
    %v157 = vand.u32 2147483647, %v141
    %v158 = vand.u32 2147483647, %v142
    %v159 = vand.u32 2147483647, %v143
    %v160 = vand.u32 2147483647, %v144
    %v161 = vand.u32 2147483647, %v145
    %v162 = vand.u32 2147483647, %v146
    %v163 = vand.u32 2147483647, %v147
    %v164 = vand.u32 2147483647, %v148
    %v165 = vand.u32 2147483647, %v149
    %v166 = vand.u32 2147483647, %v150
    %v167 = vand.u32 2147483647, %v151
    %v168 = vand.u32 2147483647, %v152
    %v169 = vand.u32 2147483647, %v153
    %v170 = vand.u32 2147483647, %v154
    %s171 = scalar_lea.vmem %s1, 2
    %v172 = vld [vmem:[%s171] sm:$0x3]
    %v175 = vunpack.c.l.s4 1966171168
    %v176 = vunpack.c.0.s8 %v175
    %v177 = vlaneseq
    %v178 = vshrl.u32 %v177, 7
    %v179 = vsub.s32 %v176, %v178
    %v180 = vrot.slane %v172, %v179
    %v181 = vcombine.high %v180, %v180
    %v183 = vunpack.c.l.s4 1966171168
    %v184 = vunpack.c.0.s8 %v183
    %v185 = vlaneseq
    %v186 = vshrl.u32 %v185, 7
    %v187 = vsub.s32 %v184, %v186
    %v188 = vrot.slane %v180, %v187
    %v190 = vunpack.c.l.s4 1966171168
    %v191 = vunpack.c.0.s8 %v190
    %v192 = vlaneseq
    %v193 = vshrl.u32 %v192, 7
    %v194 = vsub.s32 %v191, %v193
    %v195 = vrot.slane %v181, %v194
    %v196 = vlaneseq
    %v197 = vshrl.u32 %v196, 7
    %v198 = vsub.s32 0, %v197
    %v199 = vrot.slane %v188, %v198
    %v200 = vlaneseq
    %v201 = vshrl.u32 %v200, 7
    %v202 = vsub.s32 0, %v201
    %v203 = vrot.slane %v195, %v202
    %207 = vset.pattern.permute.xlu0 0
    %208 = vperm.xlu0 %207, %v57
    %v209 = vpop.permute.xlu0 %208
    %212 = vset.pattern.permute.xlu0 0
    %213 = vperm.xlu0 %212, %v58
    %v214 = vpop.permute.xlu0 %213
    %217 = vset.pattern.permute.xlu0 0
    %218 = vperm.xlu0 %217, %v59
    %v219 = vpop.permute.xlu0 %218
    %222 = vset.pattern.permute.xlu0 0
    %223 = vperm.xlu0 %222, %v60
    %v224 = vpop.permute.xlu0 %223
    %227 = vset.pattern.permute.xlu0 0
    %228 = vperm.xlu0 %227, %v61
    %v229 = vpop.permute.xlu0 %228
    %232 = vset.pattern.permute.xlu0 0
    %233 = vperm.xlu0 %232, %v62
    %v234 = vpop.permute.xlu0 %233
    %237 = vset.pattern.permute.xlu0 0
    %238 = vperm.xlu0 %237, %v63
    %v239 = vpop.permute.xlu0 %238
    %242 = vset.pattern.permute.xlu0 0
    %243 = vperm.xlu0 %242, %v64
    %v244 = vpop.permute.xlu0 %243
    %v246 = vsub.f32 %v199, %v209
    %v247 = vsub.f32 %v199, %v214
    %v248 = vsub.f32 %v199, %v219
    %v249 = vsub.f32 %v199, %v224
    %v250 = vsub.f32 %v199, %v229
    %v251 = vsub.f32 %v199, %v234
    %v252 = vsub.f32 %v199, %v239
    %v253 = vsub.f32 %v199, %v244
    %v254 = vsub.f32 %v203, %v209
    %v255 = vsub.f32 %v203, %v214
    %v256 = vsub.f32 %v203, %v219
    %v257 = vsub.f32 %v203, %v224
    %v258 = vsub.f32 %v203, %v229
    %v259 = vsub.f32 %v203, %v234
    %v260 = vsub.f32 %v203, %v239
    %v261 = vsub.f32 %v203, %v244
    %v262 = vand.u32 2147483647, %v246
    %v263 = vand.u32 2147483647, %v247
    %v264 = vand.u32 2147483647, %v248
    %v265 = vand.u32 2147483647, %v249
    %v266 = vand.u32 2147483647, %v250
    %v267 = vand.u32 2147483647, %v251
    %v268 = vand.u32 2147483647, %v252
    %v269 = vand.u32 2147483647, %v253
    %v270 = vand.u32 2147483647, %v254
    %v271 = vand.u32 2147483647, %v255
    %v272 = vand.u32 2147483647, %v256
    %v273 = vand.u32 2147483647, %v257
    %v274 = vand.u32 2147483647, %v258
    %v275 = vand.u32 2147483647, %v259
    %v276 = vand.u32 2147483647, %v260
    %v277 = vand.u32 2147483647, %v261
    %v278 = vadd.f32 %v155, %v262
    %v279 = vadd.f32 %v156, %v263
    %v280 = vadd.f32 %v157, %v264
    %v281 = vadd.f32 %v158, %v265
    %v282 = vadd.f32 %v159, %v266
    %v283 = vadd.f32 %v160, %v267
    %v284 = vadd.f32 %v161, %v268
    %v285 = vadd.f32 %v162, %v269
    %v286 = vadd.f32 %v163, %v270
    %v287 = vadd.f32 %v164, %v271
    %v288 = vadd.f32 %v165, %v272
    %v289 = vadd.f32 %v166, %v273
    %v290 = vadd.f32 %v167, %v274
    %v291 = vadd.f32 %v168, %v275
    %v292 = vadd.f32 %v169, %v276
    %v293 = vadd.f32 %v170, %v277
    %v294 = vstv %s47
    %v295 = vsub.f32 %v294, %v278
    %v296 = vsub.f32 %v294, %v279
    %v297 = vsub.f32 %v294, %v280
    %v298 = vsub.f32 %v294, %v281
    %v299 = vsub.f32 %v294, %v282
    %v300 = vsub.f32 %v294, %v283
    %v301 = vsub.f32 %v294, %v284
    %v302 = vsub.f32 %v294, %v285
    %v303 = vsub.f32 %v294, %v286
    %v304 = vsub.f32 %v294, %v287
    %v305 = vsub.f32 %v294, %v288
    %v306 = vsub.f32 %v294, %v289
    %v307 = vsub.f32 %v294, %v290
    %v308 = vsub.f32 %v294, %v291
    %v309 = vsub.f32 %v294, %v292
    %v310 = vsub.f32 %v294, %v293
    %v311 = vand.u32 2147483647, %v295
    %v312 = vand.u32 2147483647, %v296
    %v313 = vand.u32 2147483647, %v297
    %v314 = vand.u32 2147483647, %v298
    %v315 = vand.u32 2147483647, %v299
    %v316 = vand.u32 2147483647, %v300
    %v317 = vand.u32 2147483647, %v301
    %v318 = vand.u32 2147483647, %v302
    %v319 = vand.u32 2147483647, %v303
    %v320 = vand.u32 2147483647, %v304
    %v321 = vand.u32 2147483647, %v305
    %v322 = vand.u32 2147483647, %v306
    %v323 = vand.u32 2147483647, %v307
    %v324 = vand.u32 2147483647, %v308
    %v325 = vand.u32 2147483647, %v309
    %v326 = vand.u32 2147483647, %v310
    %v327 = vadd.f32 %v278, 1.0
    %v328 = vadd.f32 %v279, 1.0
    %v329 = vadd.f32 %v280, 1.0
    %v330 = vadd.f32 %v281, 1.0
    %v331 = vadd.f32 %v282, 1.0
    %v332 = vadd.f32 %v283, 1.0
    %v333 = vadd.f32 %v284, 1.0
    %v334 = vadd.f32 %v285, 1.0
    %v335 = vadd.f32 %v286, 1.0
    %v336 = vadd.f32 %v287, 1.0
    %v337 = vadd.f32 %v288, 1.0
    %v338 = vadd.f32 %v289, 1.0
    %v339 = vadd.f32 %v290, 1.0
    %v340 = vadd.f32 %v291, 1.0
    %v341 = vadd.f32 %v292, 1.0
    %v342 = vadd.f32 %v293, 1.0
    %v343 = vadd.f32 %v311, 1.0
    %v344 = vadd.f32 %v312, 1.0
    %v345 = vadd.f32 %v313, 1.0
    %v346 = vadd.f32 %v314, 1.0
    %v347 = vadd.f32 %v315, 1.0
    %v348 = vadd.f32 %v316, 1.0
    %v349 = vadd.f32 %v317, 1.0
    %v350 = vadd.f32 %v318, 1.0
    %v351 = vadd.f32 %v319, 1.0
    %v352 = vadd.f32 %v320, 1.0
    %v353 = vadd.f32 %v321, 1.0
    %v354 = vadd.f32 %v322, 1.0
    %v355 = vadd.f32 %v323, 1.0
    %v356 = vadd.f32 %v324, 1.0
    %v357 = vadd.f32 %v325, 1.0
    %v358 = vadd.f32 %v326, 1.0
    %v359 = vmul.f32 %v327, %v343
    %v360 = vmul.f32 %v328, %v344
    %v361 = vmul.f32 %v329, %v345
    %v362 = vmul.f32 %v330, %v346
    %v363 = vmul.f32 %v331, %v347
    %v364 = vmul.f32 %v332, %v348
    %v365 = vmul.f32 %v333, %v349
    %v366 = vmul.f32 %v334, %v350
    %v367 = vmul.f32 %v335, %v351
    %v368 = vmul.f32 %v336, %v352
    %v369 = vmul.f32 %v337, %v353
    %v370 = vmul.f32 %v338, %v354
    %v371 = vmul.f32 %v339, %v355
    %v372 = vmul.f32 %v340, %v356
    %v373 = vmul.f32 %v341, %v357
    %v374 = vmul.f32 %v342, %v358
    %v375 = vsub.f32 %v311, %v278
    %v376 = vsub.f32 %v312, %v279
    %v377 = vsub.f32 %v313, %v280
    %v378 = vsub.f32 %v314, %v281
    %v379 = vsub.f32 %v315, %v282
    %v380 = vsub.f32 %v316, %v283
    %v381 = vsub.f32 %v317, %v284
    %v382 = vsub.f32 %v318, %v285
    %v383 = vsub.f32 %v319, %v286
    %v384 = vsub.f32 %v320, %v287
    %v385 = vsub.f32 %v321, %v288
    %v386 = vsub.f32 %v322, %v289
    %v387 = vsub.f32 %v323, %v290
    %v388 = vsub.f32 %v324, %v291
    %v389 = vsub.f32 %v325, %v292
    %v390 = vsub.f32 %v326, %v293
    %v391 = vrcp.pop %v359
    %v392 = vmul.f32 %v375, %v391
    %v393 = vrcp.pop %v360
    %v394 = vmul.f32 %v376, %v393
    %v395 = vrcp.pop %v361
    %v396 = vmul.f32 %v377, %v395
    %v397 = vrcp.pop %v362
    %v398 = vmul.f32 %v378, %v397
    %v399 = vrcp.pop %v363
    %v400 = vmul.f32 %v379, %v399
    %v401 = vrcp.pop %v364
    %v402 = vmul.f32 %v380, %v401
    %v403 = vrcp.pop %v365
    %v404 = vmul.f32 %v381, %v403
    %v405 = vrcp.pop %v366
    %v406 = vmul.f32 %v382, %v405
    %v407 = vrcp.pop %v367
    %v408 = vmul.f32 %v383, %v407
    %v409 = vrcp.pop %v368
    %v410 = vmul.f32 %v384, %v409
    %v411 = vrcp.pop %v369
    %v412 = vmul.f32 %v385, %v411
    %v413 = vrcp.pop %v370
    %v414 = vmul.f32 %v386, %v413
    %v415 = vrcp.pop %v371
    %v416 = vmul.f32 %v387, %v415
    %v417 = vrcp.pop %v372
    %v418 = vmul.f32 %v388, %v417
    %v419 = vrcp.pop %v373
    %v420 = vmul.f32 %v389, %v419
    %v421 = vrcp.pop %v374
    %v422 = vmul.f32 %v390, %v421
    %vm423 = vcmask 130048
    %v424 = vsel %vm423, %v392, 0.0
    %425 = vadd.xlane.f32.xlu0 %v424
    %v426 = vpop.xlane.xlu0 %425
    %v427 = vsel %vm423, %v394, 0.0
    %428 = vadd.xlane.f32.xlu0 %v427
    %v429 = vpop.xlane.xlu0 %428
    %v430 = vsel %vm423, %v396, 0.0
    %431 = vadd.xlane.f32.xlu0 %v430
    %v432 = vpop.xlane.xlu0 %431
    %v433 = vsel %vm423, %v398, 0.0
    %434 = vadd.xlane.f32.xlu0 %v433
    %v435 = vpop.xlane.xlu0 %434
    %v436 = vsel %vm423, %v400, 0.0
    %437 = vadd.xlane.f32.xlu0 %v436
    %v438 = vpop.xlane.xlu0 %437
    %v439 = vsel %vm423, %v402, 0.0
    %440 = vadd.xlane.f32.xlu0 %v439
    %v441 = vpop.xlane.xlu0 %440
    %v442 = vsel %vm423, %v404, 0.0
    %443 = vadd.xlane.f32.xlu0 %v442
    %v444 = vpop.xlane.xlu0 %443
    %v445 = vsel %vm423, %v406, 0.0
    %446 = vadd.xlane.f32.xlu0 %v445
    %v447 = vpop.xlane.xlu0 %446
    %v448 = vsel %vm423, %v408, 0.0
    %449 = vadd.xlane.f32.xlu0 %v448
    %v450 = vpop.xlane.xlu0 %449
    %v451 = vsel %vm423, %v410, 0.0
    %452 = vadd.xlane.f32.xlu0 %v451
    %v453 = vpop.xlane.xlu0 %452
    %v454 = vsel %vm423, %v412, 0.0
    %455 = vadd.xlane.f32.xlu0 %v454
    %v456 = vpop.xlane.xlu0 %455
    %v457 = vsel %vm423, %v414, 0.0
    %458 = vadd.xlane.f32.xlu0 %v457
    %v459 = vpop.xlane.xlu0 %458
    %v460 = vsel %vm423, %v416, 0.0
    %461 = vadd.xlane.f32.xlu0 %v460
    %v462 = vpop.xlane.xlu0 %461
    %v463 = vsel %vm423, %v418, 0.0
    %464 = vadd.xlane.f32.xlu0 %v463
    %v465 = vpop.xlane.xlu0 %464
    %v466 = vsel %vm423, %v420, 0.0
    %467 = vadd.xlane.f32.xlu0 %v466
    %v468 = vpop.xlane.xlu0 %467
    %v469 = vsel %vm423, %v422, 0.0
    %470 = vadd.xlane.f32.xlu0 %v469
    %v471 = vpop.xlane.xlu0 %470
    %v472 = vadd.f32 %v426, 0.0
    %v473 = vadd.f32 %v429, 0.0
    %v474 = vadd.f32 %v432, 0.0
    %v475 = vadd.f32 %v435, 0.0
    %v476 = vadd.f32 %v438, 0.0
    %v477 = vadd.f32 %v441, 0.0
    %v478 = vadd.f32 %v444, 0.0
    %v479 = vadd.f32 %v447, 0.0
    %v480 = vadd.f32 %v450, 0.0
    %v481 = vadd.f32 %v453, 0.0
    %v482 = vadd.f32 %v456, 0.0
    %v483 = vadd.f32 %v459, 0.0
    %v484 = vadd.f32 %v462, 0.0
    %v485 = vadd.f32 %v465, 0.0
    %v486 = vadd.f32 %v468, 0.0
    %v487 = vadd.f32 %v471, 0.0
    %v505 = vunpack.c.l.s4 269488144
    %v506 = vunpack.c.0.s8 %v505
    %v507 = vlaneseq
    %v508 = vshrl.u32 %v507, 7
    %v509 = vsub.s32 %v506, %v508
    %v510 = vrot.slane %v472, %v509
    %v512 = vunpack.c.l.s4 842150450
    %v513 = vunpack.c.0.s8 %v512
    %v514 = vlaneseq
    %v515 = vshrl.u32 %v514, 7
    %v516 = vsub.s32 %v513, %v515
    %v517 = vrot.slane %v472, %v516
    %v519 = vunpack.c.l.s4 1414812756
    %v520 = vunpack.c.0.s8 %v519
    %v521 = vlaneseq
    %v522 = vshrl.u32 %v521, 7
    %v523 = vsub.s32 %v520, %v522
    %v524 = vrot.slane %v472, %v523
    %v526 = vunpack.c.l.s4 1987475062
    %v527 = vunpack.c.0.s8 %v526
    %v528 = vlaneseq
    %v529 = vshrl.u32 %v528, 7
    %v530 = vsub.s32 %v527, %v529
    %v531 = vrot.slane %v472, %v530
    %v533 = vunpack.c.l.s4 269488144
    %v534 = vunpack.c.0.s8 %v533
    %v535 = vlaneseq
    %v536 = vshrl.u32 %v535, 7
    %v537 = vsub.s32 %v534, %v536
    %v538 = vrot.slane %v473, %v537
    %v540 = vunpack.c.l.s4 842150450
    %v541 = vunpack.c.0.s8 %v540
    %v542 = vlaneseq
    %v543 = vshrl.u32 %v542, 7
    %v544 = vsub.s32 %v541, %v543
    %v545 = vrot.slane %v473, %v544
    %v547 = vunpack.c.l.s4 1414812756
    %v548 = vunpack.c.0.s8 %v547
    %v549 = vlaneseq
    %v550 = vshrl.u32 %v549, 7
    %v551 = vsub.s32 %v548, %v550
    %v552 = vrot.slane %v473, %v551
    %v554 = vunpack.c.l.s4 1987475062
    %v555 = vunpack.c.0.s8 %v554
    %v556 = vlaneseq
    %v557 = vshrl.u32 %v556, 7
    %v558 = vsub.s32 %v555, %v557
    %v559 = vrot.slane %v473, %v558
    %v561 = vunpack.c.l.s4 269488144
    %v562 = vunpack.c.0.s8 %v561
    %v563 = vlaneseq
    %v564 = vshrl.u32 %v563, 7
    %v565 = vsub.s32 %v562, %v564
    %v566 = vrot.slane %v474, %v565
    %v568 = vunpack.c.l.s4 842150450
    %v569 = vunpack.c.0.s8 %v568
    %v570 = vlaneseq
    %v571 = vshrl.u32 %v570, 7
    %v572 = vsub.s32 %v569, %v571
    %v573 = vrot.slane %v474, %v572
    %v575 = vunpack.c.l.s4 1414812756
    %v576 = vunpack.c.0.s8 %v575
    %v577 = vlaneseq
    %v578 = vshrl.u32 %v577, 7
    %v579 = vsub.s32 %v576, %v578
    %v580 = vrot.slane %v474, %v579
    %v582 = vunpack.c.l.s4 1987475062
    %v583 = vunpack.c.0.s8 %v582
    %v584 = vlaneseq
    %v585 = vshrl.u32 %v584, 7
    %v586 = vsub.s32 %v583, %v585
    %v587 = vrot.slane %v474, %v586
    %v589 = vunpack.c.l.s4 269488144
    %v590 = vunpack.c.0.s8 %v589
    %v591 = vlaneseq
    %v592 = vshrl.u32 %v591, 7
    %v593 = vsub.s32 %v590, %v592
    %v594 = vrot.slane %v475, %v593
    %v596 = vunpack.c.l.s4 842150450
    %v597 = vunpack.c.0.s8 %v596
    %v598 = vlaneseq
    %v599 = vshrl.u32 %v598, 7
    %v600 = vsub.s32 %v597, %v599
    %v601 = vrot.slane %v475, %v600
    %v603 = vunpack.c.l.s4 1414812756
    %v604 = vunpack.c.0.s8 %v603
    %v605 = vlaneseq
    %v606 = vshrl.u32 %v605, 7
    %v607 = vsub.s32 %v604, %v606
    %v608 = vrot.slane %v475, %v607
    %v610 = vunpack.c.l.s4 1987475062
    %v611 = vunpack.c.0.s8 %v610
    %v612 = vlaneseq
    %v613 = vshrl.u32 %v612, 7
    %v614 = vsub.s32 %v611, %v613
    %v615 = vrot.slane %v475, %v614
    %v617 = vunpack.c.l.s4 269488144
    %v618 = vunpack.c.0.s8 %v617
    %v619 = vlaneseq
    %v620 = vshrl.u32 %v619, 7
    %v621 = vsub.s32 %v618, %v620
    %v622 = vrot.slane %v476, %v621
    %v624 = vunpack.c.l.s4 842150450
    %v625 = vunpack.c.0.s8 %v624
    %v626 = vlaneseq
    %v627 = vshrl.u32 %v626, 7
    %v628 = vsub.s32 %v625, %v627
    %v629 = vrot.slane %v476, %v628
    %v631 = vunpack.c.l.s4 1414812756
    %v632 = vunpack.c.0.s8 %v631
    %v633 = vlaneseq
    %v634 = vshrl.u32 %v633, 7
    %v635 = vsub.s32 %v632, %v634
    %v636 = vrot.slane %v476, %v635
    %v638 = vunpack.c.l.s4 1987475062
    %v639 = vunpack.c.0.s8 %v638
    %v640 = vlaneseq
    %v641 = vshrl.u32 %v640, 7
    %v642 = vsub.s32 %v639, %v641
    %v643 = vrot.slane %v476, %v642
    %v645 = vunpack.c.l.s4 269488144
    %v646 = vunpack.c.0.s8 %v645
    %v647 = vlaneseq
    %v648 = vshrl.u32 %v647, 7
    %v649 = vsub.s32 %v646, %v648
    %v650 = vrot.slane %v477, %v649
    %v652 = vunpack.c.l.s4 842150450
    %v653 = vunpack.c.0.s8 %v652
    %v654 = vlaneseq
    %v655 = vshrl.u32 %v654, 7
    %v656 = vsub.s32 %v653, %v655
    %v657 = vrot.slane %v477, %v656
    %v659 = vunpack.c.l.s4 1414812756
    %v660 = vunpack.c.0.s8 %v659
    %v661 = vlaneseq
    %v662 = vshrl.u32 %v661, 7
    %v663 = vsub.s32 %v660, %v662
    %v664 = vrot.slane %v477, %v663
    %v666 = vunpack.c.l.s4 1987475062
    %v667 = vunpack.c.0.s8 %v666
    %v668 = vlaneseq
    %v669 = vshrl.u32 %v668, 7
    %v670 = vsub.s32 %v667, %v669
    %v671 = vrot.slane %v477, %v670
    %v673 = vunpack.c.l.s4 269488144
    %v674 = vunpack.c.0.s8 %v673
    %v675 = vlaneseq
    %v676 = vshrl.u32 %v675, 7
    %v677 = vsub.s32 %v674, %v676
    %v678 = vrot.slane %v478, %v677
    %v680 = vunpack.c.l.s4 842150450
    %v681 = vunpack.c.0.s8 %v680
    %v682 = vlaneseq
    %v683 = vshrl.u32 %v682, 7
    %v684 = vsub.s32 %v681, %v683
    %v685 = vrot.slane %v478, %v684
    %v687 = vunpack.c.l.s4 1414812756
    %v688 = vunpack.c.0.s8 %v687
    %v689 = vlaneseq
    %v690 = vshrl.u32 %v689, 7
    %v691 = vsub.s32 %v688, %v690
    %v692 = vrot.slane %v478, %v691
    %v694 = vunpack.c.l.s4 1987475062
    %v695 = vunpack.c.0.s8 %v694
    %v696 = vlaneseq
    %v697 = vshrl.u32 %v696, 7
    %v698 = vsub.s32 %v695, %v697
    %v699 = vrot.slane %v478, %v698
    %v701 = vunpack.c.l.s4 269488144
    %v702 = vunpack.c.0.s8 %v701
    %v703 = vlaneseq
    %v704 = vshrl.u32 %v703, 7
    %v705 = vsub.s32 %v702, %v704
    %v706 = vrot.slane %v479, %v705
    %v708 = vunpack.c.l.s4 842150450
    %v709 = vunpack.c.0.s8 %v708
    %v710 = vlaneseq
    %v711 = vshrl.u32 %v710, 7
    %v712 = vsub.s32 %v709, %v711
    %v713 = vrot.slane %v479, %v712
    %v715 = vunpack.c.l.s4 1414812756
    %v716 = vunpack.c.0.s8 %v715
    %v717 = vlaneseq
    %v718 = vshrl.u32 %v717, 7
    %v719 = vsub.s32 %v716, %v718
    %v720 = vrot.slane %v479, %v719
    %v722 = vunpack.c.l.s4 1987475062
    %v723 = vunpack.c.0.s8 %v722
    %v724 = vlaneseq
    %v725 = vshrl.u32 %v724, 7
    %v726 = vsub.s32 %v723, %v725
    %v727 = vrot.slane %v479, %v726
    %v729 = vunpack.c.l.s4 269488144
    %v730 = vunpack.c.0.s8 %v729
    %v731 = vlaneseq
    %v732 = vshrl.u32 %v731, 7
    %v733 = vsub.s32 %v730, %v732
    %v734 = vrot.slane %v480, %v733
    %v736 = vunpack.c.l.s4 842150450
    %v737 = vunpack.c.0.s8 %v736
    %v738 = vlaneseq
    %v739 = vshrl.u32 %v738, 7
    %v740 = vsub.s32 %v737, %v739
    %v741 = vrot.slane %v480, %v740
    %v743 = vunpack.c.l.s4 1414812756
    %v744 = vunpack.c.0.s8 %v743
    %v745 = vlaneseq
    %v746 = vshrl.u32 %v745, 7
    %v747 = vsub.s32 %v744, %v746
    %v748 = vrot.slane %v480, %v747
    %v750 = vunpack.c.l.s4 1987475062
    %v751 = vunpack.c.0.s8 %v750
    %v752 = vlaneseq
    %v753 = vshrl.u32 %v752, 7
    %v754 = vsub.s32 %v751, %v753
    %v755 = vrot.slane %v480, %v754
    %v757 = vunpack.c.l.s4 269488144
    %v758 = vunpack.c.0.s8 %v757
    %v759 = vlaneseq
    %v760 = vshrl.u32 %v759, 7
    %v761 = vsub.s32 %v758, %v760
    %v762 = vrot.slane %v481, %v761
    %v764 = vunpack.c.l.s4 842150450
    %v765 = vunpack.c.0.s8 %v764
    %v766 = vlaneseq
    %v767 = vshrl.u32 %v766, 7
    %v768 = vsub.s32 %v765, %v767
    %v769 = vrot.slane %v481, %v768
    %v771 = vunpack.c.l.s4 1414812756
    %v772 = vunpack.c.0.s8 %v771
    %v773 = vlaneseq
    %v774 = vshrl.u32 %v773, 7
    %v775 = vsub.s32 %v772, %v774
    %v776 = vrot.slane %v481, %v775
    %v778 = vunpack.c.l.s4 1987475062
    %v779 = vunpack.c.0.s8 %v778
    %v780 = vlaneseq
    %v781 = vshrl.u32 %v780, 7
    %v782 = vsub.s32 %v779, %v781
    %v783 = vrot.slane %v481, %v782
    %v785 = vunpack.c.l.s4 269488144
    %v786 = vunpack.c.0.s8 %v785
    %v787 = vlaneseq
    %v788 = vshrl.u32 %v787, 7
    %v789 = vsub.s32 %v786, %v788
    %v790 = vrot.slane %v482, %v789
    %v792 = vunpack.c.l.s4 842150450
    %v793 = vunpack.c.0.s8 %v792
    %v794 = vlaneseq
    %v795 = vshrl.u32 %v794, 7
    %v796 = vsub.s32 %v793, %v795
    %v797 = vrot.slane %v482, %v796
    %v799 = vunpack.c.l.s4 1414812756
    %v800 = vunpack.c.0.s8 %v799
    %v801 = vlaneseq
    %v802 = vshrl.u32 %v801, 7
    %v803 = vsub.s32 %v800, %v802
    %v804 = vrot.slane %v482, %v803
    %v806 = vunpack.c.l.s4 1987475062
    %v807 = vunpack.c.0.s8 %v806
    %v808 = vlaneseq
    %v809 = vshrl.u32 %v808, 7
    %v810 = vsub.s32 %v807, %v809
    %v811 = vrot.slane %v482, %v810
    %v813 = vunpack.c.l.s4 269488144
    %v814 = vunpack.c.0.s8 %v813
    %v815 = vlaneseq
    %v816 = vshrl.u32 %v815, 7
    %v817 = vsub.s32 %v814, %v816
    %v818 = vrot.slane %v483, %v817
    %v820 = vunpack.c.l.s4 842150450
    %v821 = vunpack.c.0.s8 %v820
    %v822 = vlaneseq
    %v823 = vshrl.u32 %v822, 7
    %v824 = vsub.s32 %v821, %v823
    %v825 = vrot.slane %v483, %v824
    %v827 = vunpack.c.l.s4 1414812756
    %v828 = vunpack.c.0.s8 %v827
    %v829 = vlaneseq
    %v830 = vshrl.u32 %v829, 7
    %v831 = vsub.s32 %v828, %v830
    %v832 = vrot.slane %v483, %v831
    %v834 = vunpack.c.l.s4 1987475062
    %v835 = vunpack.c.0.s8 %v834
    %v836 = vlaneseq
    %v837 = vshrl.u32 %v836, 7
    %v838 = vsub.s32 %v835, %v837
    %v839 = vrot.slane %v483, %v838
    %v841 = vunpack.c.l.s4 269488144
    %v842 = vunpack.c.0.s8 %v841
    %v843 = vlaneseq
    %v844 = vshrl.u32 %v843, 7
    %v845 = vsub.s32 %v842, %v844
    %v846 = vrot.slane %v484, %v845
    %v848 = vunpack.c.l.s4 842150450
    %v849 = vunpack.c.0.s8 %v848
    %v850 = vlaneseq
    %v851 = vshrl.u32 %v850, 7
    %v852 = vsub.s32 %v849, %v851
    %v853 = vrot.slane %v484, %v852
    %v855 = vunpack.c.l.s4 1414812756
    %v856 = vunpack.c.0.s8 %v855
    %v857 = vlaneseq
    %v858 = vshrl.u32 %v857, 7
    %v859 = vsub.s32 %v856, %v858
    %v860 = vrot.slane %v484, %v859
    %v862 = vunpack.c.l.s4 1987475062
    %v863 = vunpack.c.0.s8 %v862
    %v864 = vlaneseq
    %v865 = vshrl.u32 %v864, 7
    %v866 = vsub.s32 %v863, %v865
    %v867 = vrot.slane %v484, %v866
    %v869 = vunpack.c.l.s4 269488144
    %v870 = vunpack.c.0.s8 %v869
    %v871 = vlaneseq
    %v872 = vshrl.u32 %v871, 7
    %v873 = vsub.s32 %v870, %v872
    %v874 = vrot.slane %v485, %v873
    %v876 = vunpack.c.l.s4 842150450
    %v877 = vunpack.c.0.s8 %v876
    %v878 = vlaneseq
    %v879 = vshrl.u32 %v878, 7
    %v880 = vsub.s32 %v877, %v879
    %v881 = vrot.slane %v485, %v880
    %v883 = vunpack.c.l.s4 1414812756
    %v884 = vunpack.c.0.s8 %v883
    %v885 = vlaneseq
    %v886 = vshrl.u32 %v885, 7
    %v887 = vsub.s32 %v884, %v886
    %v888 = vrot.slane %v485, %v887
    %v890 = vunpack.c.l.s4 1987475062
    %v891 = vunpack.c.0.s8 %v890
    %v892 = vlaneseq
    %v893 = vshrl.u32 %v892, 7
    %v894 = vsub.s32 %v891, %v893
    %v895 = vrot.slane %v485, %v894
    %v897 = vunpack.c.l.s4 269488144
    %v898 = vunpack.c.0.s8 %v897
    %v899 = vlaneseq
    %v900 = vshrl.u32 %v899, 7
    %v901 = vsub.s32 %v898, %v900
    %v902 = vrot.slane %v486, %v901
    %v904 = vunpack.c.l.s4 842150450
    %v905 = vunpack.c.0.s8 %v904
    %v906 = vlaneseq
    %v907 = vshrl.u32 %v906, 7
    %v908 = vsub.s32 %v905, %v907
    %v909 = vrot.slane %v486, %v908
    %v911 = vunpack.c.l.s4 1414812756
    %v912 = vunpack.c.0.s8 %v911
    %v913 = vlaneseq
    %v914 = vshrl.u32 %v913, 7
    %v915 = vsub.s32 %v912, %v914
    %v916 = vrot.slane %v486, %v915
    %v918 = vunpack.c.l.s4 1987475062
    %v919 = vunpack.c.0.s8 %v918
    %v920 = vlaneseq
    %v921 = vshrl.u32 %v920, 7
    %v922 = vsub.s32 %v919, %v921
    %v923 = vrot.slane %v486, %v922
    %v925 = vunpack.c.l.s4 269488144
    %v926 = vunpack.c.0.s8 %v925
    %v927 = vlaneseq
    %v928 = vshrl.u32 %v927, 7
    %v929 = vsub.s32 %v926, %v928
    %v930 = vrot.slane %v487, %v929
    %v932 = vunpack.c.l.s4 842150450
    %v933 = vunpack.c.0.s8 %v932
    %v934 = vlaneseq
    %v935 = vshrl.u32 %v934, 7
    %v936 = vsub.s32 %v933, %v935
    %v937 = vrot.slane %v487, %v936
    %v939 = vunpack.c.l.s4 1414812756
    %v940 = vunpack.c.0.s8 %v939
    %v941 = vlaneseq
    %v942 = vshrl.u32 %v941, 7
    %v943 = vsub.s32 %v940, %v942
    %v944 = vrot.slane %v487, %v943
    %v946 = vunpack.c.l.s4 1987475062
    %v947 = vunpack.c.0.s8 %v946
    %v948 = vlaneseq
    %v949 = vshrl.u32 %v948, 7
    %v950 = vsub.s32 %v947, %v949
    %v951 = vrot.slane %v487, %v950
    %v952 = vcombine.low %v510, %v517
    %v953 = vcombine.low %v524, %v531
    %v955 = vunpack.c.l.s4 1983009808
    %v956 = vunpack.c.0.s8 %v955
    %v957 = vlaneseq
    %v958 = vshrl.u32 %v957, 7
    %v959 = vsub.s32 %v956, %v958
    %v960 = vrot.slane %v952, %v959
    %v962 = vunpack.c.l.s4 1983009808
    %v963 = vunpack.c.0.s8 %v962
    %v964 = vlaneseq
    %v965 = vshrl.u32 %v964, 7
    %v966 = vsub.s32 %v963, %v965
    %v967 = vrot.slane %v953, %v966
    %v968 = vcombine.low %v960, %v967
    %v969 = vcombine.low %v538, %v545
    %v970 = vcombine.low %v552, %v559
    %v972 = vunpack.c.l.s4 1983009808
    %v973 = vunpack.c.0.s8 %v972
    %v974 = vlaneseq
    %v975 = vshrl.u32 %v974, 7
    %v976 = vsub.s32 %v973, %v975
    %v977 = vrot.slane %v969, %v976
    %v979 = vunpack.c.l.s4 1983009808
    %v980 = vunpack.c.0.s8 %v979
    %v981 = vlaneseq
    %v982 = vshrl.u32 %v981, 7
    %v983 = vsub.s32 %v980, %v982
    %v984 = vrot.slane %v970, %v983
    %v985 = vcombine.low %v977, %v984
    %v986 = vcombine.low %v566, %v573
    %v987 = vcombine.low %v580, %v587
    %v989 = vunpack.c.l.s4 1983009808
    %v990 = vunpack.c.0.s8 %v989
    %v991 = vlaneseq
    %v992 = vshrl.u32 %v991, 7
    %v993 = vsub.s32 %v990, %v992
    %v994 = vrot.slane %v986, %v993
    %v996 = vunpack.c.l.s4 1983009808
    %v997 = vunpack.c.0.s8 %v996
    %v998 = vlaneseq
    %v999 = vshrl.u32 %v998, 7
    %v1000 = vsub.s32 %v997, %v999
    %v1001 = vrot.slane %v987, %v1000
    %v1002 = vcombine.low %v994, %v1001
    %v1003 = vcombine.low %v594, %v601
    %v1004 = vcombine.low %v608, %v615
    %v1006 = vunpack.c.l.s4 1983009808
    %v1007 = vunpack.c.0.s8 %v1006
    %v1008 = vlaneseq
    %v1009 = vshrl.u32 %v1008, 7
    %v1010 = vsub.s32 %v1007, %v1009
    %v1011 = vrot.slane %v1003, %v1010
    %v1013 = vunpack.c.l.s4 1983009808
    %v1014 = vunpack.c.0.s8 %v1013
    %v1015 = vlaneseq
    %v1016 = vshrl.u32 %v1015, 7
    %v1017 = vsub.s32 %v1014, %v1016
    %v1018 = vrot.slane %v1004, %v1017
    %v1019 = vcombine.low %v1011, %v1018
    %v1020 = vcombine.low %v622, %v629
    %v1021 = vcombine.low %v636, %v643
    %v1023 = vunpack.c.l.s4 1983009808
    %v1024 = vunpack.c.0.s8 %v1023
    %v1025 = vlaneseq
    %v1026 = vshrl.u32 %v1025, 7
    %v1027 = vsub.s32 %v1024, %v1026
    %v1028 = vrot.slane %v1020, %v1027
    %v1030 = vunpack.c.l.s4 1983009808
    %v1031 = vunpack.c.0.s8 %v1030
    %v1032 = vlaneseq
    %v1033 = vshrl.u32 %v1032, 7
    %v1034 = vsub.s32 %v1031, %v1033
    %v1035 = vrot.slane %v1021, %v1034
    %v1036 = vcombine.low %v1028, %v1035
    %v1037 = vcombine.low %v650, %v657
    %v1038 = vcombine.low %v664, %v671
    %v1040 = vunpack.c.l.s4 1983009808
    %v1041 = vunpack.c.0.s8 %v1040
    %v1042 = vlaneseq
    %v1043 = vshrl.u32 %v1042, 7
    %v1044 = vsub.s32 %v1041, %v1043
    %v1045 = vrot.slane %v1037, %v1044
    %v1047 = vunpack.c.l.s4 1983009808
    %v1048 = vunpack.c.0.s8 %v1047
    %v1049 = vlaneseq
    %v1050 = vshrl.u32 %v1049, 7
    %v1051 = vsub.s32 %v1048, %v1050
    %v1052 = vrot.slane %v1038, %v1051
    %v1053 = vcombine.low %v1045, %v1052
    %v1054 = vcombine.low %v678, %v685
    %v1055 = vcombine.low %v692, %v699
    %v1057 = vunpack.c.l.s4 1983009808
    %v1058 = vunpack.c.0.s8 %v1057
    %v1059 = vlaneseq
    %v1060 = vshrl.u32 %v1059, 7
    %v1061 = vsub.s32 %v1058, %v1060
    %v1062 = vrot.slane %v1054, %v1061
    %v1064 = vunpack.c.l.s4 1983009808
    %v1065 = vunpack.c.0.s8 %v1064
    %v1066 = vlaneseq
    %v1067 = vshrl.u32 %v1066, 7
    %v1068 = vsub.s32 %v1065, %v1067
    %v1069 = vrot.slane %v1055, %v1068
    %v1070 = vcombine.low %v1062, %v1069
    %v1071 = vcombine.low %v706, %v713
    %v1072 = vcombine.low %v720, %v727
    %v1074 = vunpack.c.l.s4 1983009808
    %v1075 = vunpack.c.0.s8 %v1074
    %v1076 = vlaneseq
    %v1077 = vshrl.u32 %v1076, 7
    %v1078 = vsub.s32 %v1075, %v1077
    %v1079 = vrot.slane %v1071, %v1078
    %v1081 = vunpack.c.l.s4 1983009808
    %v1082 = vunpack.c.0.s8 %v1081
    %v1083 = vlaneseq
    %v1084 = vshrl.u32 %v1083, 7
    %v1085 = vsub.s32 %v1082, %v1084
    %v1086 = vrot.slane %v1072, %v1085
    %v1087 = vcombine.low %v1079, %v1086
    %v1088 = vcombine.low %v734, %v741
    %v1089 = vcombine.low %v748, %v755
    %v1091 = vunpack.c.l.s4 1983009808
    %v1092 = vunpack.c.0.s8 %v1091
    %v1093 = vlaneseq
    %v1094 = vshrl.u32 %v1093, 7
    %v1095 = vsub.s32 %v1092, %v1094
    %v1096 = vrot.slane %v1088, %v1095
    %v1098 = vunpack.c.l.s4 1983009808
    %v1099 = vunpack.c.0.s8 %v1098
    %v1100 = vlaneseq
    %v1101 = vshrl.u32 %v1100, 7
    %v1102 = vsub.s32 %v1099, %v1101
    %v1103 = vrot.slane %v1089, %v1102
    %v1104 = vcombine.low %v1096, %v1103
    %v1105 = vcombine.low %v762, %v769
    %v1106 = vcombine.low %v776, %v783
    %v1108 = vunpack.c.l.s4 1983009808
    %v1109 = vunpack.c.0.s8 %v1108
    %v1110 = vlaneseq
    %v1111 = vshrl.u32 %v1110, 7
    %v1112 = vsub.s32 %v1109, %v1111
    %v1113 = vrot.slane %v1105, %v1112
    %v1115 = vunpack.c.l.s4 1983009808
    %v1116 = vunpack.c.0.s8 %v1115
    %v1117 = vlaneseq
    %v1118 = vshrl.u32 %v1117, 7
    %v1119 = vsub.s32 %v1116, %v1118
    %v1120 = vrot.slane %v1106, %v1119
    %v1121 = vcombine.low %v1113, %v1120
    %v1122 = vcombine.low %v790, %v797
    %v1123 = vcombine.low %v804, %v811
    %v1125 = vunpack.c.l.s4 1983009808
    %v1126 = vunpack.c.0.s8 %v1125
    %v1127 = vlaneseq
    %v1128 = vshrl.u32 %v1127, 7
    %v1129 = vsub.s32 %v1126, %v1128
    %v1130 = vrot.slane %v1122, %v1129
    %v1132 = vunpack.c.l.s4 1983009808
    %v1133 = vunpack.c.0.s8 %v1132
    %v1134 = vlaneseq
    %v1135 = vshrl.u32 %v1134, 7
    %v1136 = vsub.s32 %v1133, %v1135
    %v1137 = vrot.slane %v1123, %v1136
    %v1138 = vcombine.low %v1130, %v1137
    %v1139 = vcombine.low %v818, %v825
    %v1140 = vcombine.low %v832, %v839
    %v1142 = vunpack.c.l.s4 1983009808
    %v1143 = vunpack.c.0.s8 %v1142
    %v1144 = vlaneseq
    %v1145 = vshrl.u32 %v1144, 7
    %v1146 = vsub.s32 %v1143, %v1145
    %v1147 = vrot.slane %v1139, %v1146
    %v1149 = vunpack.c.l.s4 1983009808
    %v1150 = vunpack.c.0.s8 %v1149
    %v1151 = vlaneseq
    %v1152 = vshrl.u32 %v1151, 7
    %v1153 = vsub.s32 %v1150, %v1152
    %v1154 = vrot.slane %v1140, %v1153
    %v1155 = vcombine.low %v1147, %v1154
    %v1156 = vcombine.low %v846, %v853
    %v1157 = vcombine.low %v860, %v867
    %v1159 = vunpack.c.l.s4 1983009808
    %v1160 = vunpack.c.0.s8 %v1159
    %v1161 = vlaneseq
    %v1162 = vshrl.u32 %v1161, 7
    %v1163 = vsub.s32 %v1160, %v1162
    %v1164 = vrot.slane %v1156, %v1163
    %v1166 = vunpack.c.l.s4 1983009808
    %v1167 = vunpack.c.0.s8 %v1166
    %v1168 = vlaneseq
    %v1169 = vshrl.u32 %v1168, 7
    %v1170 = vsub.s32 %v1167, %v1169
    %v1171 = vrot.slane %v1157, %v1170
    %v1172 = vcombine.low %v1164, %v1171
    %v1173 = vcombine.low %v874, %v881
    %v1174 = vcombine.low %v888, %v895
    %v1176 = vunpack.c.l.s4 1983009808
    %v1177 = vunpack.c.0.s8 %v1176
    %v1178 = vlaneseq
    %v1179 = vshrl.u32 %v1178, 7
    %v1180 = vsub.s32 %v1177, %v1179
    %v1181 = vrot.slane %v1173, %v1180
    %v1183 = vunpack.c.l.s4 1983009808
    %v1184 = vunpack.c.0.s8 %v1183
    %v1185 = vlaneseq
    %v1186 = vshrl.u32 %v1185, 7
    %v1187 = vsub.s32 %v1184, %v1186
    %v1188 = vrot.slane %v1174, %v1187
    %v1189 = vcombine.low %v1181, %v1188
    %v1190 = vcombine.low %v902, %v909
    %v1191 = vcombine.low %v916, %v923
    %v1193 = vunpack.c.l.s4 1983009808
    %v1194 = vunpack.c.0.s8 %v1193
    %v1195 = vlaneseq
    %v1196 = vshrl.u32 %v1195, 7
    %v1197 = vsub.s32 %v1194, %v1196
    %v1198 = vrot.slane %v1190, %v1197
    %v1200 = vunpack.c.l.s4 1983009808
    %v1201 = vunpack.c.0.s8 %v1200
    %v1202 = vlaneseq
    %v1203 = vshrl.u32 %v1202, 7
    %v1204 = vsub.s32 %v1201, %v1203
    %v1205 = vrot.slane %v1191, %v1204
    %v1206 = vcombine.low %v1198, %v1205
    %v1207 = vcombine.low %v930, %v937
    %v1208 = vcombine.low %v944, %v951
    %v1210 = vunpack.c.l.s4 1983009808
    %v1211 = vunpack.c.0.s8 %v1210
    %v1212 = vlaneseq
    %v1213 = vshrl.u32 %v1212, 7
    %v1214 = vsub.s32 %v1211, %v1213
    %v1215 = vrot.slane %v1207, %v1214
    %v1217 = vunpack.c.l.s4 1983009808
    %v1218 = vunpack.c.0.s8 %v1217
    %v1219 = vlaneseq
    %v1220 = vshrl.u32 %v1219, 7
    %v1221 = vsub.s32 %v1218, %v1220
    %v1222 = vrot.slane %v1208, %v1221
    %v1223 = vcombine.low %v1215, %v1222
    %1224 = vset.pattern.permute.xlu0 0
    %1225 = vperm.xlu0 %1224, %v968
    %v1226 = vpop.permute.xlu0 %1225
    %1227 = vset.pattern.permute.xlu0 0
    %1228 = vperm.xlu0 %1227, %v985
    %v1229 = vpop.permute.xlu0 %1228
    %1230 = vset.pattern.permute.xlu0 0
    %1231 = vperm.xlu0 %1230, %v1002
    %v1232 = vpop.permute.xlu0 %1231
    %1233 = vset.pattern.permute.xlu0 0
    %1234 = vperm.xlu0 %1233, %v1019
    %v1235 = vpop.permute.xlu0 %1234
    %1236 = vset.pattern.permute.xlu0 0
    %1237 = vperm.xlu0 %1236, %v1036
    %v1238 = vpop.permute.xlu0 %1237
    %1239 = vset.pattern.permute.xlu0 0
    %1240 = vperm.xlu0 %1239, %v1053
    %v1241 = vpop.permute.xlu0 %1240
    %1242 = vset.pattern.permute.xlu0 0
    %1243 = vperm.xlu0 %1242, %v1070
    %v1244 = vpop.permute.xlu0 %1243
    %1245 = vset.pattern.permute.xlu0 0
    %1246 = vperm.xlu0 %1245, %v1087
    %v1247 = vpop.permute.xlu0 %1246
    %1248 = vset.pattern.permute.xlu0 0
    %1249 = vperm.xlu0 %1248, %v1104
    %v1250 = vpop.permute.xlu0 %1249
    %1251 = vset.pattern.permute.xlu0 0
    %1252 = vperm.xlu0 %1251, %v1121
    %v1253 = vpop.permute.xlu0 %1252
    %1254 = vset.pattern.permute.xlu0 0
    %1255 = vperm.xlu0 %1254, %v1138
    %v1256 = vpop.permute.xlu0 %1255
    %1257 = vset.pattern.permute.xlu0 0
    %1258 = vperm.xlu0 %1257, %v1155
    %v1259 = vpop.permute.xlu0 %1258
    %1260 = vset.pattern.permute.xlu0 0
    %1261 = vperm.xlu0 %1260, %v1172
    %v1262 = vpop.permute.xlu0 %1261
    %1263 = vset.pattern.permute.xlu0 0
    %1264 = vperm.xlu0 %1263, %v1189
    %v1265 = vpop.permute.xlu0 %1264
    %1266 = vset.pattern.permute.xlu0 0
    %1267 = vperm.xlu0 %1266, %v1206
    %v1268 = vpop.permute.xlu0 %1267
    %1269 = vset.pattern.permute.xlu0 0
    %1270 = vperm.xlu0 %1269, %v1223
    %v1271 = vpop.permute.xlu0 %1270
    %v1272 = vlaneseq
    %v1273 = vand.u32 %v1272, 127
    %v1274 = vlaneseq
    %v1275 = vshrl.u32 %v1274, 7
    %v1276 = vsub.s32 %v1273, %v1275
    %v1277 = vrot.slane %v1226, %v1276
    %v1278 = vadd.s32 %v1273, 4294967288
    %v1279 = vlaneseq
    %v1280 = vshrl.u32 %v1279, 7
    %v1281 = vsub.s32 %v1278, %v1280
    %v1282 = vrot.slane %v1229, %v1281
    %vm1283 = vcmask 130112
    %v1284 = vsel %vm1283, %v1282, %v1277
    %v1285 = vadd.s32 %v1273, 4294967280
    %v1286 = vlaneseq
    %v1287 = vshrl.u32 %v1286, 7
    %v1288 = vsub.s32 %v1285, %v1287
    %v1289 = vrot.slane %v1232, %v1288
    %vm1290 = vcmask 195712
    %v1291 = vsel %vm1290, %v1289, %v1284
    %v1292 = vadd.s32 %v1273, 4294967272
    %v1293 = vlaneseq
    %v1294 = vshrl.u32 %v1293, 7
    %v1295 = vsub.s32 %v1292, %v1294
    %v1296 = vrot.slane %v1235, %v1295
    %vm1297 = vcmask 261312
    %v1298 = vsel %vm1297, %v1296, %v1291
    %v1299 = vadd.s32 %v1273, 4294967264
    %v1300 = vlaneseq
    %v1301 = vshrl.u32 %v1300, 7
    %v1302 = vsub.s32 %v1299, %v1301
    %v1303 = vrot.slane %v1238, %v1302
    %vm1304 = vcmask 326912
    %v1305 = vsel %vm1304, %v1303, %v1298
    %v1306 = vadd.s32 %v1273, 4294967256
    %v1307 = vlaneseq
    %v1308 = vshrl.u32 %v1307, 7
    %v1309 = vsub.s32 %v1306, %v1308
    %v1310 = vrot.slane %v1241, %v1309
    %vm1311 = vcmask 392512
    %v1312 = vsel %vm1311, %v1310, %v1305
    %v1313 = vadd.s32 %v1273, 4294967248
    %v1314 = vlaneseq
    %v1315 = vshrl.u32 %v1314, 7
    %v1316 = vsub.s32 %v1313, %v1315
    %v1317 = vrot.slane %v1244, %v1316
    %vm1318 = vcmask 458112
    %v1319 = vsel %vm1318, %v1317, %v1312
    %v1320 = vadd.s32 %v1273, 4294967240
    %v1321 = vlaneseq
    %v1322 = vshrl.u32 %v1321, 7
    %v1323 = vsub.s32 %v1320, %v1322
    %v1324 = vrot.slane %v1247, %v1323
    %vm1325 = vcmask 523712
    %v1326 = vsel %vm1325, %v1324, %v1319
    %v1327 = vlaneseq
    %v1328 = vshrl.u32 %v1327, 7
    %v1329 = vsub.s32 %v1273, %v1328
    %v1330 = vrot.slane %v1250, %v1329
    %v1331 = vlaneseq
    %v1332 = vshrl.u32 %v1331, 7
    %v1333 = vsub.s32 %v1278, %v1332
    %v1334 = vrot.slane %v1253, %v1333
    %v1335 = vsel %vm1283, %v1334, %v1330
    %v1336 = vlaneseq
    %v1337 = vshrl.u32 %v1336, 7
    %v1338 = vsub.s32 %v1285, %v1337
    %v1339 = vrot.slane %v1256, %v1338
    %v1340 = vsel %vm1290, %v1339, %v1335
    %v1341 = vlaneseq
    %v1342 = vshrl.u32 %v1341, 7
    %v1343 = vsub.s32 %v1292, %v1342
    %v1344 = vrot.slane %v1259, %v1343
    %v1345 = vsel %vm1297, %v1344, %v1340
    %v1346 = vlaneseq
    %v1347 = vshrl.u32 %v1346, 7
    %v1348 = vsub.s32 %v1299, %v1347
    %v1349 = vrot.slane %v1262, %v1348
    %v1350 = vsel %vm1304, %v1349, %v1345
    %v1351 = vlaneseq
    %v1352 = vshrl.u32 %v1351, 7
    %v1353 = vsub.s32 %v1306, %v1352
    %v1354 = vrot.slane %v1265, %v1353
    %v1355 = vsel %vm1311, %v1354, %v1350
    %v1356 = vlaneseq
    %v1357 = vshrl.u32 %v1356, 7
    %v1358 = vsub.s32 %v1313, %v1357
    %v1359 = vrot.slane %v1268, %v1358
    %v1360 = vsel %vm1318, %v1359, %v1355
    %v1361 = vlaneseq
    %v1362 = vshrl.u32 %v1361, 7
    %v1363 = vsub.s32 %v1320, %v1362
    %v1364 = vrot.slane %v1271, %v1363
    %v1365 = vsel %vm1325, %v1364, %v1360
    %vm1366 = vcmask 1041409
    %v1367 = vsel %vm1366, %v1365, %v1326
    %v1369 = vunpack.c.l.s4 1983009808
    %v1370 = vunpack.c.0.s8 %v1369
    %v1371 = vlaneseq
    %v1372 = vshrl.u32 %v1371, 7
    %v1373 = vsub.s32 %v1370, %v1372
    %v1374 = vrot.slane %v1367, %v1373
    %vm1376 = vcmask 517120
    %1377 = vst.msk [vmem:[#allocation2] sm:$0x3] %vm1376, %v1374
    %s1378 = sld [smem:[#allocation3 + $0x1]]
    %s1379 = sand.u32 2147483647, %s1378
    %s1380 = scalar_lea.vmem %s2, 128
    %v1381 = vld [vmem:[%s1380] sm:$0xff]
    %v1382 = vld [vmem:[%s1380 + $0x8] sm:$0xff]
    %v1383 = vld [vmem:[%s1380 + $0x10] sm:$0xff]
    %v1384 = vld [vmem:[%s1380 + $0x18] sm:$0xff]
    %v1385 = vld [vmem:[%s1380 + $0x20] sm:$0xff]
    %v1386 = vld [vmem:[%s1380 + $0x28] sm:$0xff]
    %v1387 = vld [vmem:[%s1380 + $0x30] sm:$0xff]
    %v1388 = vld [vmem:[%s1380 + $0x38] sm:$0xff]
    %s1389 = scalar_lea.vmem %s2, 192
    %v1390 = vld [vmem:[%s1389] sm:$0xff]
    %v1391 = vld [vmem:[%s1389 + $0x8] sm:$0xff]
    %v1392 = vld [vmem:[%s1389 + $0x10] sm:$0xff]
    %v1393 = vld [vmem:[%s1389 + $0x18] sm:$0xff]
    %v1394 = vld [vmem:[%s1389 + $0x20] sm:$0xff]
    %v1395 = vld [vmem:[%s1389 + $0x28] sm:$0xff]
    %v1396 = vld [vmem:[%s1389 + $0x30] sm:$0xff]
    %v1397 = vld [vmem:[%s1389 + $0x38] sm:$0xff]
    %s1398 = scalar_lea.vmem %s1, 4
    %v1399 = vld [vmem:[%s1398] sm:$0x3]
    %v1402 = vunpack.c.l.s4 1966171168
    %v1403 = vunpack.c.0.s8 %v1402
    %v1404 = vlaneseq
    %v1405 = vshrl.u32 %v1404, 7
    %v1406 = vsub.s32 %v1403, %v1405
    %v1407 = vrot.slane %v1399, %v1406
    %v1408 = vcombine.high %v1407, %v1407
    %v1410 = vunpack.c.l.s4 1966171168
    %v1411 = vunpack.c.0.s8 %v1410
    %v1412 = vlaneseq
    %v1413 = vshrl.u32 %v1412, 7
    %v1414 = vsub.s32 %v1411, %v1413
    %v1415 = vrot.slane %v1407, %v1414
    %v1417 = vunpack.c.l.s4 1966171168
    %v1418 = vunpack.c.0.s8 %v1417
    %v1419 = vlaneseq
    %v1420 = vshrl.u32 %v1419, 7
    %v1421 = vsub.s32 %v1418, %v1420
    %v1422 = vrot.slane %v1408, %v1421
    %v1423 = vlaneseq
    %v1424 = vshrl.u32 %v1423, 7
    %v1425 = vsub.s32 0, %v1424
    %v1426 = vrot.slane %v1415, %v1425
    %v1427 = vlaneseq
    %v1428 = vshrl.u32 %v1427, 7
    %v1429 = vsub.s32 0, %v1428
    %v1430 = vrot.slane %v1422, %v1429
    %1434 = vset.pattern.permute.xlu0 0
    %1435 = vperm.xlu0 %1434, %v1381
    %v1436 = vpop.permute.xlu0 %1435
    %1439 = vset.pattern.permute.xlu0 0
    %1440 = vperm.xlu0 %1439, %v1382
    %v1441 = vpop.permute.xlu0 %1440
    %1444 = vset.pattern.permute.xlu0 0
    %1445 = vperm.xlu0 %1444, %v1383
    %v1446 = vpop.permute.xlu0 %1445
    %1449 = vset.pattern.permute.xlu0 0
    %1450 = vperm.xlu0 %1449, %v1384
    %v1451 = vpop.permute.xlu0 %1450
    %1454 = vset.pattern.permute.xlu0 0
    %1455 = vperm.xlu0 %1454, %v1385
    %v1456 = vpop.permute.xlu0 %1455
    %1459 = vset.pattern.permute.xlu0 0
    %1460 = vperm.xlu0 %1459, %v1386
    %v1461 = vpop.permute.xlu0 %1460
    %1464 = vset.pattern.permute.xlu0 0
    %1465 = vperm.xlu0 %1464, %v1387
    %v1466 = vpop.permute.xlu0 %1465
    %1469 = vset.pattern.permute.xlu0 0
    %1470 = vperm.xlu0 %1469, %v1388
    %v1471 = vpop.permute.xlu0 %1470
    %v1473 = vsub.f32 %v1426, %v1436
    %v1474 = vsub.f32 %v1426, %v1441
    %v1475 = vsub.f32 %v1426, %v1446
    %v1476 = vsub.f32 %v1426, %v1451
    %v1477 = vsub.f32 %v1426, %v1456
    %v1478 = vsub.f32 %v1426, %v1461
    %v1479 = vsub.f32 %v1426, %v1466
    %v1480 = vsub.f32 %v1426, %v1471
    %v1481 = vsub.f32 %v1430, %v1436
    %v1482 = vsub.f32 %v1430, %v1441
    %v1483 = vsub.f32 %v1430, %v1446
    %v1484 = vsub.f32 %v1430, %v1451
    %v1485 = vsub.f32 %v1430, %v1456
    %v1486 = vsub.f32 %v1430, %v1461
    %v1487 = vsub.f32 %v1430, %v1466
    %v1488 = vsub.f32 %v1430, %v1471
    %v1489 = vand.u32 2147483647, %v1473
    %v1490 = vand.u32 2147483647, %v1474
    %v1491 = vand.u32 2147483647, %v1475
    %v1492 = vand.u32 2147483647, %v1476
    %v1493 = vand.u32 2147483647, %v1477
    %v1494 = vand.u32 2147483647, %v1478
    %v1495 = vand.u32 2147483647, %v1479
    %v1496 = vand.u32 2147483647, %v1480
    %v1497 = vand.u32 2147483647, %v1481
    %v1498 = vand.u32 2147483647, %v1482
    %v1499 = vand.u32 2147483647, %v1483
    %v1500 = vand.u32 2147483647, %v1484
    %v1501 = vand.u32 2147483647, %v1485
    %v1502 = vand.u32 2147483647, %v1486
    %v1503 = vand.u32 2147483647, %v1487
    %v1504 = vand.u32 2147483647, %v1488
    %s1505 = scalar_lea.vmem %s1, 6
    %v1506 = vld [vmem:[%s1505] sm:$0x3]
    %v1509 = vunpack.c.l.s4 1966171168
    %v1510 = vunpack.c.0.s8 %v1509
    %v1511 = vlaneseq
    %v1512 = vshrl.u32 %v1511, 7
    %v1513 = vsub.s32 %v1510, %v1512
    %v1514 = vrot.slane %v1506, %v1513
    %v1515 = vcombine.high %v1514, %v1514
    %v1517 = vunpack.c.l.s4 1966171168
    %v1518 = vunpack.c.0.s8 %v1517
    %v1519 = vlaneseq
    %v1520 = vshrl.u32 %v1519, 7
    %v1521 = vsub.s32 %v1518, %v1520
    %v1522 = vrot.slane %v1514, %v1521
    %v1524 = vunpack.c.l.s4 1966171168
    %v1525 = vunpack.c.0.s8 %v1524
    %v1526 = vlaneseq
    %v1527 = vshrl.u32 %v1526, 7
    %v1528 = vsub.s32 %v1525, %v1527
    %v1529 = vrot.slane %v1515, %v1528
    %v1530 = vlaneseq
    %v1531 = vshrl.u32 %v1530, 7
    %v1532 = vsub.s32 0, %v1531
    %v1533 = vrot.slane %v1522, %v1532
    %v1534 = vlaneseq
    %v1535 = vshrl.u32 %v1534, 7
    %v1536 = vsub.s32 0, %v1535
    %v1537 = vrot.slane %v1529, %v1536
    %1541 = vset.pattern.permute.xlu0 0
    %1542 = vperm.xlu0 %1541, %v1390
    %v1543 = vpop.permute.xlu0 %1542
    %1546 = vset.pattern.permute.xlu0 0
    %1547 = vperm.xlu0 %1546, %v1391
    %v1548 = vpop.permute.xlu0 %1547
    %1551 = vset.pattern.permute.xlu0 0
    %1552 = vperm.xlu0 %1551, %v1392
    %v1553 = vpop.permute.xlu0 %1552
    %1556 = vset.pattern.permute.xlu0 0
    %1557 = vperm.xlu0 %1556, %v1393
    %v1558 = vpop.permute.xlu0 %1557
    %1561 = vset.pattern.permute.xlu0 0
    %1562 = vperm.xlu0 %1561, %v1394
    %v1563 = vpop.permute.xlu0 %1562
    %1566 = vset.pattern.permute.xlu0 0
    %1567 = vperm.xlu0 %1566, %v1395
    %v1568 = vpop.permute.xlu0 %1567
    %1571 = vset.pattern.permute.xlu0 0
    %1572 = vperm.xlu0 %1571, %v1396
    %v1573 = vpop.permute.xlu0 %1572
    %1576 = vset.pattern.permute.xlu0 0
    %1577 = vperm.xlu0 %1576, %v1397
    %v1578 = vpop.permute.xlu0 %1577
    %v1580 = vsub.f32 %v1533, %v1543
    %v1581 = vsub.f32 %v1533, %v1548
    %v1582 = vsub.f32 %v1533, %v1553
    %v1583 = vsub.f32 %v1533, %v1558
    %v1584 = vsub.f32 %v1533, %v1563
    %v1585 = vsub.f32 %v1533, %v1568
    %v1586 = vsub.f32 %v1533, %v1573
    %v1587 = vsub.f32 %v1533, %v1578
    %v1588 = vsub.f32 %v1537, %v1543
    %v1589 = vsub.f32 %v1537, %v1548
    %v1590 = vsub.f32 %v1537, %v1553
    %v1591 = vsub.f32 %v1537, %v1558
    %v1592 = vsub.f32 %v1537, %v1563
    %v1593 = vsub.f32 %v1537, %v1568
    %v1594 = vsub.f32 %v1537, %v1573
    %v1595 = vsub.f32 %v1537, %v1578
    %v1596 = vand.u32 2147483647, %v1580
    %v1597 = vand.u32 2147483647, %v1581
    %v1598 = vand.u32 2147483647, %v1582
    %v1599 = vand.u32 2147483647, %v1583
    %v1600 = vand.u32 2147483647, %v1584
    %v1601 = vand.u32 2147483647, %v1585
    %v1602 = vand.u32 2147483647, %v1586
    %v1603 = vand.u32 2147483647, %v1587
    %v1604 = vand.u32 2147483647, %v1588
    %v1605 = vand.u32 2147483647, %v1589
    %v1606 = vand.u32 2147483647, %v1590
    %v1607 = vand.u32 2147483647, %v1591
    %v1608 = vand.u32 2147483647, %v1592
    %v1609 = vand.u32 2147483647, %v1593
    %v1610 = vand.u32 2147483647, %v1594
    %v1611 = vand.u32 2147483647, %v1595
    %v1612 = vadd.f32 %v1489, %v1596
    %v1613 = vadd.f32 %v1490, %v1597
    %v1614 = vadd.f32 %v1491, %v1598
    %v1615 = vadd.f32 %v1492, %v1599
    %v1616 = vadd.f32 %v1493, %v1600
    %v1617 = vadd.f32 %v1494, %v1601
    %v1618 = vadd.f32 %v1495, %v1602
    %v1619 = vadd.f32 %v1496, %v1603
    %v1620 = vadd.f32 %v1497, %v1604
    %v1621 = vadd.f32 %v1498, %v1605
    %v1622 = vadd.f32 %v1499, %v1606
    %v1623 = vadd.f32 %v1500, %v1607
    %v1624 = vadd.f32 %v1501, %v1608
    %v1625 = vadd.f32 %v1502, %v1609
    %v1626 = vadd.f32 %v1503, %v1610
    %v1627 = vadd.f32 %v1504, %v1611
    %v1628 = vstv %s1379
    %v1629 = vsub.f32 %v1628, %v1612
    %v1630 = vsub.f32 %v1628, %v1613
    %v1631 = vsub.f32 %v1628, %v1614
    %v1632 = vsub.f32 %v1628, %v1615
    %v1633 = vsub.f32 %v1628, %v1616
    %v1634 = vsub.f32 %v1628, %v1617
    %v1635 = vsub.f32 %v1628, %v1618
    %v1636 = vsub.f32 %v1628, %v1619
    %v1637 = vsub.f32 %v1628, %v1620
    %v1638 = vsub.f32 %v1628, %v1621
    %v1639 = vsub.f32 %v1628, %v1622
    %v1640 = vsub.f32 %v1628, %v1623
    %v1641 = vsub.f32 %v1628, %v1624
    %v1642 = vsub.f32 %v1628, %v1625
    %v1643 = vsub.f32 %v1628, %v1626
    %v1644 = vsub.f32 %v1628, %v1627
    %v1645 = vand.u32 2147483647, %v1629
    %v1646 = vand.u32 2147483647, %v1630
    %v1647 = vand.u32 2147483647, %v1631
    %v1648 = vand.u32 2147483647, %v1632
    %v1649 = vand.u32 2147483647, %v1633
    %v1650 = vand.u32 2147483647, %v1634
    %v1651 = vand.u32 2147483647, %v1635
    %v1652 = vand.u32 2147483647, %v1636
    %v1653 = vand.u32 2147483647, %v1637
    %v1654 = vand.u32 2147483647, %v1638
    %v1655 = vand.u32 2147483647, %v1639
    %v1656 = vand.u32 2147483647, %v1640
    %v1657 = vand.u32 2147483647, %v1641
    %v1658 = vand.u32 2147483647, %v1642
    %v1659 = vand.u32 2147483647, %v1643
    %v1660 = vand.u32 2147483647, %v1644
    %v1661 = vadd.f32 %v1612, 1.0
    %v1662 = vadd.f32 %v1613, 1.0
    %v1663 = vadd.f32 %v1614, 1.0
    %v1664 = vadd.f32 %v1615, 1.0
    %v1665 = vadd.f32 %v1616, 1.0
    %v1666 = vadd.f32 %v1617, 1.0
    %v1667 = vadd.f32 %v1618, 1.0
    %v1668 = vadd.f32 %v1619, 1.0
    %v1669 = vadd.f32 %v1620, 1.0
    %v1670 = vadd.f32 %v1621, 1.0
    %v1671 = vadd.f32 %v1622, 1.0
    %v1672 = vadd.f32 %v1623, 1.0
    %v1673 = vadd.f32 %v1624, 1.0
    %v1674 = vadd.f32 %v1625, 1.0
    %v1675 = vadd.f32 %v1626, 1.0
    %v1676 = vadd.f32 %v1627, 1.0
    %v1677 = vadd.f32 %v1645, 1.0
    %v1678 = vadd.f32 %v1646, 1.0
    %v1679 = vadd.f32 %v1647, 1.0
    %v1680 = vadd.f32 %v1648, 1.0
    %v1681 = vadd.f32 %v1649, 1.0
    %v1682 = vadd.f32 %v1650, 1.0
    %v1683 = vadd.f32 %v1651, 1.0
    %v1684 = vadd.f32 %v1652, 1.0
    %v1685 = vadd.f32 %v1653, 1.0
    %v1686 = vadd.f32 %v1654, 1.0
    %v1687 = vadd.f32 %v1655, 1.0
    %v1688 = vadd.f32 %v1656, 1.0
    %v1689 = vadd.f32 %v1657, 1.0
    %v1690 = vadd.f32 %v1658, 1.0
    %v1691 = vadd.f32 %v1659, 1.0
    %v1692 = vadd.f32 %v1660, 1.0
    %v1693 = vmul.f32 %v1661, %v1677
    %v1694 = vmul.f32 %v1662, %v1678
    %v1695 = vmul.f32 %v1663, %v1679
    %v1696 = vmul.f32 %v1664, %v1680
    %v1697 = vmul.f32 %v1665, %v1681
    %v1698 = vmul.f32 %v1666, %v1682
    %v1699 = vmul.f32 %v1667, %v1683
    %v1700 = vmul.f32 %v1668, %v1684
    %v1701 = vmul.f32 %v1669, %v1685
    %v1702 = vmul.f32 %v1670, %v1686
    %v1703 = vmul.f32 %v1671, %v1687
    %v1704 = vmul.f32 %v1672, %v1688
    %v1705 = vmul.f32 %v1673, %v1689
    %v1706 = vmul.f32 %v1674, %v1690
    %v1707 = vmul.f32 %v1675, %v1691
    %v1708 = vmul.f32 %v1676, %v1692
    %v1709 = vsub.f32 %v1645, %v1612
    %v1710 = vsub.f32 %v1646, %v1613
    %v1711 = vsub.f32 %v1647, %v1614
    %v1712 = vsub.f32 %v1648, %v1615
    %v1713 = vsub.f32 %v1649, %v1616
    %v1714 = vsub.f32 %v1650, %v1617
    %v1715 = vsub.f32 %v1651, %v1618
    %v1716 = vsub.f32 %v1652, %v1619
    %v1717 = vsub.f32 %v1653, %v1620
    %v1718 = vsub.f32 %v1654, %v1621
    %v1719 = vsub.f32 %v1655, %v1622
    %v1720 = vsub.f32 %v1656, %v1623
    %v1721 = vsub.f32 %v1657, %v1624
    %v1722 = vsub.f32 %v1658, %v1625
    %v1723 = vsub.f32 %v1659, %v1626
    %v1724 = vsub.f32 %v1660, %v1627
    %v1725 = vrcp.pop %v1693
    %v1726 = vmul.f32 %v1709, %v1725
    %v1727 = vrcp.pop %v1694
    %v1728 = vmul.f32 %v1710, %v1727
    %v1729 = vrcp.pop %v1695
    %v1730 = vmul.f32 %v1711, %v1729
    %v1731 = vrcp.pop %v1696
    %v1732 = vmul.f32 %v1712, %v1731
    %v1733 = vrcp.pop %v1697
    %v1734 = vmul.f32 %v1713, %v1733
    %v1735 = vrcp.pop %v1698
    %v1736 = vmul.f32 %v1714, %v1735
    %v1737 = vrcp.pop %v1699
    %v1738 = vmul.f32 %v1715, %v1737
    %v1739 = vrcp.pop %v1700
    %v1740 = vmul.f32 %v1716, %v1739
    %v1741 = vrcp.pop %v1701
    %v1742 = vmul.f32 %v1717, %v1741
    %v1743 = vrcp.pop %v1702
    %v1744 = vmul.f32 %v1718, %v1743
    %v1745 = vrcp.pop %v1703
    %v1746 = vmul.f32 %v1719, %v1745
    %v1747 = vrcp.pop %v1704
    %v1748 = vmul.f32 %v1720, %v1747
    %v1749 = vrcp.pop %v1705
    %v1750 = vmul.f32 %v1721, %v1749
    %v1751 = vrcp.pop %v1706
    %v1752 = vmul.f32 %v1722, %v1751
    %v1753 = vrcp.pop %v1707
    %v1754 = vmul.f32 %v1723, %v1753
    %v1755 = vrcp.pop %v1708
    %v1756 = vmul.f32 %v1724, %v1755
    %v1757 = vsel %vm423, %v1726, 0.0
    %1758 = vadd.xlane.f32.xlu0 %v1757
    %v1759 = vpop.xlane.xlu0 %1758
    %v1760 = vsel %vm423, %v1728, 0.0
    %1761 = vadd.xlane.f32.xlu0 %v1760
    %v1762 = vpop.xlane.xlu0 %1761
    %v1763 = vsel %vm423, %v1730, 0.0
    %1764 = vadd.xlane.f32.xlu0 %v1763
    %v1765 = vpop.xlane.xlu0 %1764
    %v1766 = vsel %vm423, %v1732, 0.0
    %1767 = vadd.xlane.f32.xlu0 %v1766
    %v1768 = vpop.xlane.xlu0 %1767
    %v1769 = vsel %vm423, %v1734, 0.0
    %1770 = vadd.xlane.f32.xlu0 %v1769
    %v1771 = vpop.xlane.xlu0 %1770
    %v1772 = vsel %vm423, %v1736, 0.0
    %1773 = vadd.xlane.f32.xlu0 %v1772
    %v1774 = vpop.xlane.xlu0 %1773
    %v1775 = vsel %vm423, %v1738, 0.0
    %1776 = vadd.xlane.f32.xlu0 %v1775
    %v1777 = vpop.xlane.xlu0 %1776
    %v1778 = vsel %vm423, %v1740, 0.0
    %1779 = vadd.xlane.f32.xlu0 %v1778
    %v1780 = vpop.xlane.xlu0 %1779
    %v1781 = vsel %vm423, %v1742, 0.0
    %1782 = vadd.xlane.f32.xlu0 %v1781
    %v1783 = vpop.xlane.xlu0 %1782
    %v1784 = vsel %vm423, %v1744, 0.0
    %1785 = vadd.xlane.f32.xlu0 %v1784
    %v1786 = vpop.xlane.xlu0 %1785
    %v1787 = vsel %vm423, %v1746, 0.0
    %1788 = vadd.xlane.f32.xlu0 %v1787
    %v1789 = vpop.xlane.xlu0 %1788
    %v1790 = vsel %vm423, %v1748, 0.0
    %1791 = vadd.xlane.f32.xlu0 %v1790
    %v1792 = vpop.xlane.xlu0 %1791
    %v1793 = vsel %vm423, %v1750, 0.0
    %1794 = vadd.xlane.f32.xlu0 %v1793
    %v1795 = vpop.xlane.xlu0 %1794
    %v1796 = vsel %vm423, %v1752, 0.0
    %1797 = vadd.xlane.f32.xlu0 %v1796
    %v1798 = vpop.xlane.xlu0 %1797
    %v1799 = vsel %vm423, %v1754, 0.0
    %1800 = vadd.xlane.f32.xlu0 %v1799
    %v1801 = vpop.xlane.xlu0 %1800
    %v1802 = vsel %vm423, %v1756, 0.0
    %1803 = vadd.xlane.f32.xlu0 %v1802
    %v1804 = vpop.xlane.xlu0 %1803
    %v1805 = vadd.f32 %v1759, 0.0
    %v1806 = vadd.f32 %v1762, 0.0
    %v1807 = vadd.f32 %v1765, 0.0
    %v1808 = vadd.f32 %v1768, 0.0
    %v1809 = vadd.f32 %v1771, 0.0
    %v1810 = vadd.f32 %v1774, 0.0
    %v1811 = vadd.f32 %v1777, 0.0
    %v1812 = vadd.f32 %v1780, 0.0
    %v1813 = vadd.f32 %v1783, 0.0
    %v1814 = vadd.f32 %v1786, 0.0
    %v1815 = vadd.f32 %v1789, 0.0
    %v1816 = vadd.f32 %v1792, 0.0
    %v1817 = vadd.f32 %v1795, 0.0
    %v1818 = vadd.f32 %v1798, 0.0
    %v1819 = vadd.f32 %v1801, 0.0
    %v1820 = vadd.f32 %v1804, 0.0
    %v1838 = vunpack.c.l.s4 269488144
    %v1839 = vunpack.c.0.s8 %v1838
    %v1840 = vlaneseq
    %v1841 = vshrl.u32 %v1840, 7
    %v1842 = vsub.s32 %v1839, %v1841
    %v1843 = vrot.slane %v1805, %v1842
    %v1845 = vunpack.c.l.s4 842150450
    %v1846 = vunpack.c.0.s8 %v1845
    %v1847 = vlaneseq
    %v1848 = vshrl.u32 %v1847, 7
    %v1849 = vsub.s32 %v1846, %v1848
    %v1850 = vrot.slane %v1805, %v1849
    %v1852 = vunpack.c.l.s4 1414812756
    %v1853 = vunpack.c.0.s8 %v1852
    %v1854 = vlaneseq
    %v1855 = vshrl.u32 %v1854, 7
    %v1856 = vsub.s32 %v1853, %v1855
    %v1857 = vrot.slane %v1805, %v1856
    %v1859 = vunpack.c.l.s4 1987475062
    %v1860 = vunpack.c.0.s8 %v1859
    %v1861 = vlaneseq
    %v1862 = vshrl.u32 %v1861, 7
    %v1863 = vsub.s32 %v1860, %v1862
    %v1864 = vrot.slane %v1805, %v1863
    %v1866 = vunpack.c.l.s4 269488144
    %v1867 = vunpack.c.0.s8 %v1866
    %v1868 = vlaneseq
    %v1869 = vshrl.u32 %v1868, 7
    %v1870 = vsub.s32 %v1867, %v1869
    %v1871 = vrot.slane %v1806, %v1870
    %v1873 = vunpack.c.l.s4 842150450
    %v1874 = vunpack.c.0.s8 %v1873
    %v1875 = vlaneseq
    %v1876 = vshrl.u32 %v1875, 7
    %v1877 = vsub.s32 %v1874, %v1876
    %v1878 = vrot.slane %v1806, %v1877
    %v1880 = vunpack.c.l.s4 1414812756
    %v1881 = vunpack.c.0.s8 %v1880
    %v1882 = vlaneseq
    %v1883 = vshrl.u32 %v1882, 7
    %v1884 = vsub.s32 %v1881, %v1883
    %v1885 = vrot.slane %v1806, %v1884
    %v1887 = vunpack.c.l.s4 1987475062
    %v1888 = vunpack.c.0.s8 %v1887
    %v1889 = vlaneseq
    %v1890 = vshrl.u32 %v1889, 7
    %v1891 = vsub.s32 %v1888, %v1890
    %v1892 = vrot.slane %v1806, %v1891
    %v1894 = vunpack.c.l.s4 269488144
    %v1895 = vunpack.c.0.s8 %v1894
    %v1896 = vlaneseq
    %v1897 = vshrl.u32 %v1896, 7
    %v1898 = vsub.s32 %v1895, %v1897
    %v1899 = vrot.slane %v1807, %v1898
    %v1901 = vunpack.c.l.s4 842150450
    %v1902 = vunpack.c.0.s8 %v1901
    %v1903 = vlaneseq
    %v1904 = vshrl.u32 %v1903, 7
    %v1905 = vsub.s32 %v1902, %v1904
    %v1906 = vrot.slane %v1807, %v1905
    %v1908 = vunpack.c.l.s4 1414812756
    %v1909 = vunpack.c.0.s8 %v1908
    %v1910 = vlaneseq
    %v1911 = vshrl.u32 %v1910, 7
    %v1912 = vsub.s32 %v1909, %v1911
    %v1913 = vrot.slane %v1807, %v1912
    %v1915 = vunpack.c.l.s4 1987475062
    %v1916 = vunpack.c.0.s8 %v1915
    %v1917 = vlaneseq
    %v1918 = vshrl.u32 %v1917, 7
    %v1919 = vsub.s32 %v1916, %v1918
    %v1920 = vrot.slane %v1807, %v1919
    %v1922 = vunpack.c.l.s4 269488144
    %v1923 = vunpack.c.0.s8 %v1922
    %v1924 = vlaneseq
    %v1925 = vshrl.u32 %v1924, 7
    %v1926 = vsub.s32 %v1923, %v1925
    %v1927 = vrot.slane %v1808, %v1926
    %v1929 = vunpack.c.l.s4 842150450
    %v1930 = vunpack.c.0.s8 %v1929
    %v1931 = vlaneseq
    %v1932 = vshrl.u32 %v1931, 7
    %v1933 = vsub.s32 %v1930, %v1932
    %v1934 = vrot.slane %v1808, %v1933
    %v1936 = vunpack.c.l.s4 1414812756
    %v1937 = vunpack.c.0.s8 %v1936
    %v1938 = vlaneseq
    %v1939 = vshrl.u32 %v1938, 7
    %v1940 = vsub.s32 %v1937, %v1939
    %v1941 = vrot.slane %v1808, %v1940
    %v1943 = vunpack.c.l.s4 1987475062
    %v1944 = vunpack.c.0.s8 %v1943
    %v1945 = vlaneseq
    %v1946 = vshrl.u32 %v1945, 7
    %v1947 = vsub.s32 %v1944, %v1946
    %v1948 = vrot.slane %v1808, %v1947
    %v1950 = vunpack.c.l.s4 269488144
    %v1951 = vunpack.c.0.s8 %v1950
    %v1952 = vlaneseq
    %v1953 = vshrl.u32 %v1952, 7
    %v1954 = vsub.s32 %v1951, %v1953
    %v1955 = vrot.slane %v1809, %v1954
    %v1957 = vunpack.c.l.s4 842150450
    %v1958 = vunpack.c.0.s8 %v1957
    %v1959 = vlaneseq
    %v1960 = vshrl.u32 %v1959, 7
    %v1961 = vsub.s32 %v1958, %v1960
    %v1962 = vrot.slane %v1809, %v1961
    %v1964 = vunpack.c.l.s4 1414812756
    %v1965 = vunpack.c.0.s8 %v1964
    %v1966 = vlaneseq
    %v1967 = vshrl.u32 %v1966, 7
    %v1968 = vsub.s32 %v1965, %v1967
    %v1969 = vrot.slane %v1809, %v1968
    %v1971 = vunpack.c.l.s4 1987475062
    %v1972 = vunpack.c.0.s8 %v1971
    %v1973 = vlaneseq
    %v1974 = vshrl.u32 %v1973, 7
    %v1975 = vsub.s32 %v1972, %v1974
    %v1976 = vrot.slane %v1809, %v1975
    %v1978 = vunpack.c.l.s4 269488144
    %v1979 = vunpack.c.0.s8 %v1978
    %v1980 = vlaneseq
    %v1981 = vshrl.u32 %v1980, 7
    %v1982 = vsub.s32 %v1979, %v1981
    %v1983 = vrot.slane %v1810, %v1982
    %v1985 = vunpack.c.l.s4 842150450
    %v1986 = vunpack.c.0.s8 %v1985
    %v1987 = vlaneseq
    %v1988 = vshrl.u32 %v1987, 7
    %v1989 = vsub.s32 %v1986, %v1988
    %v1990 = vrot.slane %v1810, %v1989
    %v1992 = vunpack.c.l.s4 1414812756
    %v1993 = vunpack.c.0.s8 %v1992
    %v1994 = vlaneseq
    %v1995 = vshrl.u32 %v1994, 7
    %v1996 = vsub.s32 %v1993, %v1995
    %v1997 = vrot.slane %v1810, %v1996
    %v1999 = vunpack.c.l.s4 1987475062
    %v2000 = vunpack.c.0.s8 %v1999
    %v2001 = vlaneseq
    %v2002 = vshrl.u32 %v2001, 7
    %v2003 = vsub.s32 %v2000, %v2002
    %v2004 = vrot.slane %v1810, %v2003
    %v2006 = vunpack.c.l.s4 269488144
    %v2007 = vunpack.c.0.s8 %v2006
    %v2008 = vlaneseq
    %v2009 = vshrl.u32 %v2008, 7
    %v2010 = vsub.s32 %v2007, %v2009
    %v2011 = vrot.slane %v1811, %v2010
    %v2013 = vunpack.c.l.s4 842150450
    %v2014 = vunpack.c.0.s8 %v2013
    %v2015 = vlaneseq
    %v2016 = vshrl.u32 %v2015, 7
    %v2017 = vsub.s32 %v2014, %v2016
    %v2018 = vrot.slane %v1811, %v2017
    %v2020 = vunpack.c.l.s4 1414812756
    %v2021 = vunpack.c.0.s8 %v2020
    %v2022 = vlaneseq
    %v2023 = vshrl.u32 %v2022, 7
    %v2024 = vsub.s32 %v2021, %v2023
    %v2025 = vrot.slane %v1811, %v2024
    %v2027 = vunpack.c.l.s4 1987475062
    %v2028 = vunpack.c.0.s8 %v2027
    %v2029 = vlaneseq
    %v2030 = vshrl.u32 %v2029, 7
    %v2031 = vsub.s32 %v2028, %v2030
    %v2032 = vrot.slane %v1811, %v2031
    %v2034 = vunpack.c.l.s4 269488144
    %v2035 = vunpack.c.0.s8 %v2034
    %v2036 = vlaneseq
    %v2037 = vshrl.u32 %v2036, 7
    %v2038 = vsub.s32 %v2035, %v2037
    %v2039 = vrot.slane %v1812, %v2038
    %v2041 = vunpack.c.l.s4 842150450
    %v2042 = vunpack.c.0.s8 %v2041
    %v2043 = vlaneseq
    %v2044 = vshrl.u32 %v2043, 7
    %v2045 = vsub.s32 %v2042, %v2044
    %v2046 = vrot.slane %v1812, %v2045
    %v2048 = vunpack.c.l.s4 1414812756
    %v2049 = vunpack.c.0.s8 %v2048
    %v2050 = vlaneseq
    %v2051 = vshrl.u32 %v2050, 7
    %v2052 = vsub.s32 %v2049, %v2051
    %v2053 = vrot.slane %v1812, %v2052
    %v2055 = vunpack.c.l.s4 1987475062
    %v2056 = vunpack.c.0.s8 %v2055
    %v2057 = vlaneseq
    %v2058 = vshrl.u32 %v2057, 7
    %v2059 = vsub.s32 %v2056, %v2058
    %v2060 = vrot.slane %v1812, %v2059
    %v2062 = vunpack.c.l.s4 269488144
    %v2063 = vunpack.c.0.s8 %v2062
    %v2064 = vlaneseq
    %v2065 = vshrl.u32 %v2064, 7
    %v2066 = vsub.s32 %v2063, %v2065
    %v2067 = vrot.slane %v1813, %v2066
    %v2069 = vunpack.c.l.s4 842150450
    %v2070 = vunpack.c.0.s8 %v2069
    %v2071 = vlaneseq
    %v2072 = vshrl.u32 %v2071, 7
    %v2073 = vsub.s32 %v2070, %v2072
    %v2074 = vrot.slane %v1813, %v2073
    %v2076 = vunpack.c.l.s4 1414812756
    %v2077 = vunpack.c.0.s8 %v2076
    %v2078 = vlaneseq
    %v2079 = vshrl.u32 %v2078, 7
    %v2080 = vsub.s32 %v2077, %v2079
    %v2081 = vrot.slane %v1813, %v2080
    %v2083 = vunpack.c.l.s4 1987475062
    %v2084 = vunpack.c.0.s8 %v2083
    %v2085 = vlaneseq
    %v2086 = vshrl.u32 %v2085, 7
    %v2087 = vsub.s32 %v2084, %v2086
    %v2088 = vrot.slane %v1813, %v2087
    %v2090 = vunpack.c.l.s4 269488144
    %v2091 = vunpack.c.0.s8 %v2090
    %v2092 = vlaneseq
    %v2093 = vshrl.u32 %v2092, 7
    %v2094 = vsub.s32 %v2091, %v2093
    %v2095 = vrot.slane %v1814, %v2094
    %v2097 = vunpack.c.l.s4 842150450
    %v2098 = vunpack.c.0.s8 %v2097
    %v2099 = vlaneseq
    %v2100 = vshrl.u32 %v2099, 7
    %v2101 = vsub.s32 %v2098, %v2100
    %v2102 = vrot.slane %v1814, %v2101
    %v2104 = vunpack.c.l.s4 1414812756
    %v2105 = vunpack.c.0.s8 %v2104
    %v2106 = vlaneseq
    %v2107 = vshrl.u32 %v2106, 7
    %v2108 = vsub.s32 %v2105, %v2107
    %v2109 = vrot.slane %v1814, %v2108
    %v2111 = vunpack.c.l.s4 1987475062
    %v2112 = vunpack.c.0.s8 %v2111
    %v2113 = vlaneseq
    %v2114 = vshrl.u32 %v2113, 7
    %v2115 = vsub.s32 %v2112, %v2114
    %v2116 = vrot.slane %v1814, %v2115
    %v2118 = vunpack.c.l.s4 269488144
    %v2119 = vunpack.c.0.s8 %v2118
    %v2120 = vlaneseq
    %v2121 = vshrl.u32 %v2120, 7
    %v2122 = vsub.s32 %v2119, %v2121
    %v2123 = vrot.slane %v1815, %v2122
    %v2125 = vunpack.c.l.s4 842150450
    %v2126 = vunpack.c.0.s8 %v2125
    %v2127 = vlaneseq
    %v2128 = vshrl.u32 %v2127, 7
    %v2129 = vsub.s32 %v2126, %v2128
    %v2130 = vrot.slane %v1815, %v2129
    %v2132 = vunpack.c.l.s4 1414812756
    %v2133 = vunpack.c.0.s8 %v2132
    %v2134 = vlaneseq
    %v2135 = vshrl.u32 %v2134, 7
    %v2136 = vsub.s32 %v2133, %v2135
    %v2137 = vrot.slane %v1815, %v2136
    %v2139 = vunpack.c.l.s4 1987475062
    %v2140 = vunpack.c.0.s8 %v2139
    %v2141 = vlaneseq
    %v2142 = vshrl.u32 %v2141, 7
    %v2143 = vsub.s32 %v2140, %v2142
    %v2144 = vrot.slane %v1815, %v2143
    %v2146 = vunpack.c.l.s4 269488144
    %v2147 = vunpack.c.0.s8 %v2146
    %v2148 = vlaneseq
    %v2149 = vshrl.u32 %v2148, 7
    %v2150 = vsub.s32 %v2147, %v2149
    %v2151 = vrot.slane %v1816, %v2150
    %v2153 = vunpack.c.l.s4 842150450
    %v2154 = vunpack.c.0.s8 %v2153
    %v2155 = vlaneseq
    %v2156 = vshrl.u32 %v2155, 7
    %v2157 = vsub.s32 %v2154, %v2156
    %v2158 = vrot.slane %v1816, %v2157
    %v2160 = vunpack.c.l.s4 1414812756
    %v2161 = vunpack.c.0.s8 %v2160
    %v2162 = vlaneseq
    %v2163 = vshrl.u32 %v2162, 7
    %v2164 = vsub.s32 %v2161, %v2163
    %v2165 = vrot.slane %v1816, %v2164
    %v2167 = vunpack.c.l.s4 1987475062
    %v2168 = vunpack.c.0.s8 %v2167
    %v2169 = vlaneseq
    %v2170 = vshrl.u32 %v2169, 7
    %v2171 = vsub.s32 %v2168, %v2170
    %v2172 = vrot.slane %v1816, %v2171
    %v2174 = vunpack.c.l.s4 269488144
    %v2175 = vunpack.c.0.s8 %v2174
    %v2176 = vlaneseq
    %v2177 = vshrl.u32 %v2176, 7
    %v2178 = vsub.s32 %v2175, %v2177
    %v2179 = vrot.slane %v1817, %v2178
    %v2181 = vunpack.c.l.s4 842150450
    %v2182 = vunpack.c.0.s8 %v2181
    %v2183 = vlaneseq
    %v2184 = vshrl.u32 %v2183, 7
    %v2185 = vsub.s32 %v2182, %v2184
    %v2186 = vrot.slane %v1817, %v2185
    %v2188 = vunpack.c.l.s4 1414812756
    %v2189 = vunpack.c.0.s8 %v2188
    %v2190 = vlaneseq
    %v2191 = vshrl.u32 %v2190, 7
    %v2192 = vsub.s32 %v2189, %v2191
    %v2193 = vrot.slane %v1817, %v2192
    %v2195 = vunpack.c.l.s4 1987475062
    %v2196 = vunpack.c.0.s8 %v2195
    %v2197 = vlaneseq
    %v2198 = vshrl.u32 %v2197, 7
    %v2199 = vsub.s32 %v2196, %v2198
    %v2200 = vrot.slane %v1817, %v2199
    %v2202 = vunpack.c.l.s4 269488144
    %v2203 = vunpack.c.0.s8 %v2202
    %v2204 = vlaneseq
    %v2205 = vshrl.u32 %v2204, 7
    %v2206 = vsub.s32 %v2203, %v2205
    %v2207 = vrot.slane %v1818, %v2206
    %v2209 = vunpack.c.l.s4 842150450
    %v2210 = vunpack.c.0.s8 %v2209
    %v2211 = vlaneseq
    %v2212 = vshrl.u32 %v2211, 7
    %v2213 = vsub.s32 %v2210, %v2212
    %v2214 = vrot.slane %v1818, %v2213
    %v2216 = vunpack.c.l.s4 1414812756
    %v2217 = vunpack.c.0.s8 %v2216
    %v2218 = vlaneseq
    %v2219 = vshrl.u32 %v2218, 7
    %v2220 = vsub.s32 %v2217, %v2219
    %v2221 = vrot.slane %v1818, %v2220
    %v2223 = vunpack.c.l.s4 1987475062
    %v2224 = vunpack.c.0.s8 %v2223
    %v2225 = vlaneseq
    %v2226 = vshrl.u32 %v2225, 7
    %v2227 = vsub.s32 %v2224, %v2226
    %v2228 = vrot.slane %v1818, %v2227
    %v2230 = vunpack.c.l.s4 269488144
    %v2231 = vunpack.c.0.s8 %v2230
    %v2232 = vlaneseq
    %v2233 = vshrl.u32 %v2232, 7
    %v2234 = vsub.s32 %v2231, %v2233
    %v2235 = vrot.slane %v1819, %v2234
    %v2237 = vunpack.c.l.s4 842150450
    %v2238 = vunpack.c.0.s8 %v2237
    %v2239 = vlaneseq
    %v2240 = vshrl.u32 %v2239, 7
    %v2241 = vsub.s32 %v2238, %v2240
    %v2242 = vrot.slane %v1819, %v2241
    %v2244 = vunpack.c.l.s4 1414812756
    %v2245 = vunpack.c.0.s8 %v2244
    %v2246 = vlaneseq
    %v2247 = vshrl.u32 %v2246, 7
    %v2248 = vsub.s32 %v2245, %v2247
    %v2249 = vrot.slane %v1819, %v2248
    %v2251 = vunpack.c.l.s4 1987475062
    %v2252 = vunpack.c.0.s8 %v2251
    %v2253 = vlaneseq
    %v2254 = vshrl.u32 %v2253, 7
    %v2255 = vsub.s32 %v2252, %v2254
    %v2256 = vrot.slane %v1819, %v2255
    %v2258 = vunpack.c.l.s4 269488144
    %v2259 = vunpack.c.0.s8 %v2258
    %v2260 = vlaneseq
    %v2261 = vshrl.u32 %v2260, 7
    %v2262 = vsub.s32 %v2259, %v2261
    %v2263 = vrot.slane %v1820, %v2262
    %v2265 = vunpack.c.l.s4 842150450
    %v2266 = vunpack.c.0.s8 %v2265
    %v2267 = vlaneseq
    %v2268 = vshrl.u32 %v2267, 7
    %v2269 = vsub.s32 %v2266, %v2268
    %v2270 = vrot.slane %v1820, %v2269
    %v2272 = vunpack.c.l.s4 1414812756
    %v2273 = vunpack.c.0.s8 %v2272
    %v2274 = vlaneseq
    %v2275 = vshrl.u32 %v2274, 7
    %v2276 = vsub.s32 %v2273, %v2275
    %v2277 = vrot.slane %v1820, %v2276
    %v2279 = vunpack.c.l.s4 1987475062
    %v2280 = vunpack.c.0.s8 %v2279
    %v2281 = vlaneseq
    %v2282 = vshrl.u32 %v2281, 7
    %v2283 = vsub.s32 %v2280, %v2282
    %v2284 = vrot.slane %v1820, %v2283
    %v2285 = vcombine.low %v1843, %v1850
    %v2286 = vcombine.low %v1857, %v1864
    %v2288 = vunpack.c.l.s4 1983009808
    %v2289 = vunpack.c.0.s8 %v2288
    %v2290 = vlaneseq
    %v2291 = vshrl.u32 %v2290, 7
    %v2292 = vsub.s32 %v2289, %v2291
    %v2293 = vrot.slane %v2285, %v2292
    %v2295 = vunpack.c.l.s4 1983009808
    %v2296 = vunpack.c.0.s8 %v2295
    %v2297 = vlaneseq
    %v2298 = vshrl.u32 %v2297, 7
    %v2299 = vsub.s32 %v2296, %v2298
    %v2300 = vrot.slane %v2286, %v2299
    %v2301 = vcombine.low %v2293, %v2300
    %v2302 = vcombine.low %v1871, %v1878
    %v2303 = vcombine.low %v1885, %v1892
    %v2305 = vunpack.c.l.s4 1983009808
    %v2306 = vunpack.c.0.s8 %v2305
    %v2307 = vlaneseq
    %v2308 = vshrl.u32 %v2307, 7
    %v2309 = vsub.s32 %v2306, %v2308
    %v2310 = vrot.slane %v2302, %v2309
    %v2312 = vunpack.c.l.s4 1983009808
    %v2313 = vunpack.c.0.s8 %v2312
    %v2314 = vlaneseq
    %v2315 = vshrl.u32 %v2314, 7
    %v2316 = vsub.s32 %v2313, %v2315
    %v2317 = vrot.slane %v2303, %v2316
    %v2318 = vcombine.low %v2310, %v2317
    %v2319 = vcombine.low %v1899, %v1906
    %v2320 = vcombine.low %v1913, %v1920
    %v2322 = vunpack.c.l.s4 1983009808
    %v2323 = vunpack.c.0.s8 %v2322
    %v2324 = vlaneseq
    %v2325 = vshrl.u32 %v2324, 7
    %v2326 = vsub.s32 %v2323, %v2325
    %v2327 = vrot.slane %v2319, %v2326
    %v2329 = vunpack.c.l.s4 1983009808
    %v2330 = vunpack.c.0.s8 %v2329
    %v2331 = vlaneseq
    %v2332 = vshrl.u32 %v2331, 7
    %v2333 = vsub.s32 %v2330, %v2332
    %v2334 = vrot.slane %v2320, %v2333
    %v2335 = vcombine.low %v2327, %v2334
    %v2336 = vcombine.low %v1927, %v1934
    %v2337 = vcombine.low %v1941, %v1948
    %v2339 = vunpack.c.l.s4 1983009808
    %v2340 = vunpack.c.0.s8 %v2339
    %v2341 = vlaneseq
    %v2342 = vshrl.u32 %v2341, 7
    %v2343 = vsub.s32 %v2340, %v2342
    %v2344 = vrot.slane %v2336, %v2343
    %v2346 = vunpack.c.l.s4 1983009808
    %v2347 = vunpack.c.0.s8 %v2346
    %v2348 = vlaneseq
    %v2349 = vshrl.u32 %v2348, 7
    %v2350 = vsub.s32 %v2347, %v2349
    %v2351 = vrot.slane %v2337, %v2350
    %v2352 = vcombine.low %v2344, %v2351
    %v2353 = vcombine.low %v1955, %v1962
    %v2354 = vcombine.low %v1969, %v1976
    %v2356 = vunpack.c.l.s4 1983009808
    %v2357 = vunpack.c.0.s8 %v2356
    %v2358 = vlaneseq
    %v2359 = vshrl.u32 %v2358, 7
    %v2360 = vsub.s32 %v2357, %v2359
    %v2361 = vrot.slane %v2353, %v2360
    %v2363 = vunpack.c.l.s4 1983009808
    %v2364 = vunpack.c.0.s8 %v2363
    %v2365 = vlaneseq
    %v2366 = vshrl.u32 %v2365, 7
    %v2367 = vsub.s32 %v2364, %v2366
    %v2368 = vrot.slane %v2354, %v2367
    %v2369 = vcombine.low %v2361, %v2368
    %v2370 = vcombine.low %v1983, %v1990
    %v2371 = vcombine.low %v1997, %v2004
    %v2373 = vunpack.c.l.s4 1983009808
    %v2374 = vunpack.c.0.s8 %v2373
    %v2375 = vlaneseq
    %v2376 = vshrl.u32 %v2375, 7
    %v2377 = vsub.s32 %v2374, %v2376
    %v2378 = vrot.slane %v2370, %v2377
    %v2380 = vunpack.c.l.s4 1983009808
    %v2381 = vunpack.c.0.s8 %v2380
    %v2382 = vlaneseq
    %v2383 = vshrl.u32 %v2382, 7
    %v2384 = vsub.s32 %v2381, %v2383
    %v2385 = vrot.slane %v2371, %v2384
    %v2386 = vcombine.low %v2378, %v2385
    %v2387 = vcombine.low %v2011, %v2018
    %v2388 = vcombine.low %v2025, %v2032
    %v2390 = vunpack.c.l.s4 1983009808
    %v2391 = vunpack.c.0.s8 %v2390
    %v2392 = vlaneseq
    %v2393 = vshrl.u32 %v2392, 7
    %v2394 = vsub.s32 %v2391, %v2393
    %v2395 = vrot.slane %v2387, %v2394
    %v2397 = vunpack.c.l.s4 1983009808
    %v2398 = vunpack.c.0.s8 %v2397
    %v2399 = vlaneseq
    %v2400 = vshrl.u32 %v2399, 7
    %v2401 = vsub.s32 %v2398, %v2400
    %v2402 = vrot.slane %v2388, %v2401
    %v2403 = vcombine.low %v2395, %v2402
    %v2404 = vcombine.low %v2039, %v2046
    %v2405 = vcombine.low %v2053, %v2060
    %v2407 = vunpack.c.l.s4 1983009808
    %v2408 = vunpack.c.0.s8 %v2407
    %v2409 = vlaneseq
    %v2410 = vshrl.u32 %v2409, 7
    %v2411 = vsub.s32 %v2408, %v2410
    %v2412 = vrot.slane %v2404, %v2411
    %v2414 = vunpack.c.l.s4 1983009808
    %v2415 = vunpack.c.0.s8 %v2414
    %v2416 = vlaneseq
    %v2417 = vshrl.u32 %v2416, 7
    %v2418 = vsub.s32 %v2415, %v2417
    %v2419 = vrot.slane %v2405, %v2418
    %v2420 = vcombine.low %v2412, %v2419
    %v2421 = vcombine.low %v2067, %v2074
    %v2422 = vcombine.low %v2081, %v2088
    %v2424 = vunpack.c.l.s4 1983009808
    %v2425 = vunpack.c.0.s8 %v2424
    %v2426 = vlaneseq
    %v2427 = vshrl.u32 %v2426, 7
    %v2428 = vsub.s32 %v2425, %v2427
    %v2429 = vrot.slane %v2421, %v2428
    %v2431 = vunpack.c.l.s4 1983009808
    %v2432 = vunpack.c.0.s8 %v2431
    %v2433 = vlaneseq
    %v2434 = vshrl.u32 %v2433, 7
    %v2435 = vsub.s32 %v2432, %v2434
    %v2436 = vrot.slane %v2422, %v2435
    %v2437 = vcombine.low %v2429, %v2436
    %v2438 = vcombine.low %v2095, %v2102
    %v2439 = vcombine.low %v2109, %v2116
    %v2441 = vunpack.c.l.s4 1983009808
    %v2442 = vunpack.c.0.s8 %v2441
    %v2443 = vlaneseq
    %v2444 = vshrl.u32 %v2443, 7
    %v2445 = vsub.s32 %v2442, %v2444
    %v2446 = vrot.slane %v2438, %v2445
    %v2448 = vunpack.c.l.s4 1983009808
    %v2449 = vunpack.c.0.s8 %v2448
    %v2450 = vlaneseq
    %v2451 = vshrl.u32 %v2450, 7
    %v2452 = vsub.s32 %v2449, %v2451
    %v2453 = vrot.slane %v2439, %v2452
    %v2454 = vcombine.low %v2446, %v2453
    %v2455 = vcombine.low %v2123, %v2130
    %v2456 = vcombine.low %v2137, %v2144
    %v2458 = vunpack.c.l.s4 1983009808
    %v2459 = vunpack.c.0.s8 %v2458
    %v2460 = vlaneseq
    %v2461 = vshrl.u32 %v2460, 7
    %v2462 = vsub.s32 %v2459, %v2461
    %v2463 = vrot.slane %v2455, %v2462
    %v2465 = vunpack.c.l.s4 1983009808
    %v2466 = vunpack.c.0.s8 %v2465
    %v2467 = vlaneseq
    %v2468 = vshrl.u32 %v2467, 7
    %v2469 = vsub.s32 %v2466, %v2468
    %v2470 = vrot.slane %v2456, %v2469
    %v2471 = vcombine.low %v2463, %v2470
    %v2472 = vcombine.low %v2151, %v2158
    %v2473 = vcombine.low %v2165, %v2172
    %v2475 = vunpack.c.l.s4 1983009808
    %v2476 = vunpack.c.0.s8 %v2475
    %v2477 = vlaneseq
    %v2478 = vshrl.u32 %v2477, 7
    %v2479 = vsub.s32 %v2476, %v2478
    %v2480 = vrot.slane %v2472, %v2479
    %v2482 = vunpack.c.l.s4 1983009808
    %v2483 = vunpack.c.0.s8 %v2482
    %v2484 = vlaneseq
    %v2485 = vshrl.u32 %v2484, 7
    %v2486 = vsub.s32 %v2483, %v2485
    %v2487 = vrot.slane %v2473, %v2486
    %v2488 = vcombine.low %v2480, %v2487
    %v2489 = vcombine.low %v2179, %v2186
    %v2490 = vcombine.low %v2193, %v2200
    %v2492 = vunpack.c.l.s4 1983009808
    %v2493 = vunpack.c.0.s8 %v2492
    %v2494 = vlaneseq
    %v2495 = vshrl.u32 %v2494, 7
    %v2496 = vsub.s32 %v2493, %v2495
    %v2497 = vrot.slane %v2489, %v2496
    %v2499 = vunpack.c.l.s4 1983009808
    %v2500 = vunpack.c.0.s8 %v2499
    %v2501 = vlaneseq
    %v2502 = vshrl.u32 %v2501, 7
    %v2503 = vsub.s32 %v2500, %v2502
    %v2504 = vrot.slane %v2490, %v2503
    %v2505 = vcombine.low %v2497, %v2504
    %v2506 = vcombine.low %v2207, %v2214
    %v2507 = vcombine.low %v2221, %v2228
    %v2509 = vunpack.c.l.s4 1983009808
    %v2510 = vunpack.c.0.s8 %v2509
    %v2511 = vlaneseq
    %v2512 = vshrl.u32 %v2511, 7
    %v2513 = vsub.s32 %v2510, %v2512
    %v2514 = vrot.slane %v2506, %v2513
    %v2516 = vunpack.c.l.s4 1983009808
    %v2517 = vunpack.c.0.s8 %v2516
    %v2518 = vlaneseq
    %v2519 = vshrl.u32 %v2518, 7
    %v2520 = vsub.s32 %v2517, %v2519
    %v2521 = vrot.slane %v2507, %v2520
    %v2522 = vcombine.low %v2514, %v2521
    %v2523 = vcombine.low %v2235, %v2242
    %v2524 = vcombine.low %v2249, %v2256
    %v2526 = vunpack.c.l.s4 1983009808
    %v2527 = vunpack.c.0.s8 %v2526
    %v2528 = vlaneseq
    %v2529 = vshrl.u32 %v2528, 7
    %v2530 = vsub.s32 %v2527, %v2529
    %v2531 = vrot.slane %v2523, %v2530
    %v2533 = vunpack.c.l.s4 1983009808
    %v2534 = vunpack.c.0.s8 %v2533
    %v2535 = vlaneseq
    %v2536 = vshrl.u32 %v2535, 7
    %v2537 = vsub.s32 %v2534, %v2536
    %v2538 = vrot.slane %v2524, %v2537
    %v2539 = vcombine.low %v2531, %v2538
    %v2540 = vcombine.low %v2263, %v2270
    %v2541 = vcombine.low %v2277, %v2284
    %v2543 = vunpack.c.l.s4 1983009808
    %v2544 = vunpack.c.0.s8 %v2543
    %v2545 = vlaneseq
    %v2546 = vshrl.u32 %v2545, 7
    %v2547 = vsub.s32 %v2544, %v2546
    %v2548 = vrot.slane %v2540, %v2547
    %v2550 = vunpack.c.l.s4 1983009808
    %v2551 = vunpack.c.0.s8 %v2550
    %v2552 = vlaneseq
    %v2553 = vshrl.u32 %v2552, 7
    %v2554 = vsub.s32 %v2551, %v2553
    %v2555 = vrot.slane %v2541, %v2554
    %v2556 = vcombine.low %v2548, %v2555
    %2557 = vset.pattern.permute.xlu0 0
    %2558 = vperm.xlu0 %2557, %v2301
    %v2559 = vpop.permute.xlu0 %2558
    %2560 = vset.pattern.permute.xlu0 0
    %2561 = vperm.xlu0 %2560, %v2318
    %v2562 = vpop.permute.xlu0 %2561
    %2563 = vset.pattern.permute.xlu0 0
    %2564 = vperm.xlu0 %2563, %v2335
    %v2565 = vpop.permute.xlu0 %2564
    %2566 = vset.pattern.permute.xlu0 0
    %2567 = vperm.xlu0 %2566, %v2352
    %v2568 = vpop.permute.xlu0 %2567
    %2569 = vset.pattern.permute.xlu0 0
    %2570 = vperm.xlu0 %2569, %v2369
    %v2571 = vpop.permute.xlu0 %2570
    %2572 = vset.pattern.permute.xlu0 0
    %2573 = vperm.xlu0 %2572, %v2386
    %v2574 = vpop.permute.xlu0 %2573
    %2575 = vset.pattern.permute.xlu0 0
    %2576 = vperm.xlu0 %2575, %v2403
    %v2577 = vpop.permute.xlu0 %2576
    %2578 = vset.pattern.permute.xlu0 0
    %2579 = vperm.xlu0 %2578, %v2420
    %v2580 = vpop.permute.xlu0 %2579
    %2581 = vset.pattern.permute.xlu0 0
    %2582 = vperm.xlu0 %2581, %v2437
    %v2583 = vpop.permute.xlu0 %2582
    %2584 = vset.pattern.permute.xlu0 0
    %2585 = vperm.xlu0 %2584, %v2454
    %v2586 = vpop.permute.xlu0 %2585
    %2587 = vset.pattern.permute.xlu0 0
    %2588 = vperm.xlu0 %2587, %v2471
    %v2589 = vpop.permute.xlu0 %2588
    %2590 = vset.pattern.permute.xlu0 0
    %2591 = vperm.xlu0 %2590, %v2488
    %v2592 = vpop.permute.xlu0 %2591
    %2593 = vset.pattern.permute.xlu0 0
    %2594 = vperm.xlu0 %2593, %v2505
    %v2595 = vpop.permute.xlu0 %2594
    %2596 = vset.pattern.permute.xlu0 0
    %2597 = vperm.xlu0 %2596, %v2522
    %v2598 = vpop.permute.xlu0 %2597
    %2599 = vset.pattern.permute.xlu0 0
    %2600 = vperm.xlu0 %2599, %v2539
    %v2601 = vpop.permute.xlu0 %2600
    %2602 = vset.pattern.permute.xlu0 0
    %2603 = vperm.xlu0 %2602, %v2556
    %v2604 = vpop.permute.xlu0 %2603
    %v2605 = vadd.s32 %v1273, 4294967232
    %v2606 = vlaneseq
    %v2607 = vshrl.u32 %v2606, 7
    %v2608 = vsub.s32 %v2605, %v2607
    %v2609 = vrot.slane %v2559, %v2608
    %v2610 = vadd.s32 %v1273, 4294967224
    %v2611 = vlaneseq
    %v2612 = vshrl.u32 %v2611, 7
    %v2613 = vsub.s32 %v2610, %v2612
    %v2614 = vrot.slane %v2562, %v2613
    %vm2615 = vcmask 654912
    %v2616 = vsel %vm2615, %v2614, %v2609
    %v2617 = vadd.s32 %v1273, 4294967216
    %v2618 = vlaneseq
    %v2619 = vshrl.u32 %v2618, 7
    %v2620 = vsub.s32 %v2617, %v2619
    %v2621 = vrot.slane %v2565, %v2620
    %vm2622 = vcmask 720512
    %v2623 = vsel %vm2622, %v2621, %v2616
    %v2624 = vadd.s32 %v1273, 4294967208
    %v2625 = vlaneseq
    %v2626 = vshrl.u32 %v2625, 7
    %v2627 = vsub.s32 %v2624, %v2626
    %v2628 = vrot.slane %v2568, %v2627
    %vm2629 = vcmask 786112
    %v2630 = vsel %vm2629, %v2628, %v2623
    %v2631 = vadd.s32 %v1273, 4294967200
    %v2632 = vlaneseq
    %v2633 = vshrl.u32 %v2632, 7
    %v2634 = vsub.s32 %v2631, %v2633
    %v2635 = vrot.slane %v2571, %v2634
    %vm2636 = vcmask 851712
    %v2637 = vsel %vm2636, %v2635, %v2630
    %v2638 = vadd.s32 %v1273, 4294967192
    %v2639 = vlaneseq
    %v2640 = vshrl.u32 %v2639, 7
    %v2641 = vsub.s32 %v2638, %v2640
    %v2642 = vrot.slane %v2574, %v2641
    %vm2643 = vcmask 917312
    %v2644 = vsel %vm2643, %v2642, %v2637
    %v2645 = vadd.s32 %v1273, 4294967184
    %v2646 = vlaneseq
    %v2647 = vshrl.u32 %v2646, 7
    %v2648 = vsub.s32 %v2645, %v2647
    %v2649 = vrot.slane %v2577, %v2648
    %vm2650 = vcmask 982912
    %v2651 = vsel %vm2650, %v2649, %v2644
    %v2652 = vadd.s32 %v1273, 4294967176
    %v2653 = vlaneseq
    %v2654 = vshrl.u32 %v2653, 7
    %v2655 = vsub.s32 %v2652, %v2654
    %v2656 = vrot.slane %v2580, %v2655
    %vm2657 = vcmask 1048512
    %v2658 = vsel %vm2657, %v2656, %v2651
    %v2659 = vlaneseq
    %v2660 = vshrl.u32 %v2659, 7
    %v2661 = vsub.s32 %v2605, %v2660
    %v2662 = vrot.slane %v2583, %v2661
    %v2663 = vlaneseq
    %v2664 = vshrl.u32 %v2663, 7
    %v2665 = vsub.s32 %v2610, %v2664
    %v2666 = vrot.slane %v2586, %v2665
    %v2667 = vsel %vm2615, %v2666, %v2662
    %v2668 = vlaneseq
    %v2669 = vshrl.u32 %v2668, 7
    %v2670 = vsub.s32 %v2617, %v2669
    %v2671 = vrot.slane %v2589, %v2670
    %v2672 = vsel %vm2622, %v2671, %v2667
    %v2673 = vlaneseq
    %v2674 = vshrl.u32 %v2673, 7
    %v2675 = vsub.s32 %v2624, %v2674
    %v2676 = vrot.slane %v2592, %v2675
    %v2677 = vsel %vm2629, %v2676, %v2672
    %v2678 = vlaneseq
    %v2679 = vshrl.u32 %v2678, 7
    %v2680 = vsub.s32 %v2631, %v2679
    %v2681 = vrot.slane %v2595, %v2680
    %v2682 = vsel %vm2636, %v2681, %v2677
    %v2683 = vlaneseq
    %v2684 = vshrl.u32 %v2683, 7
    %v2685 = vsub.s32 %v2638, %v2684
    %v2686 = vrot.slane %v2598, %v2685
    %v2687 = vsel %vm2643, %v2686, %v2682
    %v2688 = vlaneseq
    %v2689 = vshrl.u32 %v2688, 7
    %v2690 = vsub.s32 %v2645, %v2689
    %v2691 = vrot.slane %v2601, %v2690
    %v2692 = vsel %vm2650, %v2691, %v2687
    %v2693 = vlaneseq
    %v2694 = vshrl.u32 %v2693, 7
    %v2695 = vsub.s32 %v2652, %v2694
    %v2696 = vrot.slane %v2604, %v2695
    %v2697 = vsel %vm2657, %v2696, %v2692
    %v2698 = vsel %vm1366, %v2697, %v2658
    %v2700 = vunpack.c.l.s4 1983009808
    %v2701 = vunpack.c.0.s8 %v2700
    %v2702 = vlaneseq
    %v2703 = vshrl.u32 %v2702, 7
    %v2704 = vsub.s32 %v2701, %v2703
    %v2705 = vrot.slane %v2698, %v2704
    %vm2707 = vcmask 1041920
    %2708 = vst.msk [vmem:[#allocation2] sm:$0x3] %vm2707, %v2705
    %s2709 = sld [smem:[#allocation3 + $0x2]]
    %s2710 = sand.u32 2147483647, %s2709
    %s2711 = scalar_lea.vmem %s2, 256
    %v2712 = vld [vmem:[%s2711] sm:$0xff]
    %v2713 = vld [vmem:[%s2711 + $0x8] sm:$0xff]
    %v2714 = vld [vmem:[%s2711 + $0x10] sm:$0xff]
    %v2715 = vld [vmem:[%s2711 + $0x18] sm:$0xff]
    %v2716 = vld [vmem:[%s2711 + $0x20] sm:$0xff]
    %v2717 = vld [vmem:[%s2711 + $0x28] sm:$0xff]
    %v2718 = vld [vmem:[%s2711 + $0x30] sm:$0xff]
    %v2719 = vld [vmem:[%s2711 + $0x38] sm:$0xff]
    %s2720 = scalar_lea.vmem %s2, 320
    %v2721 = vld [vmem:[%s2720] sm:$0xff]
    %v2722 = vld [vmem:[%s2720 + $0x8] sm:$0xff]
    %v2723 = vld [vmem:[%s2720 + $0x10] sm:$0xff]
    %v2724 = vld [vmem:[%s2720 + $0x18] sm:$0xff]
    %v2725 = vld [vmem:[%s2720 + $0x20] sm:$0xff]
    %v2726 = vld [vmem:[%s2720 + $0x28] sm:$0xff]
    %v2727 = vld [vmem:[%s2720 + $0x30] sm:$0xff]
    %v2728 = vld [vmem:[%s2720 + $0x38] sm:$0xff]
    %s2729 = scalar_lea.vmem %s1, 8
    %v2730 = vld [vmem:[%s2729] sm:$0x3]
    %v2733 = vunpack.c.l.s4 1966171168
    %v2734 = vunpack.c.0.s8 %v2733
    %v2735 = vlaneseq
    %v2736 = vshrl.u32 %v2735, 7
    %v2737 = vsub.s32 %v2734, %v2736
    %v2738 = vrot.slane %v2730, %v2737
    %v2739 = vcombine.high %v2738, %v2738
    %v2741 = vunpack.c.l.s4 1966171168
    %v2742 = vunpack.c.0.s8 %v2741
    %v2743 = vlaneseq
    %v2744 = vshrl.u32 %v2743, 7
    %v2745 = vsub.s32 %v2742, %v2744
    %v2746 = vrot.slane %v2738, %v2745
    %v2748 = vunpack.c.l.s4 1966171168
    %v2749 = vunpack.c.0.s8 %v2748
    %v2750 = vlaneseq
    %v2751 = vshrl.u32 %v2750, 7
    %v2752 = vsub.s32 %v2749, %v2751
    %v2753 = vrot.slane %v2739, %v2752
    %v2754 = vlaneseq
    %v2755 = vshrl.u32 %v2754, 7
    %v2756 = vsub.s32 0, %v2755
    %v2757 = vrot.slane %v2746, %v2756
    %v2758 = vlaneseq
    %v2759 = vshrl.u32 %v2758, 7
    %v2760 = vsub.s32 0, %v2759
    %v2761 = vrot.slane %v2753, %v2760
    %2765 = vset.pattern.permute.xlu0 0
    %2766 = vperm.xlu0 %2765, %v2712
    %v2767 = vpop.permute.xlu0 %2766
    %2770 = vset.pattern.permute.xlu0 0
    %2771 = vperm.xlu0 %2770, %v2713
    %v2772 = vpop.permute.xlu0 %2771
    %2775 = vset.pattern.permute.xlu0 0
    %2776 = vperm.xlu0 %2775, %v2714
    %v2777 = vpop.permute.xlu0 %2776
    %2780 = vset.pattern.permute.xlu0 0
    %2781 = vperm.xlu0 %2780, %v2715
    %v2782 = vpop.permute.xlu0 %2781
    %2785 = vset.pattern.permute.xlu0 0
    %2786 = vperm.xlu0 %2785, %v2716
    %v2787 = vpop.permute.xlu0 %2786
    %2790 = vset.pattern.permute.xlu0 0
    %2791 = vperm.xlu0 %2790, %v2717
    %v2792 = vpop.permute.xlu0 %2791
    %2795 = vset.pattern.permute.xlu0 0
    %2796 = vperm.xlu0 %2795, %v2718
    %v2797 = vpop.permute.xlu0 %2796
    %2800 = vset.pattern.permute.xlu0 0
    %2801 = vperm.xlu0 %2800, %v2719
    %v2802 = vpop.permute.xlu0 %2801
    %v2804 = vsub.f32 %v2757, %v2767
    %v2805 = vsub.f32 %v2757, %v2772
    %v2806 = vsub.f32 %v2757, %v2777
    %v2807 = vsub.f32 %v2757, %v2782
    %v2808 = vsub.f32 %v2757, %v2787
    %v2809 = vsub.f32 %v2757, %v2792
    %v2810 = vsub.f32 %v2757, %v2797
    %v2811 = vsub.f32 %v2757, %v2802
    %v2812 = vsub.f32 %v2761, %v2767
    %v2813 = vsub.f32 %v2761, %v2772
    %v2814 = vsub.f32 %v2761, %v2777
    %v2815 = vsub.f32 %v2761, %v2782
    %v2816 = vsub.f32 %v2761, %v2787
    %v2817 = vsub.f32 %v2761, %v2792
    %v2818 = vsub.f32 %v2761, %v2797
    %v2819 = vsub.f32 %v2761, %v2802
    %v2820 = vand.u32 2147483647, %v2804
    %v2821 = vand.u32 2147483647, %v2805
    %v2822 = vand.u32 2147483647, %v2806
    %v2823 = vand.u32 2147483647, %v2807
    %v2824 = vand.u32 2147483647, %v2808
    %v2825 = vand.u32 2147483647, %v2809
    %v2826 = vand.u32 2147483647, %v2810
    %v2827 = vand.u32 2147483647, %v2811
    %v2828 = vand.u32 2147483647, %v2812
    %v2829 = vand.u32 2147483647, %v2813
    %v2830 = vand.u32 2147483647, %v2814
    %v2831 = vand.u32 2147483647, %v2815
    %v2832 = vand.u32 2147483647, %v2816
    %v2833 = vand.u32 2147483647, %v2817
    %v2834 = vand.u32 2147483647, %v2818
    %v2835 = vand.u32 2147483647, %v2819
    %s2836 = scalar_lea.vmem %s1, 10
    %v2837 = vld [vmem:[%s2836] sm:$0x3]
    %v2840 = vunpack.c.l.s4 1966171168
    %v2841 = vunpack.c.0.s8 %v2840
    %v2842 = vlaneseq
    %v2843 = vshrl.u32 %v2842, 7
    %v2844 = vsub.s32 %v2841, %v2843
    %v2845 = vrot.slane %v2837, %v2844
    %v2846 = vcombine.high %v2845, %v2845
    %v2848 = vunpack.c.l.s4 1966171168
    %v2849 = vunpack.c.0.s8 %v2848
    %v2850 = vlaneseq
    %v2851 = vshrl.u32 %v2850, 7
    %v2852 = vsub.s32 %v2849, %v2851
    %v2853 = vrot.slane %v2845, %v2852
    %v2855 = vunpack.c.l.s4 1966171168
    %v2856 = vunpack.c.0.s8 %v2855
    %v2857 = vlaneseq
    %v2858 = vshrl.u32 %v2857, 7
    %v2859 = vsub.s32 %v2856, %v2858
    %v2860 = vrot.slane %v2846, %v2859
    %v2861 = vlaneseq
    %v2862 = vshrl.u32 %v2861, 7
    %v2863 = vsub.s32 0, %v2862
    %v2864 = vrot.slane %v2853, %v2863
    %v2865 = vlaneseq
    %v2866 = vshrl.u32 %v2865, 7
    %v2867 = vsub.s32 0, %v2866
    %v2868 = vrot.slane %v2860, %v2867
    %2872 = vset.pattern.permute.xlu0 0
    %2873 = vperm.xlu0 %2872, %v2721
    %v2874 = vpop.permute.xlu0 %2873
    %2877 = vset.pattern.permute.xlu0 0
    %2878 = vperm.xlu0 %2877, %v2722
    %v2879 = vpop.permute.xlu0 %2878
    %2882 = vset.pattern.permute.xlu0 0
    %2883 = vperm.xlu0 %2882, %v2723
    %v2884 = vpop.permute.xlu0 %2883
    %2887 = vset.pattern.permute.xlu0 0
    %2888 = vperm.xlu0 %2887, %v2724
    %v2889 = vpop.permute.xlu0 %2888
    %2892 = vset.pattern.permute.xlu0 0
    %2893 = vperm.xlu0 %2892, %v2725
    %v2894 = vpop.permute.xlu0 %2893
    %2897 = vset.pattern.permute.xlu0 0
    %2898 = vperm.xlu0 %2897, %v2726
    %v2899 = vpop.permute.xlu0 %2898
    %2902 = vset.pattern.permute.xlu0 0
    %2903 = vperm.xlu0 %2902, %v2727
    %v2904 = vpop.permute.xlu0 %2903
    %2907 = vset.pattern.permute.xlu0 0
    %2908 = vperm.xlu0 %2907, %v2728
    %v2909 = vpop.permute.xlu0 %2908
    %v2911 = vsub.f32 %v2864, %v2874
    %v2912 = vsub.f32 %v2864, %v2879
    %v2913 = vsub.f32 %v2864, %v2884
    %v2914 = vsub.f32 %v2864, %v2889
    %v2915 = vsub.f32 %v2864, %v2894
    %v2916 = vsub.f32 %v2864, %v2899
    %v2917 = vsub.f32 %v2864, %v2904
    %v2918 = vsub.f32 %v2864, %v2909
    %v2919 = vsub.f32 %v2868, %v2874
    %v2920 = vsub.f32 %v2868, %v2879
    %v2921 = vsub.f32 %v2868, %v2884
    %v2922 = vsub.f32 %v2868, %v2889
    %v2923 = vsub.f32 %v2868, %v2894
    %v2924 = vsub.f32 %v2868, %v2899
    %v2925 = vsub.f32 %v2868, %v2904
    %v2926 = vsub.f32 %v2868, %v2909
    %v2927 = vand.u32 2147483647, %v2911
    %v2928 = vand.u32 2147483647, %v2912
    %v2929 = vand.u32 2147483647, %v2913
    %v2930 = vand.u32 2147483647, %v2914
    %v2931 = vand.u32 2147483647, %v2915
    %v2932 = vand.u32 2147483647, %v2916
    %v2933 = vand.u32 2147483647, %v2917
    %v2934 = vand.u32 2147483647, %v2918
    %v2935 = vand.u32 2147483647, %v2919
    %v2936 = vand.u32 2147483647, %v2920
    %v2937 = vand.u32 2147483647, %v2921
    %v2938 = vand.u32 2147483647, %v2922
    %v2939 = vand.u32 2147483647, %v2923
    %v2940 = vand.u32 2147483647, %v2924
    %v2941 = vand.u32 2147483647, %v2925
    %v2942 = vand.u32 2147483647, %v2926
    %v2943 = vadd.f32 %v2820, %v2927
    %v2944 = vadd.f32 %v2821, %v2928
    %v2945 = vadd.f32 %v2822, %v2929
    %v2946 = vadd.f32 %v2823, %v2930
    %v2947 = vadd.f32 %v2824, %v2931
    %v2948 = vadd.f32 %v2825, %v2932
    %v2949 = vadd.f32 %v2826, %v2933
    %v2950 = vadd.f32 %v2827, %v2934
    %v2951 = vadd.f32 %v2828, %v2935
    %v2952 = vadd.f32 %v2829, %v2936
    %v2953 = vadd.f32 %v2830, %v2937
    %v2954 = vadd.f32 %v2831, %v2938
    %v2955 = vadd.f32 %v2832, %v2939
    %v2956 = vadd.f32 %v2833, %v2940
    %v2957 = vadd.f32 %v2834, %v2941
    %v2958 = vadd.f32 %v2835, %v2942
    %v2959 = vstv %s2710
    %v2960 = vsub.f32 %v2959, %v2943
    %v2961 = vsub.f32 %v2959, %v2944
    %v2962 = vsub.f32 %v2959, %v2945
    %v2963 = vsub.f32 %v2959, %v2946
    %v2964 = vsub.f32 %v2959, %v2947
    %v2965 = vsub.f32 %v2959, %v2948
    %v2966 = vsub.f32 %v2959, %v2949
    %v2967 = vsub.f32 %v2959, %v2950
    %v2968 = vsub.f32 %v2959, %v2951
    %v2969 = vsub.f32 %v2959, %v2952
    %v2970 = vsub.f32 %v2959, %v2953
    %v2971 = vsub.f32 %v2959, %v2954
    %v2972 = vsub.f32 %v2959, %v2955
    %v2973 = vsub.f32 %v2959, %v2956
    %v2974 = vsub.f32 %v2959, %v2957
    %v2975 = vsub.f32 %v2959, %v2958
    %v2976 = vand.u32 2147483647, %v2960
    %v2977 = vand.u32 2147483647, %v2961
    %v2978 = vand.u32 2147483647, %v2962
    %v2979 = vand.u32 2147483647, %v2963
    %v2980 = vand.u32 2147483647, %v2964
    %v2981 = vand.u32 2147483647, %v2965
    %v2982 = vand.u32 2147483647, %v2966
    %v2983 = vand.u32 2147483647, %v2967
    %v2984 = vand.u32 2147483647, %v2968
    %v2985 = vand.u32 2147483647, %v2969
    %v2986 = vand.u32 2147483647, %v2970
    %v2987 = vand.u32 2147483647, %v2971
    %v2988 = vand.u32 2147483647, %v2972
    %v2989 = vand.u32 2147483647, %v2973
    %v2990 = vand.u32 2147483647, %v2974
    %v2991 = vand.u32 2147483647, %v2975
    %v2992 = vadd.f32 %v2943, 1.0
    %v2993 = vadd.f32 %v2944, 1.0
    %v2994 = vadd.f32 %v2945, 1.0
    %v2995 = vadd.f32 %v2946, 1.0
    %v2996 = vadd.f32 %v2947, 1.0
    %v2997 = vadd.f32 %v2948, 1.0
    %v2998 = vadd.f32 %v2949, 1.0
    %v2999 = vadd.f32 %v2950, 1.0
    %v3000 = vadd.f32 %v2951, 1.0
    %v3001 = vadd.f32 %v2952, 1.0
    %v3002 = vadd.f32 %v2953, 1.0
    %v3003 = vadd.f32 %v2954, 1.0
    %v3004 = vadd.f32 %v2955, 1.0
    %v3005 = vadd.f32 %v2956, 1.0
    %v3006 = vadd.f32 %v2957, 1.0
    %v3007 = vadd.f32 %v2958, 1.0
    %v3008 = vadd.f32 %v2976, 1.0
    %v3009 = vadd.f32 %v2977, 1.0
    %v3010 = vadd.f32 %v2978, 1.0
    %v3011 = vadd.f32 %v2979, 1.0
    %v3012 = vadd.f32 %v2980, 1.0
    %v3013 = vadd.f32 %v2981, 1.0
    %v3014 = vadd.f32 %v2982, 1.0
    %v3015 = vadd.f32 %v2983, 1.0
    %v3016 = vadd.f32 %v2984, 1.0
    %v3017 = vadd.f32 %v2985, 1.0
    %v3018 = vadd.f32 %v2986, 1.0
    %v3019 = vadd.f32 %v2987, 1.0
    %v3020 = vadd.f32 %v2988, 1.0
    %v3021 = vadd.f32 %v2989, 1.0
    %v3022 = vadd.f32 %v2990, 1.0
    %v3023 = vadd.f32 %v2991, 1.0
    %v3024 = vmul.f32 %v2992, %v3008
    %v3025 = vmul.f32 %v2993, %v3009
    %v3026 = vmul.f32 %v2994, %v3010
    %v3027 = vmul.f32 %v2995, %v3011
    %v3028 = vmul.f32 %v2996, %v3012
    %v3029 = vmul.f32 %v2997, %v3013
    %v3030 = vmul.f32 %v2998, %v3014
    %v3031 = vmul.f32 %v2999, %v3015
    %v3032 = vmul.f32 %v3000, %v3016
    %v3033 = vmul.f32 %v3001, %v3017
    %v3034 = vmul.f32 %v3002, %v3018
    %v3035 = vmul.f32 %v3003, %v3019
    %v3036 = vmul.f32 %v3004, %v3020
    %v3037 = vmul.f32 %v3005, %v3021
    %v3038 = vmul.f32 %v3006, %v3022
    %v3039 = vmul.f32 %v3007, %v3023
    %v3040 = vsub.f32 %v2976, %v2943
    %v3041 = vsub.f32 %v2977, %v2944
    %v3042 = vsub.f32 %v2978, %v2945
    %v3043 = vsub.f32 %v2979, %v2946
    %v3044 = vsub.f32 %v2980, %v2947
    %v3045 = vsub.f32 %v2981, %v2948
    %v3046 = vsub.f32 %v2982, %v2949
    %v3047 = vsub.f32 %v2983, %v2950
    %v3048 = vsub.f32 %v2984, %v2951
    %v3049 = vsub.f32 %v2985, %v2952
    %v3050 = vsub.f32 %v2986, %v2953
    %v3051 = vsub.f32 %v2987, %v2954
    %v3052 = vsub.f32 %v2988, %v2955
    %v3053 = vsub.f32 %v2989, %v2956
    %v3054 = vsub.f32 %v2990, %v2957
    %v3055 = vsub.f32 %v2991, %v2958
    %v3056 = vrcp.pop %v3024
    %v3057 = vmul.f32 %v3040, %v3056
    %v3058 = vrcp.pop %v3025
    %v3059 = vmul.f32 %v3041, %v3058
    %v3060 = vrcp.pop %v3026
    %v3061 = vmul.f32 %v3042, %v3060
    %v3062 = vrcp.pop %v3027
    %v3063 = vmul.f32 %v3043, %v3062
    %v3064 = vrcp.pop %v3028
    %v3065 = vmul.f32 %v3044, %v3064
    %v3066 = vrcp.pop %v3029
    %v3067 = vmul.f32 %v3045, %v3066
    %v3068 = vrcp.pop %v3030
    %v3069 = vmul.f32 %v3046, %v3068
    %v3070 = vrcp.pop %v3031
    %v3071 = vmul.f32 %v3047, %v3070
    %v3072 = vrcp.pop %v3032
    %v3073 = vmul.f32 %v3048, %v3072
    %v3074 = vrcp.pop %v3033
    %v3075 = vmul.f32 %v3049, %v3074
    %v3076 = vrcp.pop %v3034
    %v3077 = vmul.f32 %v3050, %v3076
    %v3078 = vrcp.pop %v3035
    %v3079 = vmul.f32 %v3051, %v3078
    %v3080 = vrcp.pop %v3036
    %v3081 = vmul.f32 %v3052, %v3080
    %v3082 = vrcp.pop %v3037
    %v3083 = vmul.f32 %v3053, %v3082
    %v3084 = vrcp.pop %v3038
    %v3085 = vmul.f32 %v3054, %v3084
    %v3086 = vrcp.pop %v3039
    %v3087 = vmul.f32 %v3055, %v3086
    %v3088 = vsel %vm423, %v3057, 0.0
    %3089 = vadd.xlane.f32.xlu0 %v3088
    %v3090 = vpop.xlane.xlu0 %3089
    %v3091 = vsel %vm423, %v3059, 0.0
    %3092 = vadd.xlane.f32.xlu0 %v3091
    %v3093 = vpop.xlane.xlu0 %3092
    %v3094 = vsel %vm423, %v3061, 0.0
    %3095 = vadd.xlane.f32.xlu0 %v3094
    %v3096 = vpop.xlane.xlu0 %3095
    %v3097 = vsel %vm423, %v3063, 0.0
    %3098 = vadd.xlane.f32.xlu0 %v3097
    %v3099 = vpop.xlane.xlu0 %3098
    %v3100 = vsel %vm423, %v3065, 0.0
    %3101 = vadd.xlane.f32.xlu0 %v3100
    %v3102 = vpop.xlane.xlu0 %3101
    %v3103 = vsel %vm423, %v3067, 0.0
    %3104 = vadd.xlane.f32.xlu0 %v3103
    %v3105 = vpop.xlane.xlu0 %3104
    %v3106 = vsel %vm423, %v3069, 0.0
    %3107 = vadd.xlane.f32.xlu0 %v3106
    %v3108 = vpop.xlane.xlu0 %3107
    %v3109 = vsel %vm423, %v3071, 0.0
    %3110 = vadd.xlane.f32.xlu0 %v3109
    %v3111 = vpop.xlane.xlu0 %3110
    %v3112 = vsel %vm423, %v3073, 0.0
    %3113 = vadd.xlane.f32.xlu0 %v3112
    %v3114 = vpop.xlane.xlu0 %3113
    %v3115 = vsel %vm423, %v3075, 0.0
    %3116 = vadd.xlane.f32.xlu0 %v3115
    %v3117 = vpop.xlane.xlu0 %3116
    %v3118 = vsel %vm423, %v3077, 0.0
    %3119 = vadd.xlane.f32.xlu0 %v3118
    %v3120 = vpop.xlane.xlu0 %3119
    %v3121 = vsel %vm423, %v3079, 0.0
    %3122 = vadd.xlane.f32.xlu0 %v3121
    %v3123 = vpop.xlane.xlu0 %3122
    %v3124 = vsel %vm423, %v3081, 0.0
    %3125 = vadd.xlane.f32.xlu0 %v3124
    %v3126 = vpop.xlane.xlu0 %3125
    %v3127 = vsel %vm423, %v3083, 0.0
    %3128 = vadd.xlane.f32.xlu0 %v3127
    %v3129 = vpop.xlane.xlu0 %3128
    %v3130 = vsel %vm423, %v3085, 0.0
    %3131 = vadd.xlane.f32.xlu0 %v3130
    %v3132 = vpop.xlane.xlu0 %3131
    %v3133 = vsel %vm423, %v3087, 0.0
    %3134 = vadd.xlane.f32.xlu0 %v3133
    %v3135 = vpop.xlane.xlu0 %3134
    %v3136 = vadd.f32 %v3090, 0.0
    %v3137 = vadd.f32 %v3093, 0.0
    %v3138 = vadd.f32 %v3096, 0.0
    %v3139 = vadd.f32 %v3099, 0.0
    %v3140 = vadd.f32 %v3102, 0.0
    %v3141 = vadd.f32 %v3105, 0.0
    %v3142 = vadd.f32 %v3108, 0.0
    %v3143 = vadd.f32 %v3111, 0.0
    %v3144 = vadd.f32 %v3114, 0.0
    %v3145 = vadd.f32 %v3117, 0.0
    %v3146 = vadd.f32 %v3120, 0.0
    %v3147 = vadd.f32 %v3123, 0.0
    %v3148 = vadd.f32 %v3126, 0.0
    %v3149 = vadd.f32 %v3129, 0.0
    %v3150 = vadd.f32 %v3132, 0.0
    %v3151 = vadd.f32 %v3135, 0.0
    %v3169 = vunpack.c.l.s4 269488144
    %v3170 = vunpack.c.0.s8 %v3169
    %v3171 = vlaneseq
    %v3172 = vshrl.u32 %v3171, 7
    %v3173 = vsub.s32 %v3170, %v3172
    %v3174 = vrot.slane %v3136, %v3173
    %v3176 = vunpack.c.l.s4 842150450
    %v3177 = vunpack.c.0.s8 %v3176
    %v3178 = vlaneseq
    %v3179 = vshrl.u32 %v3178, 7
    %v3180 = vsub.s32 %v3177, %v3179
    %v3181 = vrot.slane %v3136, %v3180
    %v3183 = vunpack.c.l.s4 1414812756
    %v3184 = vunpack.c.0.s8 %v3183
    %v3185 = vlaneseq
    %v3186 = vshrl.u32 %v3185, 7
    %v3187 = vsub.s32 %v3184, %v3186
    %v3188 = vrot.slane %v3136, %v3187
    %v3190 = vunpack.c.l.s4 1987475062
    %v3191 = vunpack.c.0.s8 %v3190
    %v3192 = vlaneseq
    %v3193 = vshrl.u32 %v3192, 7
    %v3194 = vsub.s32 %v3191, %v3193
    %v3195 = vrot.slane %v3136, %v3194
    %v3197 = vunpack.c.l.s4 269488144
    %v3198 = vunpack.c.0.s8 %v3197
    %v3199 = vlaneseq
    %v3200 = vshrl.u32 %v3199, 7
    %v3201 = vsub.s32 %v3198, %v3200
    %v3202 = vrot.slane %v3137, %v3201
    %v3204 = vunpack.c.l.s4 842150450
    %v3205 = vunpack.c.0.s8 %v3204
    %v3206 = vlaneseq
    %v3207 = vshrl.u32 %v3206, 7
    %v3208 = vsub.s32 %v3205, %v3207
    %v3209 = vrot.slane %v3137, %v3208
    %v3211 = vunpack.c.l.s4 1414812756
    %v3212 = vunpack.c.0.s8 %v3211
    %v3213 = vlaneseq
    %v3214 = vshrl.u32 %v3213, 7
    %v3215 = vsub.s32 %v3212, %v3214
    %v3216 = vrot.slane %v3137, %v3215
    %v3218 = vunpack.c.l.s4 1987475062
    %v3219 = vunpack.c.0.s8 %v3218
    %v3220 = vlaneseq
    %v3221 = vshrl.u32 %v3220, 7
    %v3222 = vsub.s32 %v3219, %v3221
    %v3223 = vrot.slane %v3137, %v3222
    %v3225 = vunpack.c.l.s4 269488144
    %v3226 = vunpack.c.0.s8 %v3225
    %v3227 = vlaneseq
    %v3228 = vshrl.u32 %v3227, 7
    %v3229 = vsub.s32 %v3226, %v3228
    %v3230 = vrot.slane %v3138, %v3229
    %v3232 = vunpack.c.l.s4 842150450
    %v3233 = vunpack.c.0.s8 %v3232
    %v3234 = vlaneseq
    %v3235 = vshrl.u32 %v3234, 7
    %v3236 = vsub.s32 %v3233, %v3235
    %v3237 = vrot.slane %v3138, %v3236
    %v3239 = vunpack.c.l.s4 1414812756
    %v3240 = vunpack.c.0.s8 %v3239
    %v3241 = vlaneseq
    %v3242 = vshrl.u32 %v3241, 7
    %v3243 = vsub.s32 %v3240, %v3242
    %v3244 = vrot.slane %v3138, %v3243
    %v3246 = vunpack.c.l.s4 1987475062
    %v3247 = vunpack.c.0.s8 %v3246
    %v3248 = vlaneseq
    %v3249 = vshrl.u32 %v3248, 7
    %v3250 = vsub.s32 %v3247, %v3249
    %v3251 = vrot.slane %v3138, %v3250
    %v3253 = vunpack.c.l.s4 269488144
    %v3254 = vunpack.c.0.s8 %v3253
    %v3255 = vlaneseq
    %v3256 = vshrl.u32 %v3255, 7
    %v3257 = vsub.s32 %v3254, %v3256
    %v3258 = vrot.slane %v3139, %v3257
    %v3260 = vunpack.c.l.s4 842150450
    %v3261 = vunpack.c.0.s8 %v3260
    %v3262 = vlaneseq
    %v3263 = vshrl.u32 %v3262, 7
    %v3264 = vsub.s32 %v3261, %v3263
    %v3265 = vrot.slane %v3139, %v3264
    %v3267 = vunpack.c.l.s4 1414812756
    %v3268 = vunpack.c.0.s8 %v3267
    %v3269 = vlaneseq
    %v3270 = vshrl.u32 %v3269, 7
    %v3271 = vsub.s32 %v3268, %v3270
    %v3272 = vrot.slane %v3139, %v3271
    %v3274 = vunpack.c.l.s4 1987475062
    %v3275 = vunpack.c.0.s8 %v3274
    %v3276 = vlaneseq
    %v3277 = vshrl.u32 %v3276, 7
    %v3278 = vsub.s32 %v3275, %v3277
    %v3279 = vrot.slane %v3139, %v3278
    %v3281 = vunpack.c.l.s4 269488144
    %v3282 = vunpack.c.0.s8 %v3281
    %v3283 = vlaneseq
    %v3284 = vshrl.u32 %v3283, 7
    %v3285 = vsub.s32 %v3282, %v3284
    %v3286 = vrot.slane %v3140, %v3285
    %v3288 = vunpack.c.l.s4 842150450
    %v3289 = vunpack.c.0.s8 %v3288
    %v3290 = vlaneseq
    %v3291 = vshrl.u32 %v3290, 7
    %v3292 = vsub.s32 %v3289, %v3291
    %v3293 = vrot.slane %v3140, %v3292
    %v3295 = vunpack.c.l.s4 1414812756
    %v3296 = vunpack.c.0.s8 %v3295
    %v3297 = vlaneseq
    %v3298 = vshrl.u32 %v3297, 7
    %v3299 = vsub.s32 %v3296, %v3298
    %v3300 = vrot.slane %v3140, %v3299
    %v3302 = vunpack.c.l.s4 1987475062
    %v3303 = vunpack.c.0.s8 %v3302
    %v3304 = vlaneseq
    %v3305 = vshrl.u32 %v3304, 7
    %v3306 = vsub.s32 %v3303, %v3305
    %v3307 = vrot.slane %v3140, %v3306
    %v3309 = vunpack.c.l.s4 269488144
    %v3310 = vunpack.c.0.s8 %v3309
    %v3311 = vlaneseq
    %v3312 = vshrl.u32 %v3311, 7
    %v3313 = vsub.s32 %v3310, %v3312
    %v3314 = vrot.slane %v3141, %v3313
    %v3316 = vunpack.c.l.s4 842150450
    %v3317 = vunpack.c.0.s8 %v3316
    %v3318 = vlaneseq
    %v3319 = vshrl.u32 %v3318, 7
    %v3320 = vsub.s32 %v3317, %v3319
    %v3321 = vrot.slane %v3141, %v3320
    %v3323 = vunpack.c.l.s4 1414812756
    %v3324 = vunpack.c.0.s8 %v3323
    %v3325 = vlaneseq
    %v3326 = vshrl.u32 %v3325, 7
    %v3327 = vsub.s32 %v3324, %v3326
    %v3328 = vrot.slane %v3141, %v3327
    %v3330 = vunpack.c.l.s4 1987475062
    %v3331 = vunpack.c.0.s8 %v3330
    %v3332 = vlaneseq
    %v3333 = vshrl.u32 %v3332, 7
    %v3334 = vsub.s32 %v3331, %v3333
    %v3335 = vrot.slane %v3141, %v3334
    %v3337 = vunpack.c.l.s4 269488144
    %v3338 = vunpack.c.0.s8 %v3337
    %v3339 = vlaneseq
    %v3340 = vshrl.u32 %v3339, 7
    %v3341 = vsub.s32 %v3338, %v3340
    %v3342 = vrot.slane %v3142, %v3341
    %v3344 = vunpack.c.l.s4 842150450
    %v3345 = vunpack.c.0.s8 %v3344
    %v3346 = vlaneseq
    %v3347 = vshrl.u32 %v3346, 7
    %v3348 = vsub.s32 %v3345, %v3347
    %v3349 = vrot.slane %v3142, %v3348
    %v3351 = vunpack.c.l.s4 1414812756
    %v3352 = vunpack.c.0.s8 %v3351
    %v3353 = vlaneseq
    %v3354 = vshrl.u32 %v3353, 7
    %v3355 = vsub.s32 %v3352, %v3354
    %v3356 = vrot.slane %v3142, %v3355
    %v3358 = vunpack.c.l.s4 1987475062
    %v3359 = vunpack.c.0.s8 %v3358
    %v3360 = vlaneseq
    %v3361 = vshrl.u32 %v3360, 7
    %v3362 = vsub.s32 %v3359, %v3361
    %v3363 = vrot.slane %v3142, %v3362
    %v3365 = vunpack.c.l.s4 269488144
    %v3366 = vunpack.c.0.s8 %v3365
    %v3367 = vlaneseq
    %v3368 = vshrl.u32 %v3367, 7
    %v3369 = vsub.s32 %v3366, %v3368
    %v3370 = vrot.slane %v3143, %v3369
    %v3372 = vunpack.c.l.s4 842150450
    %v3373 = vunpack.c.0.s8 %v3372
    %v3374 = vlaneseq
    %v3375 = vshrl.u32 %v3374, 7
    %v3376 = vsub.s32 %v3373, %v3375
    %v3377 = vrot.slane %v3143, %v3376
    %v3379 = vunpack.c.l.s4 1414812756
    %v3380 = vunpack.c.0.s8 %v3379
    %v3381 = vlaneseq
    %v3382 = vshrl.u32 %v3381, 7
    %v3383 = vsub.s32 %v3380, %v3382
    %v3384 = vrot.slane %v3143, %v3383
    %v3386 = vunpack.c.l.s4 1987475062
    %v3387 = vunpack.c.0.s8 %v3386
    %v3388 = vlaneseq
    %v3389 = vshrl.u32 %v3388, 7
    %v3390 = vsub.s32 %v3387, %v3389
    %v3391 = vrot.slane %v3143, %v3390
    %v3393 = vunpack.c.l.s4 269488144
    %v3394 = vunpack.c.0.s8 %v3393
    %v3395 = vlaneseq
    %v3396 = vshrl.u32 %v3395, 7
    %v3397 = vsub.s32 %v3394, %v3396
    %v3398 = vrot.slane %v3144, %v3397
    %v3400 = vunpack.c.l.s4 842150450
    %v3401 = vunpack.c.0.s8 %v3400
    %v3402 = vlaneseq
    %v3403 = vshrl.u32 %v3402, 7
    %v3404 = vsub.s32 %v3401, %v3403
    %v3405 = vrot.slane %v3144, %v3404
    %v3407 = vunpack.c.l.s4 1414812756
    %v3408 = vunpack.c.0.s8 %v3407
    %v3409 = vlaneseq
    %v3410 = vshrl.u32 %v3409, 7
    %v3411 = vsub.s32 %v3408, %v3410
    %v3412 = vrot.slane %v3144, %v3411
    %v3414 = vunpack.c.l.s4 1987475062
    %v3415 = vunpack.c.0.s8 %v3414
    %v3416 = vlaneseq
    %v3417 = vshrl.u32 %v3416, 7
    %v3418 = vsub.s32 %v3415, %v3417
    %v3419 = vrot.slane %v3144, %v3418
    %v3421 = vunpack.c.l.s4 269488144
    %v3422 = vunpack.c.0.s8 %v3421
    %v3423 = vlaneseq
    %v3424 = vshrl.u32 %v3423, 7
    %v3425 = vsub.s32 %v3422, %v3424
    %v3426 = vrot.slane %v3145, %v3425
    %v3428 = vunpack.c.l.s4 842150450
    %v3429 = vunpack.c.0.s8 %v3428
    %v3430 = vlaneseq
    %v3431 = vshrl.u32 %v3430, 7
    %v3432 = vsub.s32 %v3429, %v3431
    %v3433 = vrot.slane %v3145, %v3432
    %v3435 = vunpack.c.l.s4 1414812756
    %v3436 = vunpack.c.0.s8 %v3435
    %v3437 = vlaneseq
    %v3438 = vshrl.u32 %v3437, 7
    %v3439 = vsub.s32 %v3436, %v3438
    %v3440 = vrot.slane %v3145, %v3439
    %v3442 = vunpack.c.l.s4 1987475062
    %v3443 = vunpack.c.0.s8 %v3442
    %v3444 = vlaneseq
    %v3445 = vshrl.u32 %v3444, 7
    %v3446 = vsub.s32 %v3443, %v3445
    %v3447 = vrot.slane %v3145, %v3446
    %v3449 = vunpack.c.l.s4 269488144
    %v3450 = vunpack.c.0.s8 %v3449
    %v3451 = vlaneseq
    %v3452 = vshrl.u32 %v3451, 7
    %v3453 = vsub.s32 %v3450, %v3452
    %v3454 = vrot.slane %v3146, %v3453
    %v3456 = vunpack.c.l.s4 842150450
    %v3457 = vunpack.c.0.s8 %v3456
    %v3458 = vlaneseq
    %v3459 = vshrl.u32 %v3458, 7
    %v3460 = vsub.s32 %v3457, %v3459
    %v3461 = vrot.slane %v3146, %v3460
    %v3463 = vunpack.c.l.s4 1414812756
    %v3464 = vunpack.c.0.s8 %v3463
    %v3465 = vlaneseq
    %v3466 = vshrl.u32 %v3465, 7
    %v3467 = vsub.s32 %v3464, %v3466
    %v3468 = vrot.slane %v3146, %v3467
    %v3470 = vunpack.c.l.s4 1987475062
    %v3471 = vunpack.c.0.s8 %v3470
    %v3472 = vlaneseq
    %v3473 = vshrl.u32 %v3472, 7
    %v3474 = vsub.s32 %v3471, %v3473
    %v3475 = vrot.slane %v3146, %v3474
    %v3477 = vunpack.c.l.s4 269488144
    %v3478 = vunpack.c.0.s8 %v3477
    %v3479 = vlaneseq
    %v3480 = vshrl.u32 %v3479, 7
    %v3481 = vsub.s32 %v3478, %v3480
    %v3482 = vrot.slane %v3147, %v3481
    %v3484 = vunpack.c.l.s4 842150450
    %v3485 = vunpack.c.0.s8 %v3484
    %v3486 = vlaneseq
    %v3487 = vshrl.u32 %v3486, 7
    %v3488 = vsub.s32 %v3485, %v3487
    %v3489 = vrot.slane %v3147, %v3488
    %v3491 = vunpack.c.l.s4 1414812756
    %v3492 = vunpack.c.0.s8 %v3491
    %v3493 = vlaneseq
    %v3494 = vshrl.u32 %v3493, 7
    %v3495 = vsub.s32 %v3492, %v3494
    %v3496 = vrot.slane %v3147, %v3495
    %v3498 = vunpack.c.l.s4 1987475062
    %v3499 = vunpack.c.0.s8 %v3498
    %v3500 = vlaneseq
    %v3501 = vshrl.u32 %v3500, 7
    %v3502 = vsub.s32 %v3499, %v3501
    %v3503 = vrot.slane %v3147, %v3502
    %v3505 = vunpack.c.l.s4 269488144
    %v3506 = vunpack.c.0.s8 %v3505
    %v3507 = vlaneseq
    %v3508 = vshrl.u32 %v3507, 7
    %v3509 = vsub.s32 %v3506, %v3508
    %v3510 = vrot.slane %v3148, %v3509
    %v3512 = vunpack.c.l.s4 842150450
    %v3513 = vunpack.c.0.s8 %v3512
    %v3514 = vlaneseq
    %v3515 = vshrl.u32 %v3514, 7
    %v3516 = vsub.s32 %v3513, %v3515
    %v3517 = vrot.slane %v3148, %v3516
    %v3519 = vunpack.c.l.s4 1414812756
    %v3520 = vunpack.c.0.s8 %v3519
    %v3521 = vlaneseq
    %v3522 = vshrl.u32 %v3521, 7
    %v3523 = vsub.s32 %v3520, %v3522
    %v3524 = vrot.slane %v3148, %v3523
    %v3526 = vunpack.c.l.s4 1987475062
    %v3527 = vunpack.c.0.s8 %v3526
    %v3528 = vlaneseq
    %v3529 = vshrl.u32 %v3528, 7
    %v3530 = vsub.s32 %v3527, %v3529
    %v3531 = vrot.slane %v3148, %v3530
    %v3533 = vunpack.c.l.s4 269488144
    %v3534 = vunpack.c.0.s8 %v3533
    %v3535 = vlaneseq
    %v3536 = vshrl.u32 %v3535, 7
    %v3537 = vsub.s32 %v3534, %v3536
    %v3538 = vrot.slane %v3149, %v3537
    %v3540 = vunpack.c.l.s4 842150450
    %v3541 = vunpack.c.0.s8 %v3540
    %v3542 = vlaneseq
    %v3543 = vshrl.u32 %v3542, 7
    %v3544 = vsub.s32 %v3541, %v3543
    %v3545 = vrot.slane %v3149, %v3544
    %v3547 = vunpack.c.l.s4 1414812756
    %v3548 = vunpack.c.0.s8 %v3547
    %v3549 = vlaneseq
    %v3550 = vshrl.u32 %v3549, 7
    %v3551 = vsub.s32 %v3548, %v3550
    %v3552 = vrot.slane %v3149, %v3551
    %v3554 = vunpack.c.l.s4 1987475062
    %v3555 = vunpack.c.0.s8 %v3554
    %v3556 = vlaneseq
    %v3557 = vshrl.u32 %v3556, 7
    %v3558 = vsub.s32 %v3555, %v3557
    %v3559 = vrot.slane %v3149, %v3558
    %v3561 = vunpack.c.l.s4 269488144
    %v3562 = vunpack.c.0.s8 %v3561
    %v3563 = vlaneseq
    %v3564 = vshrl.u32 %v3563, 7
    %v3565 = vsub.s32 %v3562, %v3564
    %v3566 = vrot.slane %v3150, %v3565
    %v3568 = vunpack.c.l.s4 842150450
    %v3569 = vunpack.c.0.s8 %v3568
    %v3570 = vlaneseq
    %v3571 = vshrl.u32 %v3570, 7
    %v3572 = vsub.s32 %v3569, %v3571
    %v3573 = vrot.slane %v3150, %v3572
    %v3575 = vunpack.c.l.s4 1414812756
    %v3576 = vunpack.c.0.s8 %v3575
    %v3577 = vlaneseq
    %v3578 = vshrl.u32 %v3577, 7
    %v3579 = vsub.s32 %v3576, %v3578
    %v3580 = vrot.slane %v3150, %v3579
    %v3582 = vunpack.c.l.s4 1987475062
    %v3583 = vunpack.c.0.s8 %v3582
    %v3584 = vlaneseq
    %v3585 = vshrl.u32 %v3584, 7
    %v3586 = vsub.s32 %v3583, %v3585
    %v3587 = vrot.slane %v3150, %v3586
    %v3589 = vunpack.c.l.s4 269488144
    %v3590 = vunpack.c.0.s8 %v3589
    %v3591 = vlaneseq
    %v3592 = vshrl.u32 %v3591, 7
    %v3593 = vsub.s32 %v3590, %v3592
    %v3594 = vrot.slane %v3151, %v3593
    %v3596 = vunpack.c.l.s4 842150450
    %v3597 = vunpack.c.0.s8 %v3596
    %v3598 = vlaneseq
    %v3599 = vshrl.u32 %v3598, 7
    %v3600 = vsub.s32 %v3597, %v3599
    %v3601 = vrot.slane %v3151, %v3600
    %v3603 = vunpack.c.l.s4 1414812756
    %v3604 = vunpack.c.0.s8 %v3603
    %v3605 = vlaneseq
    %v3606 = vshrl.u32 %v3605, 7
    %v3607 = vsub.s32 %v3604, %v3606
    %v3608 = vrot.slane %v3151, %v3607
    %v3610 = vunpack.c.l.s4 1987475062
    %v3611 = vunpack.c.0.s8 %v3610
    %v3612 = vlaneseq
    %v3613 = vshrl.u32 %v3612, 7
    %v3614 = vsub.s32 %v3611, %v3613
    %v3615 = vrot.slane %v3151, %v3614
    %v3616 = vcombine.low %v3174, %v3181
    %v3617 = vcombine.low %v3188, %v3195
    %v3619 = vunpack.c.l.s4 1983009808
    %v3620 = vunpack.c.0.s8 %v3619
    %v3621 = vlaneseq
    %v3622 = vshrl.u32 %v3621, 7
    %v3623 = vsub.s32 %v3620, %v3622
    %v3624 = vrot.slane %v3616, %v3623
    %v3626 = vunpack.c.l.s4 1983009808
    %v3627 = vunpack.c.0.s8 %v3626
    %v3628 = vlaneseq
    %v3629 = vshrl.u32 %v3628, 7
    %v3630 = vsub.s32 %v3627, %v3629
    %v3631 = vrot.slane %v3617, %v3630
    %v3632 = vcombine.low %v3624, %v3631
    %v3633 = vcombine.low %v3202, %v3209
    %v3634 = vcombine.low %v3216, %v3223
    %v3636 = vunpack.c.l.s4 1983009808
    %v3637 = vunpack.c.0.s8 %v3636
    %v3638 = vlaneseq
    %v3639 = vshrl.u32 %v3638, 7
    %v3640 = vsub.s32 %v3637, %v3639
    %v3641 = vrot.slane %v3633, %v3640
    %v3643 = vunpack.c.l.s4 1983009808
    %v3644 = vunpack.c.0.s8 %v3643
    %v3645 = vlaneseq
    %v3646 = vshrl.u32 %v3645, 7
    %v3647 = vsub.s32 %v3644, %v3646
    %v3648 = vrot.slane %v3634, %v3647
    %v3649 = vcombine.low %v3641, %v3648
    %v3650 = vcombine.low %v3230, %v3237
    %v3651 = vcombine.low %v3244, %v3251
    %v3653 = vunpack.c.l.s4 1983009808
    %v3654 = vunpack.c.0.s8 %v3653
    %v3655 = vlaneseq
    %v3656 = vshrl.u32 %v3655, 7
    %v3657 = vsub.s32 %v3654, %v3656
    %v3658 = vrot.slane %v3650, %v3657
    %v3660 = vunpack.c.l.s4 1983009808
    %v3661 = vunpack.c.0.s8 %v3660
    %v3662 = vlaneseq
    %v3663 = vshrl.u32 %v3662, 7
    %v3664 = vsub.s32 %v3661, %v3663
    %v3665 = vrot.slane %v3651, %v3664
    %v3666 = vcombine.low %v3658, %v3665
    %v3667 = vcombine.low %v3258, %v3265
    %v3668 = vcombine.low %v3272, %v3279
    %v3670 = vunpack.c.l.s4 1983009808
    %v3671 = vunpack.c.0.s8 %v3670
    %v3672 = vlaneseq
    %v3673 = vshrl.u32 %v3672, 7
    %v3674 = vsub.s32 %v3671, %v3673
    %v3675 = vrot.slane %v3667, %v3674
    %v3677 = vunpack.c.l.s4 1983009808
    %v3678 = vunpack.c.0.s8 %v3677
    %v3679 = vlaneseq
    %v3680 = vshrl.u32 %v3679, 7
    %v3681 = vsub.s32 %v3678, %v3680
    %v3682 = vrot.slane %v3668, %v3681
    %v3683 = vcombine.low %v3675, %v3682
    %v3684 = vcombine.low %v3286, %v3293
    %v3685 = vcombine.low %v3300, %v3307
    %v3687 = vunpack.c.l.s4 1983009808
    %v3688 = vunpack.c.0.s8 %v3687
    %v3689 = vlaneseq
    %v3690 = vshrl.u32 %v3689, 7
    %v3691 = vsub.s32 %v3688, %v3690
    %v3692 = vrot.slane %v3684, %v3691
    %v3694 = vunpack.c.l.s4 1983009808
    %v3695 = vunpack.c.0.s8 %v3694
    %v3696 = vlaneseq
    %v3697 = vshrl.u32 %v3696, 7
    %v3698 = vsub.s32 %v3695, %v3697
    %v3699 = vrot.slane %v3685, %v3698
    %v3700 = vcombine.low %v3692, %v3699
    %v3701 = vcombine.low %v3314, %v3321
    %v3702 = vcombine.low %v3328, %v3335
    %v3704 = vunpack.c.l.s4 1983009808
    %v3705 = vunpack.c.0.s8 %v3704
    %v3706 = vlaneseq
    %v3707 = vshrl.u32 %v3706, 7
    %v3708 = vsub.s32 %v3705, %v3707
    %v3709 = vrot.slane %v3701, %v3708
    %v3711 = vunpack.c.l.s4 1983009808
    %v3712 = vunpack.c.0.s8 %v3711
    %v3713 = vlaneseq
    %v3714 = vshrl.u32 %v3713, 7
    %v3715 = vsub.s32 %v3712, %v3714
    %v3716 = vrot.slane %v3702, %v3715
    %v3717 = vcombine.low %v3709, %v3716
    %v3718 = vcombine.low %v3342, %v3349
    %v3719 = vcombine.low %v3356, %v3363
    %v3721 = vunpack.c.l.s4 1983009808
    %v3722 = vunpack.c.0.s8 %v3721
    %v3723 = vlaneseq
    %v3724 = vshrl.u32 %v3723, 7
    %v3725 = vsub.s32 %v3722, %v3724
    %v3726 = vrot.slane %v3718, %v3725
    %v3728 = vunpack.c.l.s4 1983009808
    %v3729 = vunpack.c.0.s8 %v3728
    %v3730 = vlaneseq
    %v3731 = vshrl.u32 %v3730, 7
    %v3732 = vsub.s32 %v3729, %v3731
    %v3733 = vrot.slane %v3719, %v3732
    %v3734 = vcombine.low %v3726, %v3733
    %v3735 = vcombine.low %v3370, %v3377
    %v3736 = vcombine.low %v3384, %v3391
    %v3738 = vunpack.c.l.s4 1983009808
    %v3739 = vunpack.c.0.s8 %v3738
    %v3740 = vlaneseq
    %v3741 = vshrl.u32 %v3740, 7
    %v3742 = vsub.s32 %v3739, %v3741
    %v3743 = vrot.slane %v3735, %v3742
    %v3745 = vunpack.c.l.s4 1983009808
    %v3746 = vunpack.c.0.s8 %v3745
    %v3747 = vlaneseq
    %v3748 = vshrl.u32 %v3747, 7
    %v3749 = vsub.s32 %v3746, %v3748
    %v3750 = vrot.slane %v3736, %v3749
    %v3751 = vcombine.low %v3743, %v3750
    %v3752 = vcombine.low %v3398, %v3405
    %v3753 = vcombine.low %v3412, %v3419
    %v3755 = vunpack.c.l.s4 1983009808
    %v3756 = vunpack.c.0.s8 %v3755
    %v3757 = vlaneseq
    %v3758 = vshrl.u32 %v3757, 7
    %v3759 = vsub.s32 %v3756, %v3758
    %v3760 = vrot.slane %v3752, %v3759
    %v3762 = vunpack.c.l.s4 1983009808
    %v3763 = vunpack.c.0.s8 %v3762
    %v3764 = vlaneseq
    %v3765 = vshrl.u32 %v3764, 7
    %v3766 = vsub.s32 %v3763, %v3765
    %v3767 = vrot.slane %v3753, %v3766
    %v3768 = vcombine.low %v3760, %v3767
    %v3769 = vcombine.low %v3426, %v3433
    %v3770 = vcombine.low %v3440, %v3447
    %v3772 = vunpack.c.l.s4 1983009808
    %v3773 = vunpack.c.0.s8 %v3772
    %v3774 = vlaneseq
    %v3775 = vshrl.u32 %v3774, 7
    %v3776 = vsub.s32 %v3773, %v3775
    %v3777 = vrot.slane %v3769, %v3776
    %v3779 = vunpack.c.l.s4 1983009808
    %v3780 = vunpack.c.0.s8 %v3779
    %v3781 = vlaneseq
    %v3782 = vshrl.u32 %v3781, 7
    %v3783 = vsub.s32 %v3780, %v3782
    %v3784 = vrot.slane %v3770, %v3783
    %v3785 = vcombine.low %v3777, %v3784
    %v3786 = vcombine.low %v3454, %v3461
    %v3787 = vcombine.low %v3468, %v3475
    %v3789 = vunpack.c.l.s4 1983009808
    %v3790 = vunpack.c.0.s8 %v3789
    %v3791 = vlaneseq
    %v3792 = vshrl.u32 %v3791, 7
    %v3793 = vsub.s32 %v3790, %v3792
    %v3794 = vrot.slane %v3786, %v3793
    %v3796 = vunpack.c.l.s4 1983009808
    %v3797 = vunpack.c.0.s8 %v3796
    %v3798 = vlaneseq
    %v3799 = vshrl.u32 %v3798, 7
    %v3800 = vsub.s32 %v3797, %v3799
    %v3801 = vrot.slane %v3787, %v3800
    %v3802 = vcombine.low %v3794, %v3801
    %v3803 = vcombine.low %v3482, %v3489
    %v3804 = vcombine.low %v3496, %v3503
    %v3806 = vunpack.c.l.s4 1983009808
    %v3807 = vunpack.c.0.s8 %v3806
    %v3808 = vlaneseq
    %v3809 = vshrl.u32 %v3808, 7
    %v3810 = vsub.s32 %v3807, %v3809
    %v3811 = vrot.slane %v3803, %v3810
    %v3813 = vunpack.c.l.s4 1983009808
    %v3814 = vunpack.c.0.s8 %v3813
    %v3815 = vlaneseq
    %v3816 = vshrl.u32 %v3815, 7
    %v3817 = vsub.s32 %v3814, %v3816
    %v3818 = vrot.slane %v3804, %v3817
    %v3819 = vcombine.low %v3811, %v3818
    %v3820 = vcombine.low %v3510, %v3517
    %v3821 = vcombine.low %v3524, %v3531
    %v3823 = vunpack.c.l.s4 1983009808
    %v3824 = vunpack.c.0.s8 %v3823
    %v3825 = vlaneseq
    %v3826 = vshrl.u32 %v3825, 7
    %v3827 = vsub.s32 %v3824, %v3826
    %v3828 = vrot.slane %v3820, %v3827
    %v3830 = vunpack.c.l.s4 1983009808
    %v3831 = vunpack.c.0.s8 %v3830
    %v3832 = vlaneseq
    %v3833 = vshrl.u32 %v3832, 7
    %v3834 = vsub.s32 %v3831, %v3833
    %v3835 = vrot.slane %v3821, %v3834
    %v3836 = vcombine.low %v3828, %v3835
    %v3837 = vcombine.low %v3538, %v3545
    %v3838 = vcombine.low %v3552, %v3559
    %v3840 = vunpack.c.l.s4 1983009808
    %v3841 = vunpack.c.0.s8 %v3840
    %v3842 = vlaneseq
    %v3843 = vshrl.u32 %v3842, 7
    %v3844 = vsub.s32 %v3841, %v3843
    %v3845 = vrot.slane %v3837, %v3844
    %v3847 = vunpack.c.l.s4 1983009808
    %v3848 = vunpack.c.0.s8 %v3847
    %v3849 = vlaneseq
    %v3850 = vshrl.u32 %v3849, 7
    %v3851 = vsub.s32 %v3848, %v3850
    %v3852 = vrot.slane %v3838, %v3851
    %v3853 = vcombine.low %v3845, %v3852
    %v3854 = vcombine.low %v3566, %v3573
    %v3855 = vcombine.low %v3580, %v3587
    %v3857 = vunpack.c.l.s4 1983009808
    %v3858 = vunpack.c.0.s8 %v3857
    %v3859 = vlaneseq
    %v3860 = vshrl.u32 %v3859, 7
    %v3861 = vsub.s32 %v3858, %v3860
    %v3862 = vrot.slane %v3854, %v3861
    %v3864 = vunpack.c.l.s4 1983009808
    %v3865 = vunpack.c.0.s8 %v3864
    %v3866 = vlaneseq
    %v3867 = vshrl.u32 %v3866, 7
    %v3868 = vsub.s32 %v3865, %v3867
    %v3869 = vrot.slane %v3855, %v3868
    %v3870 = vcombine.low %v3862, %v3869
    %v3871 = vcombine.low %v3594, %v3601
    %v3872 = vcombine.low %v3608, %v3615
    %v3874 = vunpack.c.l.s4 1983009808
    %v3875 = vunpack.c.0.s8 %v3874
    %v3876 = vlaneseq
    %v3877 = vshrl.u32 %v3876, 7
    %v3878 = vsub.s32 %v3875, %v3877
    %v3879 = vrot.slane %v3871, %v3878
    %v3881 = vunpack.c.l.s4 1983009808
    %v3882 = vunpack.c.0.s8 %v3881
    %v3883 = vlaneseq
    %v3884 = vshrl.u32 %v3883, 7
    %v3885 = vsub.s32 %v3882, %v3884
    %v3886 = vrot.slane %v3872, %v3885
    %v3887 = vcombine.low %v3879, %v3886
    %3888 = vset.pattern.permute.xlu0 0
    %3889 = vperm.xlu0 %3888, %v3632
    %v3890 = vpop.permute.xlu0 %3889
    %3891 = vset.pattern.permute.xlu0 0
    %3892 = vperm.xlu0 %3891, %v3649
    %v3893 = vpop.permute.xlu0 %3892
    %3894 = vset.pattern.permute.xlu0 0
    %3895 = vperm.xlu0 %3894, %v3666
    %v3896 = vpop.permute.xlu0 %3895
    %3897 = vset.pattern.permute.xlu0 0
    %3898 = vperm.xlu0 %3897, %v3683
    %v3899 = vpop.permute.xlu0 %3898
    %3900 = vset.pattern.permute.xlu0 0
    %3901 = vperm.xlu0 %3900, %v3700
    %v3902 = vpop.permute.xlu0 %3901
    %3903 = vset.pattern.permute.xlu0 0
    %3904 = vperm.xlu0 %3903, %v3717
    %v3905 = vpop.permute.xlu0 %3904
    %3906 = vset.pattern.permute.xlu0 0
    %3907 = vperm.xlu0 %3906, %v3734
    %v3908 = vpop.permute.xlu0 %3907
    %3909 = vset.pattern.permute.xlu0 0
    %3910 = vperm.xlu0 %3909, %v3751
    %v3911 = vpop.permute.xlu0 %3910
    %3912 = vset.pattern.permute.xlu0 0
    %3913 = vperm.xlu0 %3912, %v3768
    %v3914 = vpop.permute.xlu0 %3913
    %3915 = vset.pattern.permute.xlu0 0
    %3916 = vperm.xlu0 %3915, %v3785
    %v3917 = vpop.permute.xlu0 %3916
    %3918 = vset.pattern.permute.xlu0 0
    %3919 = vperm.xlu0 %3918, %v3802
    %v3920 = vpop.permute.xlu0 %3919
    %3921 = vset.pattern.permute.xlu0 0
    %3922 = vperm.xlu0 %3921, %v3819
    %v3923 = vpop.permute.xlu0 %3922
    %3924 = vset.pattern.permute.xlu0 0
    %3925 = vperm.xlu0 %3924, %v3836
    %v3926 = vpop.permute.xlu0 %3925
    %3927 = vset.pattern.permute.xlu0 0
    %3928 = vperm.xlu0 %3927, %v3853
    %v3929 = vpop.permute.xlu0 %3928
    %3930 = vset.pattern.permute.xlu0 0
    %3931 = vperm.xlu0 %3930, %v3870
    %v3932 = vpop.permute.xlu0 %3931
    %3933 = vset.pattern.permute.xlu0 0
    %3934 = vperm.xlu0 %3933, %v3887
    %v3935 = vpop.permute.xlu0 %3934
    %v3936 = vlaneseq
    %v3937 = vshrl.u32 %v3936, 7
    %v3938 = vsub.s32 %v1273, %v3937
    %v3939 = vrot.slane %v3890, %v3938
    %v3940 = vlaneseq
    %v3941 = vshrl.u32 %v3940, 7
    %v3942 = vsub.s32 %v1278, %v3941
    %v3943 = vrot.slane %v3893, %v3942
    %v3944 = vsel %vm1283, %v3943, %v3939
    %v3945 = vlaneseq
    %v3946 = vshrl.u32 %v3945, 7
    %v3947 = vsub.s32 %v1285, %v3946
    %v3948 = vrot.slane %v3896, %v3947
    %v3949 = vsel %vm1290, %v3948, %v3944
    %v3950 = vlaneseq
    %v3951 = vshrl.u32 %v3950, 7
    %v3952 = vsub.s32 %v1292, %v3951
    %v3953 = vrot.slane %v3899, %v3952
    %v3954 = vsel %vm1297, %v3953, %v3949
    %v3955 = vlaneseq
    %v3956 = vshrl.u32 %v3955, 7
    %v3957 = vsub.s32 %v1299, %v3956
    %v3958 = vrot.slane %v3902, %v3957
    %v3959 = vsel %vm1304, %v3958, %v3954
    %v3960 = vlaneseq
    %v3961 = vshrl.u32 %v3960, 7
    %v3962 = vsub.s32 %v1306, %v3961
    %v3963 = vrot.slane %v3905, %v3962
    %v3964 = vsel %vm1311, %v3963, %v3959
    %v3965 = vlaneseq
    %v3966 = vshrl.u32 %v3965, 7
    %v3967 = vsub.s32 %v1313, %v3966
    %v3968 = vrot.slane %v3908, %v3967
    %v3969 = vsel %vm1318, %v3968, %v3964
    %v3970 = vlaneseq
    %v3971 = vshrl.u32 %v3970, 7
    %v3972 = vsub.s32 %v1320, %v3971
    %v3973 = vrot.slane %v3911, %v3972
    %v3974 = vsel %vm1325, %v3973, %v3969
    %v3975 = vlaneseq
    %v3976 = vshrl.u32 %v3975, 7
    %v3977 = vsub.s32 %v1273, %v3976
    %v3978 = vrot.slane %v3914, %v3977
    %v3979 = vlaneseq
    %v3980 = vshrl.u32 %v3979, 7
    %v3981 = vsub.s32 %v1278, %v3980
    %v3982 = vrot.slane %v3917, %v3981
    %v3983 = vsel %vm1283, %v3982, %v3978
    %v3984 = vlaneseq
    %v3985 = vshrl.u32 %v3984, 7
    %v3986 = vsub.s32 %v1285, %v3985
    %v3987 = vrot.slane %v3920, %v3986
    %v3988 = vsel %vm1290, %v3987, %v3983
    %v3989 = vlaneseq
    %v3990 = vshrl.u32 %v3989, 7
    %v3991 = vsub.s32 %v1292, %v3990
    %v3992 = vrot.slane %v3923, %v3991
    %v3993 = vsel %vm1297, %v3992, %v3988
    %v3994 = vlaneseq
    %v3995 = vshrl.u32 %v3994, 7
    %v3996 = vsub.s32 %v1299, %v3995
    %v3997 = vrot.slane %v3926, %v3996
    %v3998 = vsel %vm1304, %v3997, %v3993
    %v3999 = vlaneseq
    %v4000 = vshrl.u32 %v3999, 7
    %v4001 = vsub.s32 %v1306, %v4000
    %v4002 = vrot.slane %v3929, %v4001
    %v4003 = vsel %vm1311, %v4002, %v3998
    %v4004 = vlaneseq
    %v4005 = vshrl.u32 %v4004, 7
    %v4006 = vsub.s32 %v1313, %v4005
    %v4007 = vrot.slane %v3932, %v4006
    %v4008 = vsel %vm1318, %v4007, %v4003
    %v4009 = vlaneseq
    %v4010 = vshrl.u32 %v4009, 7
    %v4011 = vsub.s32 %v1320, %v4010
    %v4012 = vrot.slane %v3935, %v4011
    %v4013 = vsel %vm1325, %v4012, %v4008
    %v4014 = vsel %vm1366, %v4013, %v3974
    %v4016 = vunpack.c.l.s4 1983009808
    %v4017 = vunpack.c.0.s8 %v4016
    %v4018 = vlaneseq
    %v4019 = vshrl.u32 %v4018, 7
    %v4020 = vsub.s32 %v4017, %v4019
    %v4021 = vrot.slane %v4014, %v4020
    %4023 = vst.msk [vmem:[#allocation2 + $0x2] sm:$0x3] %vm1376, %v4021
    %v4024 = vld [vmem:[#allocation2] sm:$0xf]
    %v4025 = vld [vmem:[%s3] sm:$0xff]
    %v4026 = vld [vmem:[%s3 + $0x8] sm:$0xff]
    %v4027 = vld [vmem:[%s3 + $0x10] sm:$0xff]
    %v4028 = vld [vmem:[%s3 + $0x18] sm:$0xff]
    %v4029 = vld [vmem:[%s3 + $0x20] sm:$0xff]
    %v4030 = vld [vmem:[%s3 + $0x28] sm:$0xff]
    %v4031 = vld [vmem:[%s3 + $0x30] sm:$0xff]
    %v4032 = vld [vmem:[%s3 + $0x38] sm:$0xff]
    %v4033 = vld [vmem:[%s3 + $0x40] sm:$0xff]
    %v4034 = vld [vmem:[%s3 + $0x48] sm:$0xff]
    %v4035 = vld [vmem:[%s3 + $0x50] sm:$0xff]
    %v4036 = vld [vmem:[%s3 + $0x58] sm:$0xff]
    %v4037 = vld [vmem:[%s3 + $0x60] sm:$0xff]
    %v4038 = vld [vmem:[%s3 + $0x68] sm:$0xff]
    %v4039 = vld [vmem:[%s3 + $0x70] sm:$0xff]
    %v4040 = vld [vmem:[%s3 + $0x78] sm:$0xff]
    %v4041 = vld [vmem:[%s3 + $0x80] sm:$0xff]
    %v4042 = vld [vmem:[%s3 + $0x88] sm:$0xff]
    %v4043 = vld [vmem:[%s3 + $0x90] sm:$0xff]
    %v4044 = vld [vmem:[%s3 + $0x98] sm:$0xff]
    %v4045 = vld [vmem:[%s3 + $0xa0] sm:$0xff]
    %v4046 = vld [vmem:[%s3 + $0xa8] sm:$0xff]
    %v4047 = vld [vmem:[%s3 + $0xb0] sm:$0xff]
    %v4048 = vld [vmem:[%s3 + $0xb8] sm:$0xff]
    %v4049 = vld [vmem:[%s4] sm:$0x1]
    %v4051 = vlaneseq
    %v4052 = vshrl.u32 %v4051, 7
    %v4053 = vsub.s32 0, %v4052
    %v4054 = vrot.slane %v4049, %v4053
    %v4058 = vunpack.c.l.s4 1983009808
    %v4059 = vunpack.c.0.s8 %v4058
    %v4060 = vlaneseq
    %v4061 = vshrl.u32 %v4060, 7
    %v4062 = vsub.s32 %v4059, %v4061
    %v4063 = vrot.slane %v4024, %v4062
    %v4064 = vcombine.high %v4063, %v4063
    %vm4066 = vcmask 523264
    %v4067 = vsel %vm4066, %v4064, 0
    %4069 = vmatprep.subr.mxu0 0.0
    %4070 = vmatpush1.msra.mxu0 %v4040
    %4071 = vmatprep.subr.mxu0 0.0
    %4072 = vmatpush1.msra.mxu0 %v4039
    %4073 = vmatprep.subr.mxu0 0.0
    %4074 = vmatpush1.msra.mxu0 %v4038
    %4075 = vmatprep.subr.mxu0 0.0
    %4076 = vmatpush1.msra.mxu0 %v4037
    %4077 = vmatprep.subr.mxu0 0.0
    %4078 = vmatpush1.msra.mxu0 %v4036
    %4079 = vmatprep.subr.mxu0 0.0
    %4080 = vmatpush1.msra.mxu0 %v4035
    %4081 = vmatprep.subr.mxu0 0.0
    %4082 = vmatpush1.msra.mxu0 %v4034
    %4083 = vmatprep.subr.mxu0 0.0
    %4084 = vmatpush1.msra.mxu0 %v4033
    %4085 = vmatprep.subr.mxu0 0.0
    %4086 = vmatpush1.msra.mxu0 %v4032
    %4087 = vmatprep.subr.mxu0 0.0
    %4088 = vmatpush1.msra.mxu0 %v4031
    %4089 = vmatprep.subr.mxu0 0.0
    %4090 = vmatpush1.msra.mxu0 %v4030
    %4091 = vmatprep.subr.mxu0 0.0
    %4092 = vmatpush1.msra.mxu0 %v4029
    %4093 = vmatprep.subr.mxu0 0.0
    %4094 = vmatpush1.msra.mxu0 %v4028
    %4095 = vmatprep.subr.mxu0 0.0
    %4096 = vmatpush1.msra.mxu0 %v4027
    %4097 = vmatprep.subr.mxu0 0.0
    %4098 = vmatpush1.msra.mxu0 %v4026
    %4099 = vmatprep.subr.mxu0 0.0
    %4100 = vmatpush1.msra.mxu0 %v4025
    %4101 = vmatprep.subr.mxu0 0.0
    %4102 = vmatpush2.msra.mxu0 0.0
    %4103 = vmatprep.subr.mxu0 0.0
    %4104 = vmatpush2.msra.mxu0 0.0
    %4105 = vmatprep.subr.mxu0 0.0
    %4106 = vmatpush2.msra.mxu0 0.0
    %4107 = vmatprep.subr.mxu0 0.0
    %4108 = vmatpush2.msra.mxu0 0.0
    %4109 = vmatprep.subr.mxu0 0.0
    %4110 = vmatpush2.msra.mxu0 0.0
    %4111 = vmatprep.subr.mxu0 0.0
    %4112 = vmatpush2.msra.mxu0 0.0
    %4113 = vmatprep.subr.mxu0 0.0
    %4114 = vmatpush2.msra.mxu0 0.0
    %4115 = vmatprep.subr.mxu0 0.0
    %4116 = vmatpush2.msra.mxu0 0.0
    %4117 = vmatprep.subr.mxu0 0.0
    %4118 = vmatpush2.msra.mxu0 %v4048
    %4119 = vmatprep.subr.mxu0 0.0
    %4120 = vmatpush2.msra.mxu0 %v4047
    %4121 = vmatprep.subr.mxu0 0.0
    %4122 = vmatpush2.msra.mxu0 %v4046
    %4123 = vmatprep.subr.mxu0 0.0
    %4124 = vmatpush2.msra.mxu0 %v4045
    %4125 = vmatprep.subr.mxu0 0.0
    %4126 = vmatpush2.msra.mxu0 %v4044
    %4127 = vmatprep.subr.mxu0 0.0
    %4128 = vmatpush2.msra.mxu0 %v4043
    %4129 = vmatprep.subr.mxu0 0.0
    %4130 = vmatpush2.msra.mxu0 %v4042
    %4131 = vmatprep.subr.mxu0 0.0
    %4132 = vmatpush2.msra.mxu0 %v4041
    %4133 = vmatprep.mubr.f32.mxu0 %v4067
    %4134 = vmatmul.mubr.f32.gmra.mxu0 %v4063
    %v4135 = vpop.f32.mrf.mxu0
    %v4136 = vadd.f32 %v4054, %v4135
    %v4137 = vpop.f32.mrf.mxu0
    %4138 = vdwg.mxu0
    %v4139 = vmax.f32 %v4136, 0.0
    %v4140 = vld [vmem:[%s5] sm:$0xff]
    %v4141 = vld [vmem:[%s5 + $0x8] sm:$0xff]
    %v4142 = vld [vmem:[%s5 + $0x10] sm:$0xff]
    %v4143 = vld [vmem:[%s5 + $0x18] sm:$0xff]
    %v4144 = vld [vmem:[%s5 + $0x20] sm:$0xff]
    %v4145 = vld [vmem:[%s5 + $0x28] sm:$0xff]
    %v4146 = vld [vmem:[%s6] sm:$0x1]
    %v4148 = vlaneseq
    %v4149 = vshrl.u32 %v4148, 7
    %v4150 = vsub.s32 0, %v4149
    %v4151 = vrot.slane %v4146, %v4150
    %vm4153 = vcmask 392192
    %v4155 = vsel %vm4153, %v4139, 0
    %4157 = vmatprep.subr.mxu0 0.0
    %4158 = vmatpush1.msra.mxu0 0.0
    %4159 = vmatprep.subr.mxu0 0.0
    %4160 = vmatpush1.msra.mxu0 0.0
    %4161 = vmatprep.subr.mxu0 0.0
    %4162 = vmatpush1.msra.mxu0 0.0
    %4163 = vmatprep.subr.mxu0 0.0
    %4164 = vmatpush1.msra.mxu0 0.0
    %4165 = vmatprep.subr.mxu0 0.0
    %4166 = vmatpush1.msra.mxu0 0.0
    %4167 = vmatprep.subr.mxu0 0.0
    %4168 = vmatpush1.msra.mxu0 0.0
    %4169 = vmatprep.subr.mxu0 0.0
    %4170 = vmatpush1.msra.mxu0 0.0
    %4171 = vmatprep.subr.mxu0 0.0
    %4172 = vmatpush1.msra.mxu0 0.0
    %4173 = vmatprep.subr.mxu0 0.0
    %4174 = vmatpush1.msra.mxu0 0.0
    %4175 = vmatprep.subr.mxu0 0.0
    %4176 = vmatpush1.msra.mxu0 0.0
    %4177 = vmatprep.subr.mxu0 0.0
    %4178 = vmatpush1.msra.mxu0 %v4145
    %4179 = vmatprep.subr.mxu0 0.0
    %4180 = vmatpush1.msra.mxu0 %v4144
    %4181 = vmatprep.subr.mxu0 0.0
    %4182 = vmatpush1.msra.mxu0 %v4143
    %4183 = vmatprep.subr.mxu0 0.0
    %4184 = vmatpush1.msra.mxu0 %v4142
    %4185 = vmatprep.subr.mxu0 0.0
    %4186 = vmatpush1.msra.mxu0 %v4141
    %4187 = vmatprep.subr.mxu0 0.0
    %4188 = vmatpush1.msra.mxu0 %v4140
    %4189 = vmatprep.subr.mxu0 0.0
    %4190 = vmatpush2.msra.mxu0 0.0
    %4191 = vmatprep.subr.mxu0 0.0
    %4192 = vmatpush2.msra.mxu0 0.0
    %4193 = vmatprep.subr.mxu0 0.0
    %4194 = vmatpush2.msra.mxu0 0.0
    %4195 = vmatprep.subr.mxu0 0.0
    %4196 = vmatpush2.msra.mxu0 0.0
    %4197 = vmatprep.subr.mxu0 0.0
    %4198 = vmatpush2.msra.mxu0 0.0
    %4199 = vmatprep.subr.mxu0 0.0
    %4200 = vmatpush2.msra.mxu0 0.0
    %4201 = vmatprep.subr.mxu0 0.0
    %4202 = vmatpush2.msra.mxu0 0.0
    %4203 = vmatprep.subr.mxu0 0.0
    %4204 = vmatpush2.msra.mxu0 0.0
    %4205 = vmatprep.subr.mxu0 0.0
    %4206 = vmatpush2.msra.mxu0 0.0
    %4207 = vmatprep.subr.mxu0 0.0
    %4208 = vmatpush2.msra.mxu0 0.0
    %4209 = vmatprep.subr.mxu0 0.0
    %4210 = vmatpush2.msra.mxu0 0.0
    %4211 = vmatprep.subr.mxu0 0.0
    %4212 = vmatpush2.msra.mxu0 0.0
    %4213 = vmatprep.subr.mxu0 0.0
    %4214 = vmatpush2.msra.mxu0 0.0
    %4215 = vmatprep.subr.mxu0 0.0
    %4216 = vmatpush2.msra.mxu0 0.0
    %4217 = vmatprep.subr.mxu0 0.0
    %4218 = vmatpush2.msra.mxu0 0.0
    %4219 = vmatprep.subr.mxu0 0.0
    %4220 = vmatpush2.msra.mxu0 0.0
    %4221 = vmatprep.mubr.f32.mxu0 0.0
    %4222 = vmatmul.mubr.f32.gmra.mxu0 %v4155
    %v4223 = vpop.f32.mrf.mxu0
    %v4224 = vadd.f32 %v4151, %v4223
    %v4225 = vpop.f32.mrf.mxu0
    %4226 = vdwg.mxu0
    %v4227 = vmax.f32 %v4224, 0.0
    %v4228 = vld [vmem:[%s7] sm:$0xff]
    %v4229 = vld [vmem:[%s7 + $0x8] sm:$0xf]
    %v4230 = vld [vmem:[%s8] sm:$0x1]
    %v4232 = vlaneseq
    %v4233 = vshrl.u32 %v4232, 7
    %v4234 = vsub.s32 0, %v4233
    %v4235 = vrot.slane %v4230, %v4234
    %vm4237 = vcmask 97280
    %v4239 = vsel %vm4237, %v4227, 0
    %vm4241 = vcmask 1043456
    %v4243 = vsel %vm4241, %v4229, 0
    %4245 = vmatprep.subr.mxu0 0.0
    %4246 = vmatpush1.msra.mxu0 0.0
    %4247 = vmatprep.subr.mxu0 0.0
    %4248 = vmatpush1.msra.mxu0 0.0
    %4249 = vmatprep.subr.mxu0 0.0
    %4250 = vmatpush1.msra.mxu0 0.0
    %4251 = vmatprep.subr.mxu0 0.0
    %4252 = vmatpush1.msra.mxu0 0.0
    %4253 = vmatprep.subr.mxu0 0.0
    %4254 = vmatpush1.msra.mxu0 0.0
    %4255 = vmatprep.subr.mxu0 0.0
    %4256 = vmatpush1.msra.mxu0 0.0
    %4257 = vmatprep.subr.mxu0 0.0
    %4258 = vmatpush1.msra.mxu0 0.0
    %4259 = vmatprep.subr.mxu0 0.0
    %4260 = vmatpush1.msra.mxu0 0.0
    %4261 = vmatprep.subr.mxu0 0.0
    %4262 = vmatpush1.msra.mxu0 0.0
    %4263 = vmatprep.subr.mxu0 0.0
    %4264 = vmatpush1.msra.mxu0 0.0
    %4265 = vmatprep.subr.mxu0 0.0
    %4266 = vmatpush1.msra.mxu0 0.0
    %4267 = vmatprep.subr.mxu0 0.0
    %4268 = vmatpush1.msra.mxu0 0.0
    %4269 = vmatprep.subr.mxu0 0.0
    %4270 = vmatpush1.msra.mxu0 0.0
    %4271 = vmatprep.subr.mxu0 0.0
    %4272 = vmatpush1.msra.mxu0 0.0
    %4273 = vmatprep.subr.mxu0 0.0
    %4274 = vmatpush1.msra.mxu0 %v4243
    %4275 = vmatprep.subr.mxu0 0.0
    %4276 = vmatpush1.msra.mxu0 %v4228
    %4277 = vmatprep.subr.mxu0 0.0
    %4278 = vmatpush2.msra.mxu0 0.0
    %4279 = vmatprep.subr.mxu0 0.0
    %4280 = vmatpush2.msra.mxu0 0.0
    %4281 = vmatprep.subr.mxu0 0.0
    %4282 = vmatpush2.msra.mxu0 0.0
    %4283 = vmatprep.subr.mxu0 0.0
    %4284 = vmatpush2.msra.mxu0 0.0
    %4285 = vmatprep.subr.mxu0 0.0
    %4286 = vmatpush2.msra.mxu0 0.0
    %4287 = vmatprep.subr.mxu0 0.0
    %4288 = vmatpush2.msra.mxu0 0.0
    %4289 = vmatprep.subr.mxu0 0.0
    %4290 = vmatpush2.msra.mxu0 0.0
    %4291 = vmatprep.subr.mxu0 0.0
    %4292 = vmatpush2.msra.mxu0 0.0
    %4293 = vmatprep.subr.mxu0 0.0
    %4294 = vmatpush2.msra.mxu0 0.0
    %4295 = vmatprep.subr.mxu0 0.0
    %4296 = vmatpush2.msra.mxu0 0.0
    %4297 = vmatprep.subr.mxu0 0.0
    %4298 = vmatpush2.msra.mxu0 0.0
    %4299 = vmatprep.subr.mxu0 0.0
    %4300 = vmatpush2.msra.mxu0 0.0
    %4301 = vmatprep.subr.mxu0 0.0
    %4302 = vmatpush2.msra.mxu0 0.0
    %4303 = vmatprep.subr.mxu0 0.0
    %4304 = vmatpush2.msra.mxu0 0.0
    %4305 = vmatprep.subr.mxu0 0.0
    %4306 = vmatpush2.msra.mxu0 0.0
    %4307 = vmatprep.subr.mxu0 0.0
    %4308 = vmatpush2.msra.mxu0 0.0
    %4309 = vmatprep.mubr.f32.mxu0 0.0
    %4310 = vmatmul.mubr.f32.gmra.mxu0 %v4239
    %v4311 = vpop.f32.mrf.mxu0
    %v4312 = vadd.f32 %v4235, %v4311
    %v4313 = vpop.f32.mrf.mxu0
    %4314 = vdwg.mxu0
    %vm4315 = vcmask 156672
    %4316 = vst.msk [vmem:[#allocation6] sm:$0x3] %vm4315, %v4312
    // Predicated region
    $region42: #{simple_model_forward.1} parent=1 // pred_check
      _
    $region43: #{simple_model_forward.1} parent=1 // pred_check_branch
      %4318 = sbr.rel (0) target = $region45
    $region44: #{simple_model_forward.1} parent=1 // pred_region
      %s4320 = ssub.s32 32, 32
      %4321 = vsyncadd [#allocation4], %s4320
      %s4323 = sshll.u32 [#allocation6], 4
      %s4324 = int_to_ptr.vmem [resolvable:$true] %s4323
      %4326 = dma.vmem_to_hbm [thread:$0]  %s4324, 32, %s9, [#allocation4]
    $region45: #{simple_model_forward.1} parent=1 // pred_fallthru
      _
    // Predicated region
    $region46: #{simple_model_forward.1} parent=1 // pred_check
      _
    $region47: #{simple_model_forward.1} parent=1 // pred_check_branch
      %4328 = sbr.rel (0) target = $region49
    $region48: #{simple_model_forward.1} parent=1 // pred_region
      %4329 = dma.done [#allocation4], 32
    $region49: #{simple_model_forward.1} parent=1 // pred_fallthru
      _
    %4330 = vsyncpa [#allocation4], 1
    %4331 = vsyncpa [#allocation5], 1

</llo_original>
